<compile_context>
chip_gen: v7x
topology: tpu7x:2x2x1
jax: 0.10.0
libtpu: 0.0.40
codegen_flags: <defaults>
</compile_context>

<pallas_src>
import math

import jax
import jax.numpy as jnp
from jax import lax
from jax.experimental import pallas as pl
from jax.experimental.pallas import tpu as pltpu

VOCAB = 50      # vocab_size
EMBED = 32      # embed_size
HIDDEN = 32     # hidden_dim
CLASSES = 4     # class_num
BATCH = 2
SEQ = 8
CPAD = 128      # lane-padded logits width


# ----------------------------------------------------------------------------
# Single fused kernel: embedding -> biLSTM -> attention -> pool -> folded tail
# Weights are pre-transposed so the kernel always does x @ W (MXU-friendly);
# LSTM biases hold (b_ih + b_hh); gate columns are pre-permuted to [i,f,o,g].
# ----------------------------------------------------------------------------
def fused_forward_kernel(ids_ref, bias_ref, embed_ref,
                         wih_ref, bih_ref, whh_f_ref, whh_b_ref,
                         wqkv_ref, bqkv_ref,
                         wtail_ref, btail_ref,
                         logits_ref,
                         gx_ref, xout_ref, pooled_ref):
    B, S = bias_ref.shape
    V = embed_ref.shape[0]
    H = whh_f_ref.shape[0]
    D = 2 * H
    G = 4 * H
    f32 = jnp.float32

    # ---- embedding via one-hot matmul (rows time-major: row = t*B + b) ------
    ids_col = ids_ref[...]                                        # (S*B, 1) int32
    one_hot = (lax.broadcasted_iota(jnp.int32, (S * B, V), 1) == ids_col).astype(f32)
    emb = jnp.dot(one_hot, embed_ref[...],
                  preferred_element_type=f32)                     # (S*B, E)

    # ---- both directions' LSTM input projections in ONE matmul --------------
    # columns: [fwd gates i|f|o|g (0:4H) | bwd gates i|f|o|g (4H:8H)]
    gx_ref[...] = jnp.dot(emb, wih_ref[...],
                          preferred_element_type=f32) + bih_ref[...]

    def cell(gates, c):
        # gates: (B, 4H) with columns [i | f | o | g]
        sig = jax.nn.sigmoid(gates[:, 0:3 * H])    # one EUP pass for i, f, o
        g_g = jnp.tanh(gates[:, 3 * H:4 * H])
        i_g = sig[:, 0:H]
        f_g = sig[:, H:2 * H]
        o_g = sig[:, 2 * H:3 * H]
        c_new = f_g * c + i_g * g_g
        h_new = o_g * jnp.tanh(c_new)
        return h_new, c_new

    h0 = jnp.zeros((B, H), f32)
    c0 = jnp.zeros((B, H), f32)

    # ---- interleaved forward/backward recurrence (one unrolled loop) --------
    def step(t, carry):
        h_f, c_f, h_b, c_b = carry
        tb = S - 1 - t
        gates_f = gx_ref[pl.ds(t * B, B), 0:G] + jnp.dot(
            h_f, whh_f_ref[...], preferred_element_type=f32)
        gates_b = gx_ref[pl.ds(tb * B, B), G:2 * G] + jnp.dot(
            h_b, whh_b_ref[...], preferred_element_type=f32)
        h_f, c_f = cell(gates_f, c_f)
        h_b, c_b = cell(gates_b, c_b)
        # Store batch-major: row b*S + time; fwd in lanes 0:H, bwd in H:2H.
        # (Stores fork off the critical path; B=2 -> 4 tiny stores per step.)
        for b in range(B):                                        # static unroll
            xout_ref[pl.ds(b * S + t, 1), 0:H] = h_f[b:b + 1, :]
            xout_ref[pl.ds(b * S + tb, 1), H:2 * H] = h_b[b:b + 1, :]
        return (h_f, c_f, h_b, c_b)

    lax.fori_loop(0, S, step, (h0, c0, h0, c0), unroll=True)

    # ---- single-head attention: packed QKV projection -----------------------
    x_all = xout_ref[...]                                         # (B*S, D) batch-major
    qkv = jnp.dot(x_all, wqkv_ref[...],
                  preferred_element_type=f32) + bqkv_ref[...]     # (B*S, 3D)

    for b in range(B):                                            # B=2: static unroll
        r0 = b * S
        q_b = qkv[r0:r0 + S, 0:D]            # 1/sqrt(D) folded into the weights
        k_b = qkv[r0:r0 + S, D:2 * D]
        v_b = qkv[r0:r0 + S, 2 * D:3 * D]
        s_b = lax.dot_general(q_b, k_b, (((1,), (1,)), ((), ())),
                              preferred_element_type=f32)         # (S, S)
        s_b = s_b + bias_ref[b:b + 1, :]      # key_padding_mask: -1e30 at pads
        m_b = jnp.max(s_b, axis=-1, keepdims=True)
        e_b = jnp.exp(s_b - m_b)
        p_b = e_b * pl.reciprocal(jnp.sum(e_b, axis=-1, keepdims=True),
                                  approx=True)
        # AdaptiveAvgPool1d(1) over queries commutes with (P @ V): pool P first,
        # so the (S, D) attention output is never materialized.
        w_b = jnp.sum(p_b, axis=0, keepdims=True) * (1.0 / S)     # (1, S)
        pooled_ref[b:b + 1, :] = jnp.dot(w_b, v_b, preferred_element_type=f32)

    # ---- out-proj + BatchNorm1d(eval) + classifier folded to one matmul -----
    logits_ref[...] = jnp.dot(pooled_ref[...], wtail_ref[...],
                              preferred_element_type=f32) + btail_ref[...]   # (B, CPAD)


def _full_spec(shape):
    nd = len(shape)
    return pl.BlockSpec(shape, lambda i, _nd=nd: (0,) * _nd)


def fused_forward(ids_tm, attn_bias, kp):
    SB = ids_tm.shape[0]
    B, S = attn_bias.shape
    H = HIDDEN
    D = 2 * H

    args = (ids_tm, attn_bias, kp['embed'],
            kp['wih'], kp['bih'], kp['whh_f'], kp['whh_b'],
            kp['wqkv'], kp['bqkv'],
            kp['wtail'], kp['btail'])

    return pl.pallas_call(
        fused_forward_kernel,
        grid=(1,),
        in_specs=[_full_spec(a.shape) for a in args],
        out_specs=_full_spec((B, CPAD)),
        out_shape=jax.ShapeDtypeStruct((B, CPAD), jnp.float32),
        scratch_shapes=[pltpu.VMEM((SB, 8 * H), jnp.float32),   # packed fwd|bwd gate pre-acts
                        pltpu.VMEM((B * S, D), jnp.float32),    # biLSTM hidden (batch-major)
                        pltpu.VMEM((B, D), jnp.float32)],       # pooled pre-out-proj
        compiler_params=pltpu.CompilerParams(
            dimension_semantics=("arbitrary",)),
    )(*args)


# ----------------------------------------------------------------------------
# Wrapper-side (exact) weight packing / folding.
# ----------------------------------------------------------------------------
def _reorder_gates(w, H):
    # PyTorch LSTM gate column order [i, f, g, o] -> kernel order [i, f, o, g]
    return jnp.concatenate([w[..., 0:2 * H], w[..., 3 * H:4 * H],
                            w[..., 2 * H:3 * H]], axis=-1)


def build_kernel_params(p):
    H, D, C = HIDDEN, 2 * HIDDEN, CLASSES

    # LSTM: fuse fwd|bwd input projections; permute gate columns.
    wih = jnp.concatenate([_reorder_gates(p['wih_f'], H),
                           _reorder_gates(p['wih_b'], H)], axis=1)   # (E, 8H)
    bih = jnp.concatenate([_reorder_gates(p['b_f'], H),
                           _reorder_gates(p['b_b'], H)], axis=1)     # (1, 8H)
    whh_f = _reorder_gates(p['whh_f'], H)                            # (H, 4H)
    whh_b = _reorder_gates(p['whh_b'], H)

    # Attention: pack Q|K|V in-projection; fold 1/sqrt(head_dim) into Q.
    scale = 1.0 / math.sqrt(float(D))       # num_heads = 1 -> head_dim = D
    wqkv = jnp.concatenate([p['wq'] * scale, p['wk'], p['wv']], axis=1)  # (D, 3D)
    bqkv = jnp.concatenate([p['bq'] * scale, p['bk'], p['bv']], axis=1)  # (1, 3D)

    # Tail: attention out-proj -> BatchNorm1d (eval running stats) -> classifier,
    # folded exactly into one affine, zero-padded to 128 output lanes.
    s = p['bn_gamma'] * lax.rsqrt(p['bn_var'] + 1e-5)                   # (1, D)
    wc_pad = jnp.zeros((D, CPAD), jnp.float32).at[:, :C].set(p['wc'])
    bc_pad = jnp.zeros((1, CPAD), jnp.float32).at[:, :C].set(p['bc'])
    wtail = jnp.dot(p['wo'] * s, wc_pad)                                # (D, CPAD)
    btail = jnp.dot((p['bo'] - p['bn_mean']) * s + p['bn_beta'], wc_pad) + bc_pad

    return dict(embed=p['embed'], wih=wih, bih=bih, whh_f=whh_f, whh_b=whh_b,
                wqkv=wqkv, bqkv=bqkv, wtail=wtail, btail=btail)


# ----------------------------------------------------------------------------
# Full model forward (TC.forward) + CrossEntropyLoss.
# ----------------------------------------------------------------------------
def model_forward(input_ids, labels, params):
    B, S = input_ids.shape
    C = CLASSES

    # Computed in the PyTorch reference but never used downstream.
    _input_ids_len = jnp.sum(input_ids != 0, axis=-1).astype(jnp.float32)

    # Time-major flattened token ids (row = t*B + b) for the in-kernel one-hot
    # embedding matmul; additive key_padding_mask bias (-1e30 where id == 0).
    ids_tm = jnp.transpose(input_ids).reshape(S * B, 1).astype(jnp.int32)
    attn_bias = jnp.where(input_ids == 0, jnp.float32(-1e30), jnp.float32(0.0))

    kp = build_kernel_params(params)
    logits = fused_forward(ids_tm, attn_bias, kp)[:, :C]

    # CrossEntropyLoss (tiny; plain-JAX glue).
    logz = jax.nn.logsumexp(logits, axis=-1)
    picked = logits[jnp.arange(B), labels]
    loss = jnp.mean(logz - picked)
    return loss, logits


def init_params(key):
    H, E, C = HIDDEN, EMBED, CLASSES
    D = 2 * H
    ks = jax.random.split(key, 16)

    def n(k, shape, scale=0.1):
        return (scale * jax.random.normal(k, shape)).astype(jnp.float32)

    return dict(
        embed=n(ks[0], (VOCAB, E), 1.0),
        # LSTM (weights stored transposed; bias = b_ih + b_hh; PyTorch gate
        # column order [i, f, g, o])
        wih_f=n(ks[1], (E, 4 * H)), whh_f=n(ks[2], (H, 4 * H)), b_f=n(ks[3], (1, 4 * H)),
        wih_b=n(ks[4], (E, 4 * H)), whh_b=n(ks[5], (H, 4 * H)), b_b=n(ks[6], (1, 4 * H)),
        # MultiheadAttention (single head), in/out projections transposed
        wq=n(ks[7], (D, D)), bq=n(ks[8], (1, D)),
        wk=n(ks[9], (D, D)), bk=n(ks[10], (1, D)),
        wv=n(ks[11], (D, D)), bv=n(ks[12], (1, D)),
        wo=n(ks[13], (D, D)), bo=n(ks[14], (1, D)),
        # BatchNorm1d (eval-mode / fresh-module statistics)
        bn_gamma=jnp.ones((1, D), jnp.float32), bn_beta=jnp.zeros((1, D), jnp.float32),
        bn_mean=jnp.zeros((1, D), jnp.float32), bn_var=jnp.ones((1, D), jnp.float32),
        # classifier Linear(2H -> C), transposed
        wc=n(ks[15], (D, C)), bc=jnp.zeros((1, C), jnp.float32),
    )


if __name__ == "__main__":
    key = jax.random.PRNGKey(0)
    kp_, kid, klab = jax.random.split(key, 3)
    params = init_params(kp_)

    input_ids = jax.random.randint(kid, (BATCH, SEQ), 1, VOCAB, dtype=jnp.int32)
    # introduce trailing padding (token id 0) so the key_padding_mask is exercised
    input_ids = input_ids.at[0, -2:].set(0).at[1, -3:].set(0)
    labels = jax.random.randint(klab, (BATCH,), 0, CLASSES, dtype=jnp.int32)

    loss, logits = jax.jit(model_forward)(input_ids, labels, params)
    jax.block_until_ready((loss, logits))
    assert logits.shape == (BATCH, CLASSES)
    assert loss.shape == ()
    print("KERNEL_OK")
</pallas_src>

<mosaic_0001>
module attributes {stable_mosaic.version = 11 : i64} {
  func.func @fused_forward_kernel(%arg0: i32, %arg1: memref<16x1xi32, #tpu.memory_space<vmem>>, %arg2: memref<2x8xf32, #tpu.memory_space<vmem>>, %arg3: memref<50x32xf32, #tpu.memory_space<vmem>>, %arg4: memref<32x256xf32, #tpu.memory_space<vmem>>, %arg5: memref<1x256xf32, #tpu.memory_space<vmem>>, %arg6: memref<32x128xf32, #tpu.memory_space<vmem>>, %arg7: memref<32x128xf32, #tpu.memory_space<vmem>>, %arg8: memref<64x192xf32, #tpu.memory_space<vmem>>, %arg9: memref<1x192xf32, #tpu.memory_space<vmem>>, %arg10: memref<64x128xf32, #tpu.memory_space<vmem>>, %arg11: memref<1x128xf32, #tpu.memory_space<vmem>>, %arg12: memref<2x128xf32, #tpu.memory_space<vmem>>, %arg13: memref<16x256xf32, #tpu.memory_space<vmem>>, %arg14: memref<16x64xf32, #tpu.memory_space<vmem>>, %arg15: memref<2x64xf32, #tpu.memory_space<vmem>>) attributes {dimension_semantics = [#tpu.dimension_semantics<arbitrary>], iteration_bounds = array<i64: 1>, scalar_prefetch = 0 : i64, scratch_operands = 3 : i64, tpu.core_type = #tpu.core_type<tc>, window_params = [{pipeline_mode = #tpu.pipeline_mode<synchronous>, transform_indices = @transform_0, window_bounds = array<i64: 16, 1>}, {pipeline_mode = #tpu.pipeline_mode<synchronous>, transform_indices = @transform_1, window_bounds = array<i64: 2, 8>}, {pipeline_mode = #tpu.pipeline_mode<synchronous>, transform_indices = @transform_2, window_bounds = array<i64: 50, 32>}, {pipeline_mode = #tpu.pipeline_mode<synchronous>, transform_indices = @transform_3, window_bounds = array<i64: 32, 256>}, {pipeline_mode = #tpu.pipeline_mode<synchronous>, transform_indices = @transform_4, window_bounds = array<i64: 1, 256>}, {pipeline_mode = #tpu.pipeline_mode<synchronous>, transform_indices = @transform_5, window_bounds = array<i64: 32, 128>}, {pipeline_mode = #tpu.pipeline_mode<synchronous>, transform_indices = @transform_6, window_bounds = array<i64: 32, 128>}, {pipeline_mode = #tpu.pipeline_mode<synchronous>, transform_indices = @transform_7, window_bounds = array<i64: 64, 192>}, {pipeline_mode = #tpu.pipeline_mode<synchronous>, transform_indices = @transform_8, window_bounds = array<i64: 1, 192>}, {pipeline_mode = #tpu.pipeline_mode<synchronous>, transform_indices = @transform_9, window_bounds = array<i64: 64, 128>}, {pipeline_mode = #tpu.pipeline_mode<synchronous>, transform_indices = @transform_10, window_bounds = array<i64: 1, 128>}, {pipeline_mode = #tpu.pipeline_mode<synchronous>, transform_indices = @transform_11, window_bounds = array<i64: 2, 128>}]} {
    %c0 = arith.constant 0 : index
    %c0_0 = arith.constant 0 : index
    %0 = vector.load %arg1[%c0, %c0_0] : memref<16x1xi32, #tpu.memory_space<vmem>>, vector<16x1xi32>
    %1 = tpu.iota {dimensions = array<i32: 1>} : vector<16x50xi32>
    %2 = vector.broadcast %0 : vector<16x1xi32> to vector<16x50xi32>
    %3 = arith.cmpi eq, %1, %2 : vector<16x50xi32>
    %4 = arith.extui %3 : vector<16x50xi1> to vector<16x50xi32>
    %5 = arith.sitofp %4 : vector<16x50xi32> to vector<16x50xf32>
    %c0_1 = arith.constant 0 : index
    %c0_2 = arith.constant 0 : index
    %6 = vector.load %arg3[%c0_1, %c0_2] : memref<50x32xf32, #tpu.memory_space<vmem>>, vector<50x32xf32>
    %cst = arith.constant dense<0.000000e+00> : vector<16x32xf32>
    %7 = tpu.matmul %5, %6, %cst {dimension_numbers = #tpu.dot_dimension_numbers<[1], [0], [0], [1], [0, 0, 1, 1], [], []>} : vector<16x50xf32>, vector<50x32xf32>, vector<16x32xf32> -> vector<16x32xf32>
    %c0_3 = arith.constant 0 : index
    %c0_4 = arith.constant 0 : index
    %8 = vector.load %arg4[%c0_3, %c0_4] : memref<32x256xf32, #tpu.memory_space<vmem>>, vector<32x256xf32>
    %cst_5 = arith.constant dense<0.000000e+00> : vector<16x256xf32>
    %9 = tpu.matmul %7, %8, %cst_5 {dimension_numbers = #tpu.dot_dimension_numbers<[1], [0], [0], [1], [0, 0, 1, 1], [], []>} : vector<16x32xf32>, vector<32x256xf32>, vector<16x256xf32> -> vector<16x256xf32>
    %c0_6 = arith.constant 0 : index
    %c0_7 = arith.constant 0 : index
    %10 = vector.load %arg5[%c0_6, %c0_7] : memref<1x256xf32, #tpu.memory_space<vmem>>, vector<1x256xf32>
    %11 = vector.broadcast %10 : vector<1x256xf32> to vector<16x256xf32>
    %12 = arith.addf %9, %11 : vector<16x256xf32>
    %c0_8 = arith.constant 0 : index
    %c0_9 = arith.constant 0 : index
    %13 = vector.load %arg13[%c0_8, %c0_9] : memref<16x256xf32, #tpu.memory_space<vmem>>, vector<16x256xf32>
    tpu.vector_store %arg13[%c0_8, %c0_9], %12 {strides = array<i32>} : memref<16x256xf32, #tpu.memory_space<vmem>>, vector<16x256xf32>,
    %cst_10 = arith.constant 0.000000e+00 : f32
    %14 = vector.broadcast %cst_10 : f32 to vector<2x32xf32>
    %cst_11 = arith.constant 0.000000e+00 : f32
    %15 = vector.broadcast %cst_11 : f32 to vector<2x32xf32>
    %c0_i32 = arith.constant 0 : i32
    %c7_i32 = arith.constant 7 : i32
    %16 = arith.subi %c7_i32, %c0_i32 : i32
    %c2_i32 = arith.constant 2 : i32
    %17 = arith.muli %c0_i32, %c2_i32 : i32
    %18 = arith.index_cast %17 : i32 to index
    %c0_12 = arith.constant 0 : index
    %19 = vector.load %arg13[%18, %c0_12] : memref<16x256xf32, #tpu.memory_space<vmem>>, vector<2x128xf32>
    %c0_13 = arith.constant 0 : index
    %c0_14 = arith.constant 0 : index
    %20 = vector.load %arg6[%c0_13, %c0_14] : memref<32x128xf32, #tpu.memory_space<vmem>>, vector<32x128xf32>
    %cst_15 = arith.constant dense<0.000000e+00> : vector<2x128xf32>
    %21 = tpu.matmul %14, %20, %cst_15 {dimension_numbers = #tpu.dot_dimension_numbers<[1], [0], [0], [1], [0, 0, 1, 1], [], []>} : vector<2x32xf32>, vector<32x128xf32>, vector<2x128xf32> -> vector<2x128xf32>
    %22 = arith.addf %19, %21 : vector<2x128xf32>
    %c2_i32_16 = arith.constant 2 : i32
    %23 = arith.muli %16, %c2_i32_16 : i32
    %24 = arith.index_cast %23 : i32 to index
    %c128 = arith.constant 128 : index
    %25 = vector.load %arg13[%24, %c128] : memref<16x256xf32, #tpu.memory_space<vmem>>, vector<2x128xf32>
    %c0_17 = arith.constant 0 : index
    %c0_18 = arith.constant 0 : index
    %26 = vector.load %arg7[%c0_17, %c0_18] : memref<32x128xf32, #tpu.memory_space<vmem>>, vector<32x128xf32>
    %cst_19 = arith.constant dense<0.000000e+00> : vector<2x128xf32>
    %27 = tpu.matmul %14, %26, %cst_19 {dimension_numbers = #tpu.dot_dimension_numbers<[1], [0], [0], [1], [0, 0, 1, 1], [], []>} : vector<2x32xf32>, vector<32x128xf32>, vector<2x128xf32> -> vector<2x128xf32>
    %28 = arith.addf %25, %27 : vector<2x128xf32>
    %29 = vector.extract_strided_slice %22 {offsets = [0, 0], sizes = [2, 96], strides = [1, 1]} : vector<2x128xf32> to vector<2x96xf32>
    %30 = arith.negf %29 : vector<2x96xf32>
    %31 = math.exp %30 : vector<2x96xf32>
    %cst_20 = arith.constant 1.000000e+00 : f32
    %32 = vector.broadcast %cst_20 : f32 to vector<2x96xf32>
    %33 = arith.addf %32, %31 : vector<2x96xf32>
    %34 = arith.divf %32, %33 : vector<2x96xf32>
    %35 = vector.extract_strided_slice %22 {offsets = [0, 96], sizes = [2, 32], strides = [1, 1]} : vector<2x128xf32> to vector<2x32xf32>
    %36 = math.tanh %35 : vector<2x32xf32>
    %37 = vector.extract_strided_slice %34 {offsets = [0, 0], sizes = [2, 32], strides = [1, 1]} : vector<2x96xf32> to vector<2x32xf32>
    %38 = vector.extract_strided_slice %34 {offsets = [0, 32], sizes = [2, 32], strides = [1, 1]} : vector<2x96xf32> to vector<2x32xf32>
    %39 = vector.extract_strided_slice %34 {offsets = [0, 64], sizes = [2, 32], strides = [1, 1]} : vector<2x96xf32> to vector<2x32xf32>
    %40 = arith.mulf %38, %15 : vector<2x32xf32>
    %41 = arith.mulf %37, %36 : vector<2x32xf32>
    %42 = arith.addf %40, %41 : vector<2x32xf32>
    %43 = math.tanh %42 : vector<2x32xf32>
    %44 = arith.mulf %39, %43 : vector<2x32xf32>
    %45 = vector.extract_strided_slice %28 {offsets = [0, 0], sizes = [2, 96], strides = [1, 1]} : vector<2x128xf32> to vector<2x96xf32>
    %46 = arith.negf %45 : vector<2x96xf32>
    %47 = math.exp %46 : vector<2x96xf32>
    %cst_21 = arith.constant 1.000000e+00 : f32
    %48 = vector.broadcast %cst_21 : f32 to vector<2x96xf32>
    %49 = arith.addf %48, %47 : vector<2x96xf32>
    %50 = arith.divf %48, %49 : vector<2x96xf32>
    %51 = vector.extract_strided_slice %28 {offsets = [0, 96], sizes = [2, 32], strides = [1, 1]} : vector<2x128xf32> to vector<2x32xf32>
    %52 = math.tanh %51 : vector<2x32xf32>
    %53 = vector.extract_strided_slice %50 {offsets = [0, 0], sizes = [2, 32], strides = [1, 1]} : vector<2x96xf32> to vector<2x32xf32>
    %54 = vector.extract_strided_slice %50 {offsets = [0, 32], sizes = [2, 32], strides = [1, 1]} : vector<2x96xf32> to vector<2x32xf32>
    %55 = vector.extract_strided_slice %50 {offsets = [0, 64], sizes = [2, 32], strides = [1, 1]} : vector<2x96xf32> to vector<2x32xf32>
    %56 = arith.mulf %54, %15 : vector<2x32xf32>
    %57 = arith.mulf %53, %52 : vector<2x32xf32>
    %58 = arith.addf %56, %57 : vector<2x32xf32>
    %59 = math.tanh %58 : vector<2x32xf32>
    %60 = arith.mulf %55, %59 : vector<2x32xf32>
    %61 = vector.extract_strided_slice %44 {offsets = [0, 0], sizes = [1, 32], strides = [1, 1]} : vector<2x32xf32> to vector<1x32xf32>
    %c0_i32_22 = arith.constant 0 : i32
    %62 = arith.addi %c0_i32_22, %c0_i32 : i32
    %63 = arith.index_cast %62 : i32 to index
    %c0_23 = arith.constant 0 : index
    %64 = vector.load %arg14[%63, %c0_23] : memref<16x64xf32, #tpu.memory_space<vmem>>, vector<1x32xf32>
    tpu.vector_store %arg14[%63, %c0_23], %61 {strides = array<i32>} : memref<16x64xf32, #tpu.memory_space<vmem>>, vector<1x32xf32>,
    %65 = vector.extract_strided_slice %60 {offsets = [0, 0], sizes = [1, 32], strides = [1, 1]} : vector<2x32xf32> to vector<1x32xf32>
    %c0_i32_24 = arith.constant 0 : i32
    %66 = arith.addi %c0_i32_24, %16 : i32
    %67 = arith.index_cast %66 : i32 to index
    %c32 = arith.constant 32 : index
    %68 = vector.load %arg14[%67, %c32] : memref<16x64xf32, #tpu.memory_space<vmem>>, vector<1x32xf32>
    tpu.vector_store %arg14[%67, %c32], %65 {strides = array<i32>} : memref<16x64xf32, #tpu.memory_space<vmem>>, vector<1x32xf32>,
    %69 = vector.extract_strided_slice %44 {offsets = [1, 0], sizes = [1, 32], strides = [1, 1]} : vector<2x32xf32> to vector<1x32xf32>
    %c8_i32 = arith.constant 8 : i32
    %70 = arith.addi %c8_i32, %c0_i32 : i32
    %71 = arith.index_cast %70 : i32 to index
    %c0_25 = arith.constant 0 : index
    %72 = vector.load %arg14[%71, %c0_25] : memref<16x64xf32, #tpu.memory_space<vmem>>, vector<1x32xf32>
    tpu.vector_store %arg14[%71, %c0_25], %69 {strides = array<i32>} : memref<16x64xf32, #tpu.memory_space<vmem>>, vector<1x32xf32>,
    %73 = vector.extract_strided_slice %60 {offsets = [1, 0], sizes = [1, 32], strides = [1, 1]} : vector<2x32xf32> to vector<1x32xf32>
    %c8_i32_26 = arith.constant 8 : i32
    %74 = arith.addi %c8_i32_26, %16 : i32
    %75 = arith.index_cast %74 : i32 to index
    %c32_27 = arith.constant 32 : index
    %76 = vector.load %arg14[%75, %c32_27] : memref<16x64xf32, #tpu.memory_space<vmem>>, vector<1x32xf32>
    tpu.vector_store %arg14[%75, %c32_27], %73 {strides = array<i32>} : memref<16x64xf32, #tpu.memory_space<vmem>>, vector<1x32xf32>,
    %c1_i32 = arith.constant 1 : i32
    %c7_i32_28 = arith.constant 7 : i32
    %77 = arith.subi %c7_i32_28, %c1_i32 : i32
    %c2_i32_29 = arith.constant 2 : i32
    %78 = arith.muli %c1_i32, %c2_i32_29 : i32
    %79 = arith.index_cast %78 : i32 to index
    %c0_30 = arith.constant 0 : index
    %80 = vector.load %arg13[%79, %c0_30] : memref<16x256xf32, #tpu.memory_space<vmem>>, vector<2x128xf32>
    %c0_31 = arith.constant 0 : index
    %c0_32 = arith.constant 0 : index
    %81 = vector.load %arg6[%c0_31, %c0_32] : memref<32x128xf32, #tpu.memory_space<vmem>>, vector<32x128xf32>
    %cst_33 = arith.constant dense<0.000000e+00> : vector<2x128xf32>
    %82 = tpu.matmul %44, %81, %cst_33 {dimension_numbers = #tpu.dot_dimension_numbers<[1], [0], [0], [1], [0, 0, 1, 1], [], []>} : vector<2x32xf32>, vector<32x128xf32>, vector<2x128xf32> -> vector<2x128xf32>
    %83 = arith.addf %80, %82 : vector<2x128xf32>
    %c2_i32_34 = arith.constant 2 : i32
    %84 = arith.muli %77, %c2_i32_34 : i32
    %85 = arith.index_cast %84 : i32 to index
    %c128_35 = arith.constant 128 : index
    %86 = vector.load %arg13[%85, %c128_35] : memref<16x256xf32, #tpu.memory_space<vmem>>, vector<2x128xf32>
    %c0_36 = arith.constant 0 : index
    %c0_37 = arith.constant 0 : index
    %87 = vector.load %arg7[%c0_36, %c0_37] : memref<32x128xf32, #tpu.memory_space<vmem>>, vector<32x128xf32>
    %cst_38 = arith.constant dense<0.000000e+00> : vector<2x128xf32>
    %88 = tpu.matmul %60, %87, %cst_38 {dimension_numbers = #tpu.dot_dimension_numbers<[1], [0], [0], [1], [0, 0, 1, 1], [], []>} : vector<2x32xf32>, vector<32x128xf32>, vector<2x128xf32> -> vector<2x128xf32>
    %89 = arith.addf %86, %88 : vector<2x128xf32>
    %90 = vector.extract_strided_slice %83 {offsets = [0, 0], sizes = [2, 96], strides = [1, 1]} : vector<2x128xf32> to vector<2x96xf32>
    %91 = arith.negf %90 : vector<2x96xf32>
    %92 = math.exp %91 : vector<2x96xf32>
    %cst_39 = arith.constant 1.000000e+00 : f32
    %93 = vector.broadcast %cst_39 : f32 to vector<2x96xf32>
    %94 = arith.addf %93, %92 : vector<2x96xf32>
    %95 = arith.divf %93, %94 : vector<2x96xf32>
    %96 = vector.extract_strided_slice %83 {offsets = [0, 96], sizes = [2, 32], strides = [1, 1]} : vector<2x128xf32> to vector<2x32xf32>
    %97 = math.tanh %96 : vector<2x32xf32>
    %98 = vector.extract_strided_slice %95 {offsets = [0, 0], sizes = [2, 32], strides = [1, 1]} : vector<2x96xf32> to vector<2x32xf32>
    %99 = vector.extract_strided_slice %95 {offsets = [0, 32], sizes = [2, 32], strides = [1, 1]} : vector<2x96xf32> to vector<2x32xf32>
    %100 = vector.extract_strided_slice %95 {offsets = [0, 64], sizes = [2, 32], strides = [1, 1]} : vector<2x96xf32> to vector<2x32xf32>
    %101 = arith.mulf %99, %42 : vector<2x32xf32>
    %102 = arith.mulf %98, %97 : vector<2x32xf32>
    %103 = arith.addf %101, %102 : vector<2x32xf32>
    %104 = math.tanh %103 : vector<2x32xf32>
    %105 = arith.mulf %100, %104 : vector<2x32xf32>
    %106 = vector.extract_strided_slice %89 {offsets = [0, 0], sizes = [2, 96], strides = [1, 1]} : vector<2x128xf32> to vector<2x96xf32>
    %107 = arith.negf %106 : vector<2x96xf32>
    %108 = math.exp %107 : vector<2x96xf32>
    %cst_40 = arith.constant 1.000000e+00 : f32
    %109 = vector.broadcast %cst_40 : f32 to vector<2x96xf32>
    %110 = arith.addf %109, %108 : vector<2x96xf32>
    %111 = arith.divf %109, %110 : vector<2x96xf32>
    %112 = vector.extract_strided_slice %89 {offsets = [0, 96], sizes = [2, 32], strides = [1, 1]} : vector<2x128xf32> to vector<2x32xf32>
    %113 = math.tanh %112 : vector<2x32xf32>
    %114 = vector.extract_strided_slice %111 {offsets = [0, 0], sizes = [2, 32], strides = [1, 1]} : vector<2x96xf32> to vector<2x32xf32>
    %115 = vector.extract_strided_slice %111 {offsets = [0, 32], sizes = [2, 32], strides = [1, 1]} : vector<2x96xf32> to vector<2x32xf32>
    %116 = vector.extract_strided_slice %111 {offsets = [0, 64], sizes = [2, 32], strides = [1, 1]} : vector<2x96xf32> to vector<2x32xf32>
    %117 = arith.mulf %115, %58 : vector<2x32xf32>
    %118 = arith.mulf %114, %113 : vector<2x32xf32>
    %119 = arith.addf %117, %118 : vector<2x32xf32>
    %120 = math.tanh %119 : vector<2x32xf32>
    %121 = arith.mulf %116, %120 : vector<2x32xf32>
    %122 = vector.extract_strided_slice %105 {offsets = [0, 0], sizes = [1, 32], strides = [1, 1]} : vector<2x32xf32> to vector<1x32xf32>
    %c0_i32_41 = arith.constant 0 : i32
    %123 = arith.addi %c0_i32_41, %c1_i32 : i32
    %124 = arith.index_cast %123 : i32 to index
    %c0_42 = arith.constant 0 : index
    %125 = vector.load %arg14[%124, %c0_42] : memref<16x64xf32, #tpu.memory_space<vmem>>, vector<1x32xf32>
    tpu.vector_store %arg14[%124, %c0_42], %122 {strides = array<i32>} : memref<16x64xf32, #tpu.memory_space<vmem>>, vector<1x32xf32>,
    %126 = vector.extract_strided_slice %121 {offsets = [0, 0], sizes = [1, 32], strides = [1, 1]} : vector<2x32xf32> to vector<1x32xf32>
    %c0_i32_43 = arith.constant 0 : i32
    %127 = arith.addi %c0_i32_43, %77 : i32
    %128 = arith.index_cast %127 : i32 to index
    %c32_44 = arith.constant 32 : index
    %129 = vector.load %arg14[%128, %c32_44] : memref<16x64xf32, #tpu.memory_space<vmem>>, vector<1x32xf32>
    tpu.vector_store %arg14[%128, %c32_44], %126 {strides = array<i32>} : memref<16x64xf32, #tpu.memory_space<vmem>>, vector<1x32xf32>,
    %130 = vector.extract_strided_slice %105 {offsets = [1, 0], sizes = [1, 32], strides = [1, 1]} : vector<2x32xf32> to vector<1x32xf32>
    %c8_i32_45 = arith.constant 8 : i32
    %131 = arith.addi %c8_i32_45, %c1_i32 : i32
    %132 = arith.index_cast %131 : i32 to index
    %c0_46 = arith.constant 0 : index
    %133 = vector.load %arg14[%132, %c0_46] : memref<16x64xf32, #tpu.memory_space<vmem>>, vector<1x32xf32>
    tpu.vector_store %arg14[%132, %c0_46], %130 {strides = array<i32>} : memref<16x64xf32, #tpu.memory_space<vmem>>, vector<1x32xf32>,
    %134 = vector.extract_strided_slice %121 {offsets = [1, 0], sizes = [1, 32], strides = [1, 1]} : vector<2x32xf32> to vector<1x32xf32>
    %c8_i32_47 = arith.constant 8 : i32
    %135 = arith.addi %c8_i32_47, %77 : i32
    %136 = arith.index_cast %135 : i32 to index
    %c32_48 = arith.constant 32 : index
    %137 = vector.load %arg14[%136, %c32_48] : memref<16x64xf32, #tpu.memory_space<vmem>>, vector<1x32xf32>
    tpu.vector_store %arg14[%136, %c32_48], %134 {strides = array<i32>} : memref<16x64xf32, #tpu.memory_space<vmem>>, vector<1x32xf32>,
    %c2_i32_49 = arith.constant 2 : i32
    %c7_i32_50 = arith.constant 7 : i32
    %138 = arith.subi %c7_i32_50, %c2_i32_49 : i32
    %c2_i32_51 = arith.constant 2 : i32
    %139 = arith.muli %c2_i32_49, %c2_i32_51 : i32
    %140 = arith.index_cast %139 : i32 to index
    %c0_52 = arith.constant 0 : index
    %141 = vector.load %arg13[%140, %c0_52] : memref<16x256xf32, #tpu.memory_space<vmem>>, vector<2x128xf32>
    %c0_53 = arith.constant 0 : index
    %c0_54 = arith.constant 0 : index
    %142 = vector.load %arg6[%c0_53, %c0_54] : memref<32x128xf32, #tpu.memory_space<vmem>>, vector<32x128xf32>
    %cst_55 = arith.constant dense<0.000000e+00> : vector<2x128xf32>
    %143 = tpu.matmul %105, %142, %cst_55 {dimension_numbers = #tpu.dot_dimension_numbers<[1], [0], [0], [1], [0, 0, 1, 1], [], []>} : vector<2x32xf32>, vector<32x128xf32>, vector<2x128xf32> -> vector<2x128xf32>
    %144 = arith.addf %141, %143 : vector<2x128xf32>
    %c2_i32_56 = arith.constant 2 : i32
    %145 = arith.muli %138, %c2_i32_56 : i32
    %146 = arith.index_cast %145 : i32 to index
    %c128_57 = arith.constant 128 : index
    %147 = vector.load %arg13[%146, %c128_57] : memref<16x256xf32, #tpu.memory_space<vmem>>, vector<2x128xf32>
    %c0_58 = arith.constant 0 : index
    %c0_59 = arith.constant 0 : index
    %148 = vector.load %arg7[%c0_58, %c0_59] : memref<32x128xf32, #tpu.memory_space<vmem>>, vector<32x128xf32>
    %cst_60 = arith.constant dense<0.000000e+00> : vector<2x128xf32>
    %149 = tpu.matmul %121, %148, %cst_60 {dimension_numbers = #tpu.dot_dimension_numbers<[1], [0], [0], [1], [0, 0, 1, 1], [], []>} : vector<2x32xf32>, vector<32x128xf32>, vector<2x128xf32> -> vector<2x128xf32>
    %150 = arith.addf %147, %149 : vector<2x128xf32>
    %151 = vector.extract_strided_slice %144 {offsets = [0, 0], sizes = [2, 96], strides = [1, 1]} : vector<2x128xf32> to vector<2x96xf32>
    %152 = arith.negf %151 : vector<2x96xf32>
    %153 = math.exp %152 : vector<2x96xf32>
    %cst_61 = arith.constant 1.000000e+00 : f32
    %154 = vector.broadcast %cst_61 : f32 to vector<2x96xf32>
    %155 = arith.addf %154, %153 : vector<2x96xf32>
    %156 = arith.divf %154, %155 : vector<2x96xf32>
    %157 = vector.extract_strided_slice %144 {offsets = [0, 96], sizes = [2, 32], strides = [1, 1]} : vector<2x128xf32> to vector<2x32xf32>
    %158 = math.tanh %157 : vector<2x32xf32>
    %159 = vector.extract_strided_slice %156 {offsets = [0, 0], sizes = [2, 32], strides = [1, 1]} : vector<2x96xf32> to vector<2x32xf32>
    %160 = vector.extract_strided_slice %156 {offsets = [0, 32], sizes = [2, 32], strides = [1, 1]} : vector<2x96xf32> to vector<2x32xf32>
    %161 = vector.extract_strided_slice %156 {offsets = [0, 64], sizes = [2, 32], strides = [1, 1]} : vector<2x96xf32> to vector<2x32xf32>
    %162 = arith.mulf %160, %103 : vector<2x32xf32>
    %163 = arith.mulf %159, %158 : vector<2x32xf32>
    %164 = arith.addf %162, %163 : vector<2x32xf32>
    %165 = math.tanh %164 : vector<2x32xf32>
    %166 = arith.mulf %161, %165 : vector<2x32xf32>
    %167 = vector.extract_strided_slice %150 {offsets = [0, 0], sizes = [2, 96], strides = [1, 1]} : vector<2x128xf32> to vector<2x96xf32>
    %168 = arith.negf %167 : vector<2x96xf32>
    %169 = math.exp %168 : vector<2x96xf32>
    %cst_62 = arith.constant 1.000000e+00 : f32
    %170 = vector.broadcast %cst_62 : f32 to vector<2x96xf32>
    %171 = arith.addf %170, %169 : vector<2x96xf32>
    %172 = arith.divf %170, %171 : vector<2x96xf32>
    %173 = vector.extract_strided_slice %150 {offsets = [0, 96], sizes = [2, 32], strides = [1, 1]} : vector<2x128xf32> to vector<2x32xf32>
    %174 = math.tanh %173 : vector<2x32xf32>
    %175 = vector.extract_strided_slice %172 {offsets = [0, 0], sizes = [2, 32], strides = [1, 1]} : vector<2x96xf32> to vector<2x32xf32>
    %176 = vector.extract_strided_slice %172 {offsets = [0, 32], sizes = [2, 32], strides = [1, 1]} : vector<2x96xf32> to vector<2x32xf32>
    %177 = vector.extract_strided_slice %172 {offsets = [0, 64], sizes = [2, 32], strides = [1, 1]} : vector<2x96xf32> to vector<2x32xf32>
    %178 = arith.mulf %176, %119 : vector<2x32xf32>
    %179 = arith.mulf %175, %174 : vector<2x32xf32>
    %180 = arith.addf %178, %179 : vector<2x32xf32>
    %181 = math.tanh %180 : vector<2x32xf32>
    %182 = arith.mulf %177, %181 : vector<2x32xf32>
    %183 = vector.extract_strided_slice %166 {offsets = [0, 0], sizes = [1, 32], strides = [1, 1]} : vector<2x32xf32> to vector<1x32xf32>
    %c0_i32_63 = arith.constant 0 : i32
    %184 = arith.addi %c0_i32_63, %c2_i32_49 : i32
    %185 = arith.index_cast %184 : i32 to index
    %c0_64 = arith.constant 0 : index
    %186 = vector.load %arg14[%185, %c0_64] : memref<16x64xf32, #tpu.memory_space<vmem>>, vector<1x32xf32>
    tpu.vector_store %arg14[%185, %c0_64], %183 {strides = array<i32>} : memref<16x64xf32, #tpu.memory_space<vmem>>, vector<1x32xf32>,
    %187 = vector.extract_strided_slice %182 {offsets = [0, 0], sizes = [1, 32], strides = [1, 1]} : vector<2x32xf32> to vector<1x32xf32>
    %c0_i32_65 = arith.constant 0 : i32
    %188 = arith.addi %c0_i32_65, %138 : i32
    %189 = arith.index_cast %188 : i32 to index
    %c32_66 = arith.constant 32 : index
    %190 = vector.load %arg14[%189, %c32_66] : memref<16x64xf32, #tpu.memory_space<vmem>>, vector<1x32xf32>
    tpu.vector_store %arg14[%189, %c32_66], %187 {strides = array<i32>} : memref<16x64xf32, #tpu.memory_space<vmem>>, vector<1x32xf32>,
    %191 = vector.extract_strided_slice %166 {offsets = [1, 0], sizes = [1, 32], strides = [1, 1]} : vector<2x32xf32> to vector<1x32xf32>
    %c8_i32_67 = arith.constant 8 : i32
    %192 = arith.addi %c8_i32_67, %c2_i32_49 : i32
    %193 = arith.index_cast %192 : i32 to index
    %c0_68 = arith.constant 0 : index
    %194 = vector.load %arg14[%193, %c0_68] : memref<16x64xf32, #tpu.memory_space<vmem>>, vector<1x32xf32>
    tpu.vector_store %arg14[%193, %c0_68], %191 {strides = array<i32>} : memref<16x64xf32, #tpu.memory_space<vmem>>, vector<1x32xf32>,
    %195 = vector.extract_strided_slice %182 {offsets = [1, 0], sizes = [1, 32], strides = [1, 1]} : vector<2x32xf32> to vector<1x32xf32>
    %c8_i32_69 = arith.constant 8 : i32
    %196 = arith.addi %c8_i32_69, %138 : i32
    %197 = arith.index_cast %196 : i32 to index
    %c32_70 = arith.constant 32 : index
    %198 = vector.load %arg14[%197, %c32_70] : memref<16x64xf32, #tpu.memory_space<vmem>>, vector<1x32xf32>
    tpu.vector_store %arg14[%197, %c32_70], %195 {strides = array<i32>} : memref<16x64xf32, #tpu.memory_space<vmem>>, vector<1x32xf32>,
    %c3_i32 = arith.constant 3 : i32
    %c7_i32_71 = arith.constant 7 : i32
    %199 = arith.subi %c7_i32_71, %c3_i32 : i32
    %c2_i32_72 = arith.constant 2 : i32
    %200 = arith.muli %c3_i32, %c2_i32_72 : i32
    %201 = arith.index_cast %200 : i32 to index
    %c0_73 = arith.constant 0 : index
    %202 = vector.load %arg13[%201, %c0_73] : memref<16x256xf32, #tpu.memory_space<vmem>>, vector<2x128xf32>
    %c0_74 = arith.constant 0 : index
    %c0_75 = arith.constant 0 : index
    %203 = vector.load %arg6[%c0_74, %c0_75] : memref<32x128xf32, #tpu.memory_space<vmem>>, vector<32x128xf32>
    %cst_76 = arith.constant dense<0.000000e+00> : vector<2x128xf32>
    %204 = tpu.matmul %166, %203, %cst_76 {dimension_numbers = #tpu.dot_dimension_numbers<[1], [0], [0], [1], [0, 0, 1, 1], [], []>} : vector<2x32xf32>, vector<32x128xf32>, vector<2x128xf32> -> vector<2x128xf32>
    %205 = arith.addf %202, %204 : vector<2x128xf32>
    %c2_i32_77 = arith.constant 2 : i32
    %206 = arith.muli %199, %c2_i32_77 : i32
    %207 = arith.index_cast %206 : i32 to index
    %c128_78 = arith.constant 128 : index
    %208 = vector.load %arg13[%207, %c128_78] : memref<16x256xf32, #tpu.memory_space<vmem>>, vector<2x128xf32>
    %c0_79 = arith.constant 0 : index
    %c0_80 = arith.constant 0 : index
    %209 = vector.load %arg7[%c0_79, %c0_80] : memref<32x128xf32, #tpu.memory_space<vmem>>, vector<32x128xf32>
    %cst_81 = arith.constant dense<0.000000e+00> : vector<2x128xf32>
    %210 = tpu.matmul %182, %209, %cst_81 {dimension_numbers = #tpu.dot_dimension_numbers<[1], [0], [0], [1], [0, 0, 1, 1], [], []>} : vector<2x32xf32>, vector<32x128xf32>, vector<2x128xf32> -> vector<2x128xf32>
    %211 = arith.addf %208, %210 : vector<2x128xf32>
    %212 = vector.extract_strided_slice %205 {offsets = [0, 0], sizes = [2, 96], strides = [1, 1]} : vector<2x128xf32> to vector<2x96xf32>
    %213 = arith.negf %212 : vector<2x96xf32>
    %214 = math.exp %213 : vector<2x96xf32>
    %cst_82 = arith.constant 1.000000e+00 : f32
    %215 = vector.broadcast %cst_82 : f32 to vector<2x96xf32>
    %216 = arith.addf %215, %214 : vector<2x96xf32>
    %217 = arith.divf %215, %216 : vector<2x96xf32>
    %218 = vector.extract_strided_slice %205 {offsets = [0, 96], sizes = [2, 32], strides = [1, 1]} : vector<2x128xf32> to vector<2x32xf32>
    %219 = math.tanh %218 : vector<2x32xf32>
    %220 = vector.extract_strided_slice %217 {offsets = [0, 0], sizes = [2, 32], strides = [1, 1]} : vector<2x96xf32> to vector<2x32xf32>
    %221 = vector.extract_strided_slice %217 {offsets = [0, 32], sizes = [2, 32], strides = [1, 1]} : vector<2x96xf32> to vector<2x32xf32>
    %222 = vector.extract_strided_slice %217 {offsets = [0, 64], sizes = [2, 32], strides = [1, 1]} : vector<2x96xf32> to vector<2x32xf32>
    %223 = arith.mulf %221, %164 : vector<2x32xf32>
    %224 = arith.mulf %220, %219 : vector<2x32xf32>
    %225 = arith.addf %223, %224 : vector<2x32xf32>
    %226 = math.tanh %225 : vector<2x32xf32>
    %227 = arith.mulf %222, %226 : vector<2x32xf32>
    %228 = vector.extract_strided_slice %211 {offsets = [0, 0], sizes = [2, 96], strides = [1, 1]} : vector<2x128xf32> to vector<2x96xf32>
    %229 = arith.negf %228 : vector<2x96xf32>
    %230 = math.exp %229 : vector<2x96xf32>
    %cst_83 = arith.constant 1.000000e+00 : f32
    %231 = vector.broadcast %cst_83 : f32 to vector<2x96xf32>
    %232 = arith.addf %231, %230 : vector<2x96xf32>
    %233 = arith.divf %231, %232 : vector<2x96xf32>
    %234 = vector.extract_strided_slice %211 {offsets = [0, 96], sizes = [2, 32], strides = [1, 1]} : vector<2x128xf32> to vector<2x32xf32>
    %235 = math.tanh %234 : vector<2x32xf32>
    %236 = vector.extract_strided_slice %233 {offsets = [0, 0], sizes = [2, 32], strides = [1, 1]} : vector<2x96xf32> to vector<2x32xf32>
    %237 = vector.extract_strided_slice %233 {offsets = [0, 32], sizes = [2, 32], strides = [1, 1]} : vector<2x96xf32> to vector<2x32xf32>
    %238 = vector.extract_strided_slice %233 {offsets = [0, 64], sizes = [2, 32], strides = [1, 1]} : vector<2x96xf32> to vector<2x32xf32>
    %239 = arith.mulf %237, %180 : vector<2x32xf32>
    %240 = arith.mulf %236, %235 : vector<2x32xf32>
    %241 = arith.addf %239, %240 : vector<2x32xf32>
    %242 = math.tanh %241 : vector<2x32xf32>
    %243 = arith.mulf %238, %242 : vector<2x32xf32>
    %244 = vector.extract_strided_slice %227 {offsets = [0, 0], sizes = [1, 32], strides = [1, 1]} : vector<2x32xf32> to vector<1x32xf32>
    %c0_i32_84 = arith.constant 0 : i32
    %245 = arith.addi %c0_i32_84, %c3_i32 : i32
    %246 = arith.index_cast %245 : i32 to index
    %c0_85 = arith.constant 0 : index
    %247 = vector.load %arg14[%246, %c0_85] : memref<16x64xf32, #tpu.memory_space<vmem>>, vector<1x32xf32>
    tpu.vector_store %arg14[%246, %c0_85], %244 {strides = array<i32>} : memref<16x64xf32, #tpu.memory_space<vmem>>, vector<1x32xf32>,
    %248 = vector.extract_strided_slice %243 {offsets = [0, 0], sizes = [1, 32], strides = [1, 1]} : vector<2x32xf32> to vector<1x32xf32>
    %c0_i32_86 = arith.constant 0 : i32
    %249 = arith.addi %c0_i32_86, %199 : i32
    %250 = arith.index_cast %249 : i32 to index
    %c32_87 = arith.constant 32 : index
    %251 = vector.load %arg14[%250, %c32_87] : memref<16x64xf32, #tpu.memory_space<vmem>>, vector<1x32xf32>
    tpu.vector_store %arg14[%250, %c32_87], %248 {strides = array<i32>} : memref<16x64xf32, #tpu.memory_space<vmem>>, vector<1x32xf32>,
    %252 = vector.extract_strided_slice %227 {offsets = [1, 0], sizes = [1, 32], strides = [1, 1]} : vector<2x32xf32> to vector<1x32xf32>
    %c8_i32_88 = arith.constant 8 : i32
    %253 = arith.addi %c8_i32_88, %c3_i32 : i32
    %254 = arith.index_cast %253 : i32 to index
    %c0_89 = arith.constant 0 : index
    %255 = vector.load %arg14[%254, %c0_89] : memref<16x64xf32, #tpu.memory_space<vmem>>, vector<1x32xf32>
    tpu.vector_store %arg14[%254, %c0_89], %252 {strides = array<i32>} : memref<16x64xf32, #tpu.memory_space<vmem>>, vector<1x32xf32>,
    %256 = vector.extract_strided_slice %243 {offsets = [1, 0], sizes = [1, 32], strides = [1, 1]} : vector<2x32xf32> to vector<1x32xf32>
    %c8_i32_90 = arith.constant 8 : i32
    %257 = arith.addi %c8_i32_90, %199 : i32
    %258 = arith.index_cast %257 : i32 to index
    %c32_91 = arith.constant 32 : index
    %259 = vector.load %arg14[%258, %c32_91] : memref<16x64xf32, #tpu.memory_space<vmem>>, vector<1x32xf32>
    tpu.vector_store %arg14[%258, %c32_91], %256 {strides = array<i32>} : memref<16x64xf32, #tpu.memory_space<vmem>>, vector<1x32xf32>,
    %c4_i32 = arith.constant 4 : i32
    %c7_i32_92 = arith.constant 7 : i32
    %260 = arith.subi %c7_i32_92, %c4_i32 : i32
    %c2_i32_93 = arith.constant 2 : i32
    %261 = arith.muli %c4_i32, %c2_i32_93 : i32
    %262 = arith.index_cast %261 : i32 to index
    %c0_94 = arith.constant 0 : index
    %263 = vector.load %arg13[%262, %c0_94] : memref<16x256xf32, #tpu.memory_space<vmem>>, vector<2x128xf32>
    %c0_95 = arith.constant 0 : index
    %c0_96 = arith.constant 0 : index
    %264 = vector.load %arg6[%c0_95, %c0_96] : memref<32x128xf32, #tpu.memory_space<vmem>>, vector<32x128xf32>
    %cst_97 = arith.constant dense<0.000000e+00> : vector<2x128xf32>
    %265 = tpu.matmul %227, %264, %cst_97 {dimension_numbers = #tpu.dot_dimension_numbers<[1], [0], [0], [1], [0, 0, 1, 1], [], []>} : vector<2x32xf32>, vector<32x128xf32>, vector<2x128xf32> -> vector<2x128xf32>
    %266 = arith.addf %263, %265 : vector<2x128xf32>
    %c2_i32_98 = arith.constant 2 : i32
    %267 = arith.muli %260, %c2_i32_98 : i32
    %268 = arith.index_cast %267 : i32 to index
    %c128_99 = arith.constant 128 : index
    %269 = vector.load %arg13[%268, %c128_99] : memref<16x256xf32, #tpu.memory_space<vmem>>, vector<2x128xf32>
    %c0_100 = arith.constant 0 : index
    %c0_101 = arith.constant 0 : index
    %270 = vector.load %arg7[%c0_100, %c0_101] : memref<32x128xf32, #tpu.memory_space<vmem>>, vector<32x128xf32>
    %cst_102 = arith.constant dense<0.000000e+00> : vector<2x128xf32>
    %271 = tpu.matmul %243, %270, %cst_102 {dimension_numbers = #tpu.dot_dimension_numbers<[1], [0], [0], [1], [0, 0, 1, 1], [], []>} : vector<2x32xf32>, vector<32x128xf32>, vector<2x128xf32> -> vector<2x128xf32>
    %272 = arith.addf %269, %271 : vector<2x128xf32>
    %273 = vector.extract_strided_slice %266 {offsets = [0, 0], sizes = [2, 96], strides = [1, 1]} : vector<2x128xf32> to vector<2x96xf32>
    %274 = arith.negf %273 : vector<2x96xf32>
    %275 = math.exp %274 : vector<2x96xf32>
    %cst_103 = arith.constant 1.000000e+00 : f32
    %276 = vector.broadcast %cst_103 : f32 to vector<2x96xf32>
    %277 = arith.addf %276, %275 : vector<2x96xf32>
    %278 = arith.divf %276, %277 : vector<2x96xf32>
    %279 = vector.extract_strided_slice %266 {offsets = [0, 96], sizes = [2, 32], strides = [1, 1]} : vector<2x128xf32> to vector<2x32xf32>
    %280 = math.tanh %279 : vector<2x32xf32>
    %281 = vector.extract_strided_slice %278 {offsets = [0, 0], sizes = [2, 32], strides = [1, 1]} : vector<2x96xf32> to vector<2x32xf32>
    %282 = vector.extract_strided_slice %278 {offsets = [0, 32], sizes = [2, 32], strides = [1, 1]} : vector<2x96xf32> to vector<2x32xf32>
    %283 = vector.extract_strided_slice %278 {offsets = [0, 64], sizes = [2, 32], strides = [1, 1]} : vector<2x96xf32> to vector<2x32xf32>
    %284 = arith.mulf %282, %225 : vector<2x32xf32>
    %285 = arith.mulf %281, %280 : vector<2x32xf32>
    %286 = arith.addf %284, %285 : vector<2x32xf32>
    %287 = math.tanh %286 : vector<2x32xf32>
    %288 = arith.mulf %283, %287 : vector<2x32xf32>
    %289 = vector.extract_strided_slice %272 {offsets = [0, 0], sizes = [2, 96], strides = [1, 1]} : vector<2x128xf32> to vector<2x96xf32>
    %290 = arith.negf %289 : vector<2x96xf32>
    %291 = math.exp %290 : vector<2x96xf32>
    %cst_104 = arith.constant 1.000000e+00 : f32
    %292 = vector.broadcast %cst_104 : f32 to vector<2x96xf32>
    %293 = arith.addf %292, %291 : vector<2x96xf32>
    %294 = arith.divf %292, %293 : vector<2x96xf32>
    %295 = vector.extract_strided_slice %272 {offsets = [0, 96], sizes = [2, 32], strides = [1, 1]} : vector<2x128xf32> to vector<2x32xf32>
    %296 = math.tanh %295 : vector<2x32xf32>
    %297 = vector.extract_strided_slice %294 {offsets = [0, 0], sizes = [2, 32], strides = [1, 1]} : vector<2x96xf32> to vector<2x32xf32>
    %298 = vector.extract_strided_slice %294 {offsets = [0, 32], sizes = [2, 32], strides = [1, 1]} : vector<2x96xf32> to vector<2x32xf32>
    %299 = vector.extract_strided_slice %294 {offsets = [0, 64], sizes = [2, 32], strides = [1, 1]} : vector<2x96xf32> to vector<2x32xf32>
    %300 = arith.mulf %298, %241 : vector<2x32xf32>
    %301 = arith.mulf %297, %296 : vector<2x32xf32>
    %302 = arith.addf %300, %301 : vector<2x32xf32>
    %303 = math.tanh %302 : vector<2x32xf32>
    %304 = arith.mulf %299, %303 : vector<2x32xf32>
    %305 = vector.extract_strided_slice %288 {offsets = [0, 0], sizes = [1, 32], strides = [1, 1]} : vector<2x32xf32> to vector<1x32xf32>
    %c0_i32_105 = arith.constant 0 : i32
    %306 = arith.addi %c0_i32_105, %c4_i32 : i32
    %307 = arith.index_cast %306 : i32 to index
    %c0_106 = arith.constant 0 : index
    %308 = vector.load %arg14[%307, %c0_106] : memref<16x64xf32, #tpu.memory_space<vmem>>, vector<1x32xf32>
    tpu.vector_store %arg14[%307, %c0_106], %305 {strides = array<i32>} : memref<16x64xf32, #tpu.memory_space<vmem>>, vector<1x32xf32>,
    %309 = vector.extract_strided_slice %304 {offsets = [0, 0], sizes = [1, 32], strides = [1, 1]} : vector<2x32xf32> to vector<1x32xf32>
    %c0_i32_107 = arith.constant 0 : i32
    %310 = arith.addi %c0_i32_107, %260 : i32
    %311 = arith.index_cast %310 : i32 to index
    %c32_108 = arith.constant 32 : index
    %312 = vector.load %arg14[%311, %c32_108] : memref<16x64xf32, #tpu.memory_space<vmem>>, vector<1x32xf32>
    tpu.vector_store %arg14[%311, %c32_108], %309 {strides = array<i32>} : memref<16x64xf32, #tpu.memory_space<vmem>>, vector<1x32xf32>,
    %313 = vector.extract_strided_slice %288 {offsets = [1, 0], sizes = [1, 32], strides = [1, 1]} : vector<2x32xf32> to vector<1x32xf32>
    %c8_i32_109 = arith.constant 8 : i32
    %314 = arith.addi %c8_i32_109, %c4_i32 : i32
    %315 = arith.index_cast %314 : i32 to index
    %c0_110 = arith.constant 0 : index
    %316 = vector.load %arg14[%315, %c0_110] : memref<16x64xf32, #tpu.memory_space<vmem>>, vector<1x32xf32>
    tpu.vector_store %arg14[%315, %c0_110], %313 {strides = array<i32>} : memref<16x64xf32, #tpu.memory_space<vmem>>, vector<1x32xf32>,
    %317 = vector.extract_strided_slice %304 {offsets = [1, 0], sizes = [1, 32], strides = [1, 1]} : vector<2x32xf32> to vector<1x32xf32>
    %c8_i32_111 = arith.constant 8 : i32
    %318 = arith.addi %c8_i32_111, %260 : i32
    %319 = arith.index_cast %318 : i32 to index
    %c32_112 = arith.constant 32 : index
    %320 = vector.load %arg14[%319, %c32_112] : memref<16x64xf32, #tpu.memory_space<vmem>>, vector<1x32xf32>
    tpu.vector_store %arg14[%319, %c32_112], %317 {strides = array<i32>} : memref<16x64xf32, #tpu.memory_space<vmem>>, vector<1x32xf32>,
    %c5_i32 = arith.constant 5 : i32
    %c7_i32_113 = arith.constant 7 : i32
    %321 = arith.subi %c7_i32_113, %c5_i32 : i32
    %c2_i32_114 = arith.constant 2 : i32
    %322 = arith.muli %c5_i32, %c2_i32_114 : i32
    %323 = arith.index_cast %322 : i32 to index
    %c0_115 = arith.constant 0 : index
    %324 = vector.load %arg13[%323, %c0_115] : memref<16x256xf32, #tpu.memory_space<vmem>>, vector<2x128xf32>
    %c0_116 = arith.constant 0 : index
    %c0_117 = arith.constant 0 : index
    %325 = vector.load %arg6[%c0_116, %c0_117] : memref<32x128xf32, #tpu.memory_space<vmem>>, vector<32x128xf32>
    %cst_118 = arith.constant dense<0.000000e+00> : vector<2x128xf32>
    %326 = tpu.matmul %288, %325, %cst_118 {dimension_numbers = #tpu.dot_dimension_numbers<[1], [0], [0], [1], [0, 0, 1, 1], [], []>} : vector<2x32xf32>, vector<32x128xf32>, vector<2x128xf32> -> vector<2x128xf32>
    %327 = arith.addf %324, %326 : vector<2x128xf32>
    %c2_i32_119 = arith.constant 2 : i32
    %328 = arith.muli %321, %c2_i32_119 : i32
    %329 = arith.index_cast %328 : i32 to index
    %c128_120 = arith.constant 128 : index
    %330 = vector.load %arg13[%329, %c128_120] : memref<16x256xf32, #tpu.memory_space<vmem>>, vector<2x128xf32>
    %c0_121 = arith.constant 0 : index
    %c0_122 = arith.constant 0 : index
    %331 = vector.load %arg7[%c0_121, %c0_122] : memref<32x128xf32, #tpu.memory_space<vmem>>, vector<32x128xf32>
    %cst_123 = arith.constant dense<0.000000e+00> : vector<2x128xf32>
    %332 = tpu.matmul %304, %331, %cst_123 {dimension_numbers = #tpu.dot_dimension_numbers<[1], [0], [0], [1], [0, 0, 1, 1], [], []>} : vector<2x32xf32>, vector<32x128xf32>, vector<2x128xf32> -> vector<2x128xf32>
    %333 = arith.addf %330, %332 : vector<2x128xf32>
    %334 = vector.extract_strided_slice %327 {offsets = [0, 0], sizes = [2, 96], strides = [1, 1]} : vector<2x128xf32> to vector<2x96xf32>
    %335 = arith.negf %334 : vector<2x96xf32>
    %336 = math.exp %335 : vector<2x96xf32>
    %cst_124 = arith.constant 1.000000e+00 : f32
    %337 = vector.broadcast %cst_124 : f32 to vector<2x96xf32>
    %338 = arith.addf %337, %336 : vector<2x96xf32>
    %339 = arith.divf %337, %338 : vector<2x96xf32>
    %340 = vector.extract_strided_slice %327 {offsets = [0, 96], sizes = [2, 32], strides = [1, 1]} : vector<2x128xf32> to vector<2x32xf32>
    %341 = math.tanh %340 : vector<2x32xf32>
    %342 = vector.extract_strided_slice %339 {offsets = [0, 0], sizes = [2, 32], strides = [1, 1]} : vector<2x96xf32> to vector<2x32xf32>
    %343 = vector.extract_strided_slice %339 {offsets = [0, 32], sizes = [2, 32], strides = [1, 1]} : vector<2x96xf32> to vector<2x32xf32>
    %344 = vector.extract_strided_slice %339 {offsets = [0, 64], sizes = [2, 32], strides = [1, 1]} : vector<2x96xf32> to vector<2x32xf32>
    %345 = arith.mulf %343, %286 : vector<2x32xf32>
    %346 = arith.mulf %342, %341 : vector<2x32xf32>
    %347 = arith.addf %345, %346 : vector<2x32xf32>
    %348 = math.tanh %347 : vector<2x32xf32>
    %349 = arith.mulf %344, %348 : vector<2x32xf32>
    %350 = vector.extract_strided_slice %333 {offsets = [0, 0], sizes = [2, 96], strides = [1, 1]} : vector<2x128xf32> to vector<2x96xf32>
    %351 = arith.negf %350 : vector<2x96xf32>
    %352 = math.exp %351 : vector<2x96xf32>
    %cst_125 = arith.constant 1.000000e+00 : f32
    %353 = vector.broadcast %cst_125 : f32 to vector<2x96xf32>
    %354 = arith.addf %353, %352 : vector<2x96xf32>
    %355 = arith.divf %353, %354 : vector<2x96xf32>
    %356 = vector.extract_strided_slice %333 {offsets = [0, 96], sizes = [2, 32], strides = [1, 1]} : vector<2x128xf32> to vector<2x32xf32>
    %357 = math.tanh %356 : vector<2x32xf32>
    %358 = vector.extract_strided_slice %355 {offsets = [0, 0], sizes = [2, 32], strides = [1, 1]} : vector<2x96xf32> to vector<2x32xf32>
    %359 = vector.extract_strided_slice %355 {offsets = [0, 32], sizes = [2, 32], strides = [1, 1]} : vector<2x96xf32> to vector<2x32xf32>
    %360 = vector.extract_strided_slice %355 {offsets = [0, 64], sizes = [2, 32], strides = [1, 1]} : vector<2x96xf32> to vector<2x32xf32>
    %361 = arith.mulf %359, %302 : vector<2x32xf32>
    %362 = arith.mulf %358, %357 : vector<2x32xf32>
    %363 = arith.addf %361, %362 : vector<2x32xf32>
    %364 = math.tanh %363 : vector<2x32xf32>
    %365 = arith.mulf %360, %364 : vector<2x32xf32>
    %366 = vector.extract_strided_slice %349 {offsets = [0, 0], sizes = [1, 32], strides = [1, 1]} : vector<2x32xf32> to vector<1x32xf32>
    %c0_i32_126 = arith.constant 0 : i32
    %367 = arith.addi %c0_i32_126, %c5_i32 : i32
    %368 = arith.index_cast %367 : i32 to index
    %c0_127 = arith.constant 0 : index
    %369 = vector.load %arg14[%368, %c0_127] : memref<16x64xf32, #tpu.memory_space<vmem>>, vector<1x32xf32>
    tpu.vector_store %arg14[%368, %c0_127], %366 {strides = array<i32>} : memref<16x64xf32, #tpu.memory_space<vmem>>, vector<1x32xf32>,
    %370 = vector.extract_strided_slice %365 {offsets = [0, 0], sizes = [1, 32], strides = [1, 1]} : vector<2x32xf32> to vector<1x32xf32>
    %c0_i32_128 = arith.constant 0 : i32
    %371 = arith.addi %c0_i32_128, %321 : i32
    %372 = arith.index_cast %371 : i32 to index
    %c32_129 = arith.constant 32 : index
    %373 = vector.load %arg14[%372, %c32_129] : memref<16x64xf32, #tpu.memory_space<vmem>>, vector<1x32xf32>
    tpu.vector_store %arg14[%372, %c32_129], %370 {strides = array<i32>} : memref<16x64xf32, #tpu.memory_space<vmem>>, vector<1x32xf32>,
    %374 = vector.extract_strided_slice %349 {offsets = [1, 0], sizes = [1, 32], strides = [1, 1]} : vector<2x32xf32> to vector<1x32xf32>
    %c8_i32_130 = arith.constant 8 : i32
    %375 = arith.addi %c8_i32_130, %c5_i32 : i32
    %376 = arith.index_cast %375 : i32 to index
    %c0_131 = arith.constant 0 : index
    %377 = vector.load %arg14[%376, %c0_131] : memref<16x64xf32, #tpu.memory_space<vmem>>, vector<1x32xf32>
    tpu.vector_store %arg14[%376, %c0_131], %374 {strides = array<i32>} : memref<16x64xf32, #tpu.memory_space<vmem>>, vector<1x32xf32>,
    %378 = vector.extract_strided_slice %365 {offsets = [1, 0], sizes = [1, 32], strides = [1, 1]} : vector<2x32xf32> to vector<1x32xf32>
    %c8_i32_132 = arith.constant 8 : i32
    %379 = arith.addi %c8_i32_132, %321 : i32
    %380 = arith.index_cast %379 : i32 to index
    %c32_133 = arith.constant 32 : index
    %381 = vector.load %arg14[%380, %c32_133] : memref<16x64xf32, #tpu.memory_space<vmem>>, vector<1x32xf32>
    tpu.vector_store %arg14[%380, %c32_133], %378 {strides = array<i32>} : memref<16x64xf32, #tpu.memory_space<vmem>>, vector<1x32xf32>,
    %c6_i32 = arith.constant 6 : i32
    %c7_i32_134 = arith.constant 7 : i32
    %382 = arith.subi %c7_i32_134, %c6_i32 : i32
    %c2_i32_135 = arith.constant 2 : i32
    %383 = arith.muli %c6_i32, %c2_i32_135 : i32
    %384 = arith.index_cast %383 : i32 to index
    %c0_136 = arith.constant 0 : index
    %385 = vector.load %arg13[%384, %c0_136] : memref<16x256xf32, #tpu.memory_space<vmem>>, vector<2x128xf32>
    %c0_137 = arith.constant 0 : index
    %c0_138 = arith.constant 0 : index
    %386 = vector.load %arg6[%c0_137, %c0_138] : memref<32x128xf32, #tpu.memory_space<vmem>>, vector<32x128xf32>
    %cst_139 = arith.constant dense<0.000000e+00> : vector<2x128xf32>
    %387 = tpu.matmul %349, %386, %cst_139 {dimension_numbers = #tpu.dot_dimension_numbers<[1], [0], [0], [1], [0, 0, 1, 1], [], []>} : vector<2x32xf32>, vector<32x128xf32>, vector<2x128xf32> -> vector<2x128xf32>
    %388 = arith.addf %385, %387 : vector<2x128xf32>
    %c2_i32_140 = arith.constant 2 : i32
    %389 = arith.muli %382, %c2_i32_140 : i32
    %390 = arith.index_cast %389 : i32 to index
    %c128_141 = arith.constant 128 : index
    %391 = vector.load %arg13[%390, %c128_141] : memref<16x256xf32, #tpu.memory_space<vmem>>, vector<2x128xf32>
    %c0_142 = arith.constant 0 : index
    %c0_143 = arith.constant 0 : index
    %392 = vector.load %arg7[%c0_142, %c0_143] : memref<32x128xf32, #tpu.memory_space<vmem>>, vector<32x128xf32>
    %cst_144 = arith.constant dense<0.000000e+00> : vector<2x128xf32>
    %393 = tpu.matmul %365, %392, %cst_144 {dimension_numbers = #tpu.dot_dimension_numbers<[1], [0], [0], [1], [0, 0, 1, 1], [], []>} : vector<2x32xf32>, vector<32x128xf32>, vector<2x128xf32> -> vector<2x128xf32>
    %394 = arith.addf %391, %393 : vector<2x128xf32>
    %395 = vector.extract_strided_slice %388 {offsets = [0, 0], sizes = [2, 96], strides = [1, 1]} : vector<2x128xf32> to vector<2x96xf32>
    %396 = arith.negf %395 : vector<2x96xf32>
    %397 = math.exp %396 : vector<2x96xf32>
    %cst_145 = arith.constant 1.000000e+00 : f32
    %398 = vector.broadcast %cst_145 : f32 to vector<2x96xf32>
    %399 = arith.addf %398, %397 : vector<2x96xf32>
    %400 = arith.divf %398, %399 : vector<2x96xf32>
    %401 = vector.extract_strided_slice %388 {offsets = [0, 96], sizes = [2, 32], strides = [1, 1]} : vector<2x128xf32> to vector<2x32xf32>
    %402 = math.tanh %401 : vector<2x32xf32>
    %403 = vector.extract_strided_slice %400 {offsets = [0, 0], sizes = [2, 32], strides = [1, 1]} : vector<2x96xf32> to vector<2x32xf32>
    %404 = vector.extract_strided_slice %400 {offsets = [0, 32], sizes = [2, 32], strides = [1, 1]} : vector<2x96xf32> to vector<2x32xf32>
    %405 = vector.extract_strided_slice %400 {offsets = [0, 64], sizes = [2, 32], strides = [1, 1]} : vector<2x96xf32> to vector<2x32xf32>
    %406 = arith.mulf %404, %347 : vector<2x32xf32>
    %407 = arith.mulf %403, %402 : vector<2x32xf32>
    %408 = arith.addf %406, %407 : vector<2x32xf32>
    %409 = math.tanh %408 : vector<2x32xf32>
    %410 = arith.mulf %405, %409 : vector<2x32xf32>
    %411 = vector.extract_strided_slice %394 {offsets = [0, 0], sizes = [2, 96], strides = [1, 1]} : vector<2x128xf32> to vector<2x96xf32>
    %412 = arith.negf %411 : vector<2x96xf32>
    %413 = math.exp %412 : vector<2x96xf32>
    %cst_146 = arith.constant 1.000000e+00 : f32
    %414 = vector.broadcast %cst_146 : f32 to vector<2x96xf32>
    %415 = arith.addf %414, %413 : vector<2x96xf32>
    %416 = arith.divf %414, %415 : vector<2x96xf32>
    %417 = vector.extract_strided_slice %394 {offsets = [0, 96], sizes = [2, 32], strides = [1, 1]} : vector<2x128xf32> to vector<2x32xf32>
    %418 = math.tanh %417 : vector<2x32xf32>
    %419 = vector.extract_strided_slice %416 {offsets = [0, 0], sizes = [2, 32], strides = [1, 1]} : vector<2x96xf32> to vector<2x32xf32>
    %420 = vector.extract_strided_slice %416 {offsets = [0, 32], sizes = [2, 32], strides = [1, 1]} : vector<2x96xf32> to vector<2x32xf32>
    %421 = vector.extract_strided_slice %416 {offsets = [0, 64], sizes = [2, 32], strides = [1, 1]} : vector<2x96xf32> to vector<2x32xf32>
    %422 = arith.mulf %420, %363 : vector<2x32xf32>
    %423 = arith.mulf %419, %418 : vector<2x32xf32>
    %424 = arith.addf %422, %423 : vector<2x32xf32>
    %425 = math.tanh %424 : vector<2x32xf32>
    %426 = arith.mulf %421, %425 : vector<2x32xf32>
    %427 = vector.extract_strided_slice %410 {offsets = [0, 0], sizes = [1, 32], strides = [1, 1]} : vector<2x32xf32> to vector<1x32xf32>
    %c0_i32_147 = arith.constant 0 : i32
    %428 = arith.addi %c0_i32_147, %c6_i32 : i32
    %429 = arith.index_cast %428 : i32 to index
    %c0_148 = arith.constant 0 : index
    %430 = vector.load %arg14[%429, %c0_148] : memref<16x64xf32, #tpu.memory_space<vmem>>, vector<1x32xf32>
    tpu.vector_store %arg14[%429, %c0_148], %427 {strides = array<i32>} : memref<16x64xf32, #tpu.memory_space<vmem>>, vector<1x32xf32>,
    %431 = vector.extract_strided_slice %426 {offsets = [0, 0], sizes = [1, 32], strides = [1, 1]} : vector<2x32xf32> to vector<1x32xf32>
    %c0_i32_149 = arith.constant 0 : i32
    %432 = arith.addi %c0_i32_149, %382 : i32
    %433 = arith.index_cast %432 : i32 to index
    %c32_150 = arith.constant 32 : index
    %434 = vector.load %arg14[%433, %c32_150] : memref<16x64xf32, #tpu.memory_space<vmem>>, vector<1x32xf32>
    tpu.vector_store %arg14[%433, %c32_150], %431 {strides = array<i32>} : memref<16x64xf32, #tpu.memory_space<vmem>>, vector<1x32xf32>,
    %435 = vector.extract_strided_slice %410 {offsets = [1, 0], sizes = [1, 32], strides = [1, 1]} : vector<2x32xf32> to vector<1x32xf32>
    %c8_i32_151 = arith.constant 8 : i32
    %436 = arith.addi %c8_i32_151, %c6_i32 : i32
    %437 = arith.index_cast %436 : i32 to index
    %c0_152 = arith.constant 0 : index
    %438 = vector.load %arg14[%437, %c0_152] : memref<16x64xf32, #tpu.memory_space<vmem>>, vector<1x32xf32>
    tpu.vector_store %arg14[%437, %c0_152], %435 {strides = array<i32>} : memref<16x64xf32, #tpu.memory_space<vmem>>, vector<1x32xf32>,
    %439 = vector.extract_strided_slice %426 {offsets = [1, 0], sizes = [1, 32], strides = [1, 1]} : vector<2x32xf32> to vector<1x32xf32>
    %c8_i32_153 = arith.constant 8 : i32
    %440 = arith.addi %c8_i32_153, %382 : i32
    %441 = arith.index_cast %440 : i32 to index
    %c32_154 = arith.constant 32 : index
    %442 = vector.load %arg14[%441, %c32_154] : memref<16x64xf32, #tpu.memory_space<vmem>>, vector<1x32xf32>
    tpu.vector_store %arg14[%441, %c32_154], %439 {strides = array<i32>} : memref<16x64xf32, #tpu.memory_space<vmem>>, vector<1x32xf32>,
    %c7_i32_155 = arith.constant 7 : i32
    %c7_i32_156 = arith.constant 7 : i32
    %443 = arith.subi %c7_i32_156, %c7_i32_155 : i32
    %c2_i32_157 = arith.constant 2 : i32
    %444 = arith.muli %c7_i32_155, %c2_i32_157 : i32
    %445 = arith.index_cast %444 : i32 to index
    %c0_158 = arith.constant 0 : index
    %446 = vector.load %arg13[%445, %c0_158] : memref<16x256xf32, #tpu.memory_space<vmem>>, vector<2x128xf32>
    %c0_159 = arith.constant 0 : index
    %c0_160 = arith.constant 0 : index
    %447 = vector.load %arg6[%c0_159, %c0_160] : memref<32x128xf32, #tpu.memory_space<vmem>>, vector<32x128xf32>
    %cst_161 = arith.constant dense<0.000000e+00> : vector<2x128xf32>
    %448 = tpu.matmul %410, %447, %cst_161 {dimension_numbers = #tpu.dot_dimension_numbers<[1], [0], [0], [1], [0, 0, 1, 1], [], []>} : vector<2x32xf32>, vector<32x128xf32>, vector<2x128xf32> -> vector<2x128xf32>
    %449 = arith.addf %446, %448 : vector<2x128xf32>
    %c2_i32_162 = arith.constant 2 : i32
    %450 = arith.muli %443, %c2_i32_162 : i32
    %451 = arith.index_cast %450 : i32 to index
    %c128_163 = arith.constant 128 : index
    %452 = vector.load %arg13[%451, %c128_163] : memref<16x256xf32, #tpu.memory_space<vmem>>, vector<2x128xf32>
    %c0_164 = arith.constant 0 : index
    %c0_165 = arith.constant 0 : index
    %453 = vector.load %arg7[%c0_164, %c0_165] : memref<32x128xf32, #tpu.memory_space<vmem>>, vector<32x128xf32>
    %cst_166 = arith.constant dense<0.000000e+00> : vector<2x128xf32>
    %454 = tpu.matmul %426, %453, %cst_166 {dimension_numbers = #tpu.dot_dimension_numbers<[1], [0], [0], [1], [0, 0, 1, 1], [], []>} : vector<2x32xf32>, vector<32x128xf32>, vector<2x128xf32> -> vector<2x128xf32>
    %455 = arith.addf %452, %454 : vector<2x128xf32>
    %456 = vector.extract_strided_slice %449 {offsets = [0, 0], sizes = [2, 96], strides = [1, 1]} : vector<2x128xf32> to vector<2x96xf32>
    %457 = arith.negf %456 : vector<2x96xf32>
    %458 = math.exp %457 : vector<2x96xf32>
    %cst_167 = arith.constant 1.000000e+00 : f32
    %459 = vector.broadcast %cst_167 : f32 to vector<2x96xf32>
    %460 = arith.addf %459, %458 : vector<2x96xf32>
    %461 = arith.divf %459, %460 : vector<2x96xf32>
    %462 = vector.extract_strided_slice %449 {offsets = [0, 96], sizes = [2, 32], strides = [1, 1]} : vector<2x128xf32> to vector<2x32xf32>
    %463 = math.tanh %462 : vector<2x32xf32>
    %464 = vector.extract_strided_slice %461 {offsets = [0, 0], sizes = [2, 32], strides = [1, 1]} : vector<2x96xf32> to vector<2x32xf32>
    %465 = vector.extract_strided_slice %461 {offsets = [0, 32], sizes = [2, 32], strides = [1, 1]} : vector<2x96xf32> to vector<2x32xf32>
    %466 = vector.extract_strided_slice %461 {offsets = [0, 64], sizes = [2, 32], strides = [1, 1]} : vector<2x96xf32> to vector<2x32xf32>
    %467 = arith.mulf %465, %408 : vector<2x32xf32>
    %468 = arith.mulf %464, %463 : vector<2x32xf32>
    %469 = arith.addf %467, %468 : vector<2x32xf32>
    %470 = math.tanh %469 : vector<2x32xf32>
    %471 = arith.mulf %466, %470 : vector<2x32xf32>
    %472 = vector.extract_strided_slice %455 {offsets = [0, 0], sizes = [2, 96], strides = [1, 1]} : vector<2x128xf32> to vector<2x96xf32>
    %473 = arith.negf %472 : vector<2x96xf32>
    %474 = math.exp %473 : vector<2x96xf32>
    %cst_168 = arith.constant 1.000000e+00 : f32
    %475 = vector.broadcast %cst_168 : f32 to vector<2x96xf32>
    %476 = arith.addf %475, %474 : vector<2x96xf32>
    %477 = arith.divf %475, %476 : vector<2x96xf32>
    %478 = vector.extract_strided_slice %455 {offsets = [0, 96], sizes = [2, 32], strides = [1, 1]} : vector<2x128xf32> to vector<2x32xf32>
    %479 = math.tanh %478 : vector<2x32xf32>
    %480 = vector.extract_strided_slice %477 {offsets = [0, 0], sizes = [2, 32], strides = [1, 1]} : vector<2x96xf32> to vector<2x32xf32>
    %481 = vector.extract_strided_slice %477 {offsets = [0, 32], sizes = [2, 32], strides = [1, 1]} : vector<2x96xf32> to vector<2x32xf32>
    %482 = vector.extract_strided_slice %477 {offsets = [0, 64], sizes = [2, 32], strides = [1, 1]} : vector<2x96xf32> to vector<2x32xf32>
    %483 = arith.mulf %481, %424 : vector<2x32xf32>
    %484 = arith.mulf %480, %479 : vector<2x32xf32>
    %485 = arith.addf %483, %484 : vector<2x32xf32>
    %486 = math.tanh %485 : vector<2x32xf32>
    %487 = arith.mulf %482, %486 : vector<2x32xf32>
    %488 = vector.extract_strided_slice %471 {offsets = [0, 0], sizes = [1, 32], strides = [1, 1]} : vector<2x32xf32> to vector<1x32xf32>
    %c0_i32_169 = arith.constant 0 : i32
    %489 = arith.addi %c0_i32_169, %c7_i32_155 : i32
    %490 = arith.index_cast %489 : i32 to index
    %c0_170 = arith.constant 0 : index
    %491 = vector.load %arg14[%490, %c0_170] : memref<16x64xf32, #tpu.memory_space<vmem>>, vector<1x32xf32>
    tpu.vector_store %arg14[%490, %c0_170], %488 {strides = array<i32>} : memref<16x64xf32, #tpu.memory_space<vmem>>, vector<1x32xf32>,
    %492 = vector.extract_strided_slice %487 {offsets = [0, 0], sizes = [1, 32], strides = [1, 1]} : vector<2x32xf32> to vector<1x32xf32>
    %c0_i32_171 = arith.constant 0 : i32
    %493 = arith.addi %c0_i32_171, %443 : i32
    %494 = arith.index_cast %493 : i32 to index
    %c32_172 = arith.constant 32 : index
    %495 = vector.load %arg14[%494, %c32_172] : memref<16x64xf32, #tpu.memory_space<vmem>>, vector<1x32xf32>
    tpu.vector_store %arg14[%494, %c32_172], %492 {strides = array<i32>} : memref<16x64xf32, #tpu.memory_space<vmem>>, vector<1x32xf32>,
    %496 = vector.extract_strided_slice %471 {offsets = [1, 0], sizes = [1, 32], strides = [1, 1]} : vector<2x32xf32> to vector<1x32xf32>
    %c8_i32_173 = arith.constant 8 : i32
    %497 = arith.addi %c8_i32_173, %c7_i32_155 : i32
    %498 = arith.index_cast %497 : i32 to index
    %c0_174 = arith.constant 0 : index
    %499 = vector.load %arg14[%498, %c0_174] : memref<16x64xf32, #tpu.memory_space<vmem>>, vector<1x32xf32>
    tpu.vector_store %arg14[%498, %c0_174], %496 {strides = array<i32>} : memref<16x64xf32, #tpu.memory_space<vmem>>, vector<1x32xf32>,
    %500 = vector.extract_strided_slice %487 {offsets = [1, 0], sizes = [1, 32], strides = [1, 1]} : vector<2x32xf32> to vector<1x32xf32>
    %c8_i32_175 = arith.constant 8 : i32
    %501 = arith.addi %c8_i32_175, %443 : i32
    %502 = arith.index_cast %501 : i32 to index
    %c32_176 = arith.constant 32 : index
    %503 = vector.load %arg14[%502, %c32_176] : memref<16x64xf32, #tpu.memory_space<vmem>>, vector<1x32xf32>
    tpu.vector_store %arg14[%502, %c32_176], %500 {strides = array<i32>} : memref<16x64xf32, #tpu.memory_space<vmem>>, vector<1x32xf32>,
    %c8_i32_177 = arith.constant 8 : i32
    %c0_178 = arith.constant 0 : index
    %c0_179 = arith.constant 0 : index
    %504 = vector.load %arg14[%c0_178, %c0_179] : memref<16x64xf32, #tpu.memory_space<vmem>>, vector<16x64xf32>
    %c0_180 = arith.constant 0 : index
    %c0_181 = arith.constant 0 : index
    %505 = vector.load %arg8[%c0_180, %c0_181] : memref<64x192xf32, #tpu.memory_space<vmem>>, vector<64x192xf32>
    %cst_182 = arith.constant dense<0.000000e+00> : vector<16x192xf32>
    %506 = tpu.matmul %504, %505, %cst_182 {dimension_numbers = #tpu.dot_dimension_numbers<[1], [0], [0], [1], [0, 0, 1, 1], [], []>} : vector<16x64xf32>, vector<64x192xf32>, vector<16x192xf32> -> vector<16x192xf32>
    %c0_183 = arith.constant 0 : index
    %c0_184 = arith.constant 0 : index
    %507 = vector.load %arg9[%c0_183, %c0_184] : memref<1x192xf32, #tpu.memory_space<vmem>>, vector<1x192xf32>
    %508 = vector.broadcast %507 : vector<1x192xf32> to vector<16x192xf32>
    %509 = arith.addf %506, %508 : vector<16x192xf32>
    %510 = vector.extract_strided_slice %509 {offsets = [0, 0], sizes = [8, 64], strides = [1, 1]} : vector<16x192xf32> to vector<8x64xf32>
    %511 = vector.extract_strided_slice %509 {offsets = [0, 64], sizes = [8, 64], strides = [1, 1]} : vector<16x192xf32> to vector<8x64xf32>
    %512 = vector.extract_strided_slice %509 {offsets = [0, 128], sizes = [8, 64], strides = [1, 1]} : vector<16x192xf32> to vector<8x64xf32>
    %cst_185 = arith.constant dense<0.000000e+00> : vector<8x8xf32>
    %513 = tpu.matmul %510, %511, %cst_185 {dimension_numbers = #tpu.dot_dimension_numbers<[1], [1], [0], [0], [0, 0, 1, 0], [], []>} : vector<8x64xf32>, vector<8x64xf32>, vector<8x8xf32> -> vector<8x8xf32>
    %c0_186 = arith.constant 0 : index
    %c0_187 = arith.constant 0 : index
    %514 = vector.load %arg2[%c0_186, %c0_187] : memref<2x8xf32, #tpu.memory_space<vmem>>, vector<1x8xf32>
    %515 = vector.broadcast %514 : vector<1x8xf32> to vector<8x8xf32>
    %516 = arith.addf %513, %515 : vector<8x8xf32>
    %cst_188 = arith.constant dense<0xFF800000> : vector<8xf32>
    %517 = vector.multi_reduction <maximumf>, %516, %cst_188 [1] : vector<8x8xf32> to vector<8xf32>
    %518 = vector.shape_cast %517 : vector<8xf32> to vector<8x1xf32>
    %519 = vector.broadcast %518 : vector<8x1xf32> to vector<8x8xf32>
    %520 = arith.subf %516, %519 : vector<8x8xf32>
    %521 = math.exp %520 : vector<8x8xf32>
    %cst_189 = arith.constant dense<0.000000e+00> : vector<8xf32>
    %522 = vector.multi_reduction <add>, %521, %cst_189 [1] : vector<8x8xf32> to vector<8xf32>
    %523 = vector.shape_cast %522 : vector<8xf32> to vector<8x1xf32>
    %524 = tpu.reciprocal %523 {approx = true} : vector<8x1xf32> -> vector<8x1xf32>
    %525 = vector.broadcast %524 : vector<8x1xf32> to vector<8x8xf32>
    %526 = arith.mulf %521, %525 : vector<8x8xf32>
    %cst_190 = arith.constant dense<0.000000e+00> : vector<8xf32>
    %527 = vector.multi_reduction <add>, %526, %cst_190 [0] : vector<8x8xf32> to vector<8xf32>
    %528 = vector.shape_cast %527 : vector<8xf32> to vector<1x8xf32>
    %cst_191 = arith.constant 1.250000e-01 : f32
    %529 = vector.broadcast %cst_191 : f32 to vector<1x8xf32>
    %530 = arith.mulf %528, %529 : vector<1x8xf32>
    %cst_192 = arith.constant dense<0.000000e+00> : vector<1x64xf32>
    %531 = tpu.matmul %530, %512, %cst_192 {dimension_numbers = #tpu.dot_dimension_numbers<[1], [0], [0], [1], [0, 0, 1, 1], [], []>} : vector<1x8xf32>, vector<8x64xf32>, vector<1x64xf32> -> vector<1x64xf32>
    %c0_193 = arith.constant 0 : index
    %c0_194 = arith.constant 0 : index
    %532 = vector.load %arg15[%c0_193, %c0_194] : memref<2x64xf32, #tpu.memory_space<vmem>>, vector<1x64xf32>
    tpu.vector_store %arg15[%c0_193, %c0_194], %531 {strides = array<i32>} : memref<2x64xf32, #tpu.memory_space<vmem>>, vector<1x64xf32>,
    %533 = vector.extract_strided_slice %509 {offsets = [8, 0], sizes = [8, 64], strides = [1, 1]} : vector<16x192xf32> to vector<8x64xf32>
    %534 = vector.extract_strided_slice %509 {offsets = [8, 64], sizes = [8, 64], strides = [1, 1]} : vector<16x192xf32> to vector<8x64xf32>
    %535 = vector.extract_strided_slice %509 {offsets = [8, 128], sizes = [8, 64], strides = [1, 1]} : vector<16x192xf32> to vector<8x64xf32>
    %cst_195 = arith.constant dense<0.000000e+00> : vector<8x8xf32>
    %536 = tpu.matmul %533, %534, %cst_195 {dimension_numbers = #tpu.dot_dimension_numbers<[1], [1], [0], [0], [0, 0, 1, 0], [], []>} : vector<8x64xf32>, vector<8x64xf32>, vector<8x8xf32> -> vector<8x8xf32>
    %c1 = arith.constant 1 : index
    %c0_196 = arith.constant 0 : index
    %537 = vector.load %arg2[%c1, %c0_196] : memref<2x8xf32, #tpu.memory_space<vmem>>, vector<1x8xf32>
    %538 = vector.broadcast %537 : vector<1x8xf32> to vector<8x8xf32>
    %539 = arith.addf %536, %538 : vector<8x8xf32>
    %cst_197 = arith.constant dense<0xFF800000> : vector<8xf32>
    %540 = vector.multi_reduction <maximumf>, %539, %cst_197 [1] : vector<8x8xf32> to vector<8xf32>
    %541 = vector.shape_cast %540 : vector<8xf32> to vector<8x1xf32>
    %542 = vector.broadcast %541 : vector<8x1xf32> to vector<8x8xf32>
    %543 = arith.subf %539, %542 : vector<8x8xf32>
    %544 = math.exp %543 : vector<8x8xf32>
    %cst_198 = arith.constant dense<0.000000e+00> : vector<8xf32>
    %545 = vector.multi_reduction <add>, %544, %cst_198 [1] : vector<8x8xf32> to vector<8xf32>
    %546 = vector.shape_cast %545 : vector<8xf32> to vector<8x1xf32>
    %547 = tpu.reciprocal %546 {approx = true} : vector<8x1xf32> -> vector<8x1xf32>
    %548 = vector.broadcast %547 : vector<8x1xf32> to vector<8x8xf32>
    %549 = arith.mulf %544, %548 : vector<8x8xf32>
    %cst_199 = arith.constant dense<0.000000e+00> : vector<8xf32>
    %550 = vector.multi_reduction <add>, %549, %cst_199 [0] : vector<8x8xf32> to vector<8xf32>
    %551 = vector.shape_cast %550 : vector<8xf32> to vector<1x8xf32>
    %cst_200 = arith.constant 1.250000e-01 : f32
    %552 = vector.broadcast %cst_200 : f32 to vector<1x8xf32>
    %553 = arith.mulf %551, %552 : vector<1x8xf32>
    %cst_201 = arith.constant dense<0.000000e+00> : vector<1x64xf32>
    %554 = tpu.matmul %553, %535, %cst_201 {dimension_numbers = #tpu.dot_dimension_numbers<[1], [0], [0], [1], [0, 0, 1, 1], [], []>} : vector<1x8xf32>, vector<8x64xf32>, vector<1x64xf32> -> vector<1x64xf32>
    %c1_202 = arith.constant 1 : index
    %c0_203 = arith.constant 0 : index
    %555 = vector.load %arg15[%c1_202, %c0_203] : memref<2x64xf32, #tpu.memory_space<vmem>>, vector<1x64xf32>
    tpu.vector_store %arg15[%c1_202, %c0_203], %554 {strides = array<i32>} : memref<2x64xf32, #tpu.memory_space<vmem>>, vector<1x64xf32>,
    %c0_204 = arith.constant 0 : index
    %c0_205 = arith.constant 0 : index
    %556 = vector.load %arg15[%c0_204, %c0_205] : memref<2x64xf32, #tpu.memory_space<vmem>>, vector<2x64xf32>
    %c0_206 = arith.constant 0 : index
    %c0_207 = arith.constant 0 : index
    %557 = vector.load %arg10[%c0_206, %c0_207] : memref<64x128xf32, #tpu.memory_space<vmem>>, vector<64x128xf32>
    %cst_208 = arith.constant dense<0.000000e+00> : vector<2x128xf32>
    %558 = tpu.matmul %556, %557, %cst_208 {dimension_numbers = #tpu.dot_dimension_numbers<[1], [0], [0], [1], [0, 0, 1, 1], [], []>} : vector<2x64xf32>, vector<64x128xf32>, vector<2x128xf32> -> vector<2x128xf32>
    %c0_209 = arith.constant 0 : index
    %c0_210 = arith.constant 0 : index
    %559 = vector.load %arg11[%c0_209, %c0_210] : memref<1x128xf32, #tpu.memory_space<vmem>>, vector<1x128xf32>
    %560 = vector.broadcast %559 : vector<1x128xf32> to vector<2x128xf32>
    %561 = arith.addf %558, %560 : vector<2x128xf32>
    %c0_211 = arith.constant 0 : index
    %c0_212 = arith.constant 0 : index
    %562 = vector.load %arg12[%c0_211, %c0_212] : memref<2x128xf32, #tpu.memory_space<vmem>>, vector<2x128xf32>
    tpu.vector_store %arg12[%c0_211, %c0_212], %561 {strides = array<i32>} : memref<2x128xf32, #tpu.memory_space<vmem>>, vector<2x128xf32>,
    return
  }
  func.func @transform_0(%arg0: i32) -> (i32, i32) {
    %c0_i32 = arith.constant 0 : i32
    %c0_i32_0 = arith.constant 0 : i32
    %c0_i32_1 = arith.constant 0 : i32
    return %c0_i32, %c0_i32_0 : i32, i32
  }
  func.func @transform_1(%arg0: i32) -> (i32, i32) {
    %c0_i32 = arith.constant 0 : i32
    %c0_i32_0 = arith.constant 0 : i32
    %c0_i32_1 = arith.constant 0 : i32
    return %c0_i32, %c0_i32_0 : i32, i32
  }
  func.func @transform_2(%arg0: i32) -> (i32, i32) {
    %c0_i32 = arith.constant 0 : i32
    %c0_i32_0 = arith.constant 0 : i32
    %c0_i32_1 = arith.constant 0 : i32
    return %c0_i32, %c0_i32_0 : i32, i32
  }
  func.func @transform_3(%arg0: i32) -> (i32, i32) {
    %c0_i32 = arith.constant 0 : i32
    %c0_i32_0 = arith.constant 0 : i32
    %c0_i32_1 = arith.constant 0 : i32
    return %c0_i32, %c0_i32_0 : i32, i32
  }
  func.func @transform_4(%arg0: i32) -> (i32, i32) {
    %c0_i32 = arith.constant 0 : i32
    %c0_i32_0 = arith.constant 0 : i32
    %c0_i32_1 = arith.constant 0 : i32
    return %c0_i32, %c0_i32_0 : i32, i32
  }
  func.func @transform_5(%arg0: i32) -> (i32, i32) {
    %c0_i32 = arith.constant 0 : i32
    %c0_i32_0 = arith.constant 0 : i32
    %c0_i32_1 = arith.constant 0 : i32
    return %c0_i32, %c0_i32_0 : i32, i32
  }
  func.func @transform_6(%arg0: i32) -> (i32, i32) {
    %c0_i32 = arith.constant 0 : i32
    %c0_i32_0 = arith.constant 0 : i32
    %c0_i32_1 = arith.constant 0 : i32
    return %c0_i32, %c0_i32_0 : i32, i32
  }
  func.func @transform_7(%arg0: i32) -> (i32, i32) {
    %c0_i32 = arith.constant 0 : i32
    %c0_i32_0 = arith.constant 0 : i32
    %c0_i32_1 = arith.constant 0 : i32
    return %c0_i32, %c0_i32_0 : i32, i32
  }
  func.func @transform_8(%arg0: i32) -> (i32, i32) {
    %c0_i32 = arith.constant 0 : i32
    %c0_i32_0 = arith.constant 0 : i32
    %c0_i32_1 = arith.constant 0 : i32
    return %c0_i32, %c0_i32_0 : i32, i32
  }
  func.func @transform_9(%arg0: i32) -> (i32, i32) {
    %c0_i32 = arith.constant 0 : i32
    %c0_i32_0 = arith.constant 0 : i32
    %c0_i32_1 = arith.constant 0 : i32
    return %c0_i32, %c0_i32_0 : i32, i32
  }
  func.func @transform_10(%arg0: i32) -> (i32, i32) {
    %c0_i32 = arith.constant 0 : i32
    %c0_i32_0 = arith.constant 0 : i32
    %c0_i32_1 = arith.constant 0 : i32
    return %c0_i32, %c0_i32_0 : i32, i32
  }
  func.func @transform_11(%arg0: i32) -> (i32, i32) {
    %c0_i32 = arith.constant 0 : i32
    %c0_i32_0 = arith.constant 0 : i32
    %c0_i32_1 = arith.constant 0 : i32
    return %c0_i32, %c0_i32_0 : i32, i32
  }
}

</mosaic_0001>

<llo_original>
// kernel: model_forward.1
$region0: #{model_forward.1}
  #allocation0 [shape = 'u32[]', space=smem, size = 0x4, offset = 0x4, fixed_abs, tag = 'smem constant byte address 0x4 - core index']
  #allocation1 [shape = 'u32[144,128]{1,0:T(1,128)}', space=vmem, size = 0x12000, scoped, tag = 'internal scratch']
  #allocation2 [shape = 'f32[16,256]{1,0:T(8,128)}', space=vmem, size = 0x4000, scoped, tag = 'scratch operand']
  #allocation3 [shape = 'f32[16,64]{1,0:T(8,128)}', space=vmem, size = 0x2000, scoped, tag = 'scratch operand']
  #allocation4 [shape = 'f32[2,64]{1,0:T(2,128)}', space=vmem, size = 0x400, scoped, tag = 'scratch operand']
  %s0 = inlined_call_operand.vmem [shape: s32[16,1], index: 0, kind: input, shape index: {}]
  %s1 = inlined_call_operand.vmem [shape: f32[2,8], index: 1, kind: input, shape index: {}]
  %s2 = inlined_call_operand.vmem [shape: f32[50,32], index: 2, kind: input, shape index: {}]
  %s3 = inlined_call_operand.vmem [shape: f32[32,256], index: 3, kind: input, shape index: {}]
  %s4 = inlined_call_operand.vmem [shape: f32[1,256], index: 4, kind: input, shape index: {}]
  %s5 = inlined_call_operand.vmem [shape: f32[32,128], index: 5, kind: input, shape index: {}]
  %s6 = inlined_call_operand.vmem [shape: f32[32,128], index: 6, kind: input, shape index: {}]
  %s7 = inlined_call_operand.vmem [shape: f32[64,192], index: 7, kind: input, shape index: {}]
  %s8 = inlined_call_operand.vmem [shape: f32[1,192], index: 8, kind: input, shape index: {}]
  %s9 = inlined_call_operand.vmem [shape: f32[64,128], index: 9, kind: input, shape index: {}]
  %s10 = inlined_call_operand.vmem [shape: f32[1,128], index: 10, kind: input, shape index: {}]
  %s11 = inlined_call_operand.vmem [shape: f32[2,128], index: 11, kind: output, shape index: {}]
  %s12 = sld [smem:[#allocation0]]
  $region54: #{model_forward.1} parent=0
    _
  %s14 = ssub.s32 1, %s12
  %s15 = scalar_select 0, %s14, %s12
  // Predicated region
  $region2: #{model_forward.1} parent=0 // pred_check
    _
  $region3: #{model_forward.1} parent=0 // pred_check_branch
    %17 = sbr.rel (0) target = $region5
  $region4: #{model_forward.1} parent=0 // pred_region
    _
  $region5: #{model_forward.1} parent=0 // pred_fallthru
    _
  // Predicated region
  $region6: #{model_forward.1} parent=0 // pred_check
    _
  $region7: #{model_forward.1} parent=0 // pred_check_branch
    %19 = sbr.rel (0) target = $region9
  $region8: #{model_forward.1} parent=0 // pred_region
    _
  $region9: #{model_forward.1} parent=0 // pred_fallthru
    _
  // Predicated region
  $region10: #{model_forward.1} parent=0 // pred_check
    _
  $region11: #{model_forward.1} parent=0 // pred_check_branch
    %21 = sbr.rel (0) target = $region13
  $region12: #{model_forward.1} parent=0 // pred_region
    _
  $region13: #{model_forward.1} parent=0 // pred_fallthru
    _
  // Predicated region
  $region14: #{model_forward.1} parent=0 // pred_check
    _
  $region15: #{model_forward.1} parent=0 // pred_check_branch
    %23 = sbr.rel (0) target = $region17
  $region16: #{model_forward.1} parent=0 // pred_region
    _
  $region17: #{model_forward.1} parent=0 // pred_fallthru
    _
  // Predicated region
  $region18: #{model_forward.1} parent=0 // pred_check
    _
  $region19: #{model_forward.1} parent=0 // pred_check_branch
    %25 = sbr.rel (0) target = $region21
  $region20: #{model_forward.1} parent=0 // pred_region
    _
  $region21: #{model_forward.1} parent=0 // pred_fallthru
    _
  // Predicated region
  $region22: #{model_forward.1} parent=0 // pred_check
    _
  $region23: #{model_forward.1} parent=0 // pred_check_branch
    %27 = sbr.rel (0) target = $region25
  $region24: #{model_forward.1} parent=0 // pred_region
    _
  $region25: #{model_forward.1} parent=0 // pred_fallthru
    _
  // Predicated region
  $region26: #{model_forward.1} parent=0 // pred_check
    _
  $region27: #{model_forward.1} parent=0 // pred_check_branch
    %29 = sbr.rel (0) target = $region29
  $region28: #{model_forward.1} parent=0 // pred_region
    _
  $region29: #{model_forward.1} parent=0 // pred_fallthru
    _
  // Predicated region
  $region30: #{model_forward.1} parent=0 // pred_check
    _
  $region31: #{model_forward.1} parent=0 // pred_check_branch
    %31 = sbr.rel (0) target = $region33
  $region32: #{model_forward.1} parent=0 // pred_region
    _
  $region33: #{model_forward.1} parent=0 // pred_fallthru
    _
  // Predicated region
  $region34: #{model_forward.1} parent=0 // pred_check
    _
  $region35: #{model_forward.1} parent=0 // pred_check_branch
    %33 = sbr.rel (0) target = $region37
  $region36: #{model_forward.1} parent=0 // pred_region
    _
  $region37: #{model_forward.1} parent=0 // pred_fallthru
    _
  // Predicated region
  $region38: #{model_forward.1} parent=0 // pred_check
    _
  $region39: #{model_forward.1} parent=0 // pred_check_branch
    %35 = sbr.rel (0) target = $region41
  $region40: #{model_forward.1} parent=0 // pred_region
    _
  $region41: #{model_forward.1} parent=0 // pred_fallthru
    _
  // Predicated region
  $region42: #{model_forward.1} parent=0 // pred_check
    _
  $region43: #{model_forward.1} parent=0 // pred_check_branch
    %37 = sbr.rel (0) target = $region45
  $region44: #{model_forward.1} parent=0 // pred_region
    _
  $region45: #{model_forward.1} parent=0 // pred_fallthru
    _
  %v38 = vld [vmem:[%s0] sm:$0xff]
  %v39 = vld [vmem:[%s0 + $0x8] sm:$0xff]
  %v40 = vlaneseq
  %v41 = vand.u32 %v40, 127
  %42 = vset.pattern.permute.xlu0 0
  %43 = vperm.xlu0 %42, %v38
  %v44 = vpop.permute.xlu0 %43
  %45 = vset.pattern.permute.xlu0 0
  %46 = vperm.xlu0 %45, %v39
  %v47 = vpop.permute.xlu0 %46
  %vm48 = vcmp.eq.s32.totalorder %v41, %v44
  %vm49 = vcmp.eq.s32.totalorder %v41, %v47
  %v50 = vsel %vm48, 1, 0
  %v51 = vsel %vm49, 1, 0
  %v52 = vcvt.s32.f32 %v50
  %v53 = vcvt.s32.f32 %v51
  %v54 = vld [vmem:[%s2] sm:$0xff]
  %v55 = vld [vmem:[%s2 + $0x8] sm:$0xff]
  %v56 = vld [vmem:[%s2 + $0x10] sm:$0xff]
  %v57 = vld [vmem:[%s2 + $0x18] sm:$0xff]
  %v58 = vld [vmem:[%s2 + $0x20] sm:$0xff]
  %v59 = vld [vmem:[%s2 + $0x28] sm:$0xff]
  %v60 = vld [vmem:[%s2 + $0x30] sm:$0x3]
  %vm61 = vcmask 408576
  %v63 = vsel %vm61, %v52, 0
  %v66 = vsel %vm61, %v53, 0
  %vm68 = vcmask 1041408
  %v70 = vsel %vm68, %v60, 0
  %72 = vmatprep.subr.mxu0 0.0
  %73 = vmatpush1.msra.mxu0 %v54
  %74 = vmatprep.subr.mxu0 0.0
  %75 = vmatpush1.msra.mxu0 %v55
  %76 = vmatprep.subr.mxu0 0.0
  %77 = vmatpush1.msra.mxu0 %v56
  %78 = vmatprep.subr.mxu0 0.0
  %79 = vmatpush1.msra.mxu0 %v57
  %80 = vmatprep.subr.mxu0 0.0
  %81 = vmatpush1.msra.mxu0 %v58
  %82 = vmatprep.subr.mxu0 0.0
  %83 = vmatpush1.msra.mxu0 %v59
  %84 = vmatprep.subr.mxu0 0.0
  %85 = vmatpush1.msra.mxu0 %v70
  %86 = vmatprep.subr.mxu0 0.0
  %87 = vmatpush1.msra.mxu0 0.0
  %88 = vmatprep.subr.mxu0 0.0
  %89 = vmatpush1.msra.mxu0 0.0
  %90 = vmatprep.subr.mxu0 0.0
  %91 = vmatpush1.msra.mxu0 0.0
  %92 = vmatprep.subr.mxu0 0.0
  %93 = vmatpush1.msra.mxu0 0.0
  %94 = vmatprep.subr.mxu0 0.0
  %95 = vmatpush1.msra.mxu0 0.0
  %96 = vmatprep.subr.mxu0 0.0
  %97 = vmatpush1.msra.mxu0 0.0
  %98 = vmatprep.subr.mxu0 0.0
  %99 = vmatpush1.msra.mxu0 0.0
  %100 = vmatprep.subr.mxu0 0.0
  %101 = vmatpush1.msra.mxu0 0.0
  %102 = vmatprep.subr.mxu0 0.0
  %103 = vmatpush1.msra.mxu0 0.0
  %104 = vmatprep.subr.mxu0 0.0
  %105 = vmatpush1.msra.mxu0 0.0
  %106 = vmatprep.subr.mxu0 0.0
  %107 = vmatpush1.msra.mxu0 0.0
  %108 = vmatprep.subr.mxu0 0.0
  %109 = vmatpush1.msra.mxu0 0.0
  %110 = vmatprep.subr.mxu0 0.0
  %111 = vmatpush1.msra.mxu0 0.0
  %112 = vmatprep.subr.mxu0 0.0
  %113 = vmatpush1.msra.mxu0 0.0
  %114 = vmatprep.subr.mxu0 0.0
  %115 = vmatpush1.msra.mxu0 0.0
  %116 = vmatprep.subr.mxu0 0.0
  %117 = vmatpush1.msra.mxu0 0.0
  %118 = vmatprep.subr.mxu0 0.0
  %119 = vmatpush1.msra.mxu0 0.0
  %120 = vmatprep.subr.mxu0 0.0
  %121 = vmatpush1.msra.mxu0 0.0
  %122 = vmatprep.subr.mxu0 0.0
  %123 = vmatpush1.msra.mxu0 0.0
  %124 = vmatprep.subr.mxu0 0.0
  %125 = vmatpush1.msra.mxu0 0.0
  %126 = vmatprep.subr.mxu0 0.0
  %127 = vmatpush1.msra.mxu0 0.0
  %128 = vmatprep.subr.mxu0 0.0
  %129 = vmatpush1.msra.mxu0 0.0
  %130 = vmatprep.subr.mxu0 0.0
  %131 = vmatpush1.msra.mxu0 0.0
  %132 = vmatprep.subr.mxu0 0.0
  %133 = vmatpush1.msra.mxu0 0.0
  %134 = vmatprep.subr.mxu0 0.0
  %135 = vmatpush1.msra.mxu0 0.0
  %136 = vmatprep.mubr.f32.mxu0 0.0
  %137 = vmatmul.mubr.f32.gmra.mrb[0].mxu0 %v63
  %v138 = vpop.f32.mrb[0].mxu0
  %v139 = vadd.f32 0.0, %v138
  %v140 = vpop.f32.mrb[0].mxu0
  %141 = vmatprep.mubr.f32.mxu0 0.0
  %142 = vmatmul.mubr.f32.gmra.mrb[0].mxu0 %v66
  %v143 = vpop.f32.mrb[0].mxu0
  %v144 = vadd.f32 0.0, %v143
  %v145 = vpop.f32.mrb[0].mxu0
  %146 = vdwg.mxu0
  %v147 = vld [vmem:[%s3] sm:$0xff]
  %v148 = vld [vmem:[%s3 + $0x8] sm:$0xff]
  %v149 = vld [vmem:[%s3 + $0x10] sm:$0xff]
  %v150 = vld [vmem:[%s3 + $0x18] sm:$0xff]
  %v151 = vld [vmem:[%s3 + $0x20] sm:$0xff]
  %v152 = vld [vmem:[%s3 + $0x28] sm:$0xff]
  %v153 = vld [vmem:[%s3 + $0x30] sm:$0xff]
  %v154 = vld [vmem:[%s3 + $0x38] sm:$0xff]
  %v155 = vld [vmem:[%s4] sm:$0x3]
  %v157 = vlaneseq
  %v158 = vshrl.u32 %v157, 7
  %v159 = vsub.s32 0, %v158
  %v160 = vrot.slane %v155, %v159
  %v161 = vlaneseq
  %v162 = vshrl.u32 %v161, 7
  %v163 = vsub.s32 1, %v162
  %v164 = vrot.slane %v155, %v163
  %vm167 = vcmask 261120
  %v169 = vsel %vm167, %v139, 0
  %v172 = vsel %vm167, %v144, 0
  %174 = vmatprep.subr.mxu0 %v148
  %175 = vmatpush1.msra.mxu0 %v147
  %176 = vmatprep.subr.mxu0 %v150
  %177 = vmatpush1.msra.mxu0 %v149
  %178 = vmatprep.subr.mxu0 %v152
  %179 = vmatpush1.msra.mxu0 %v151
  %180 = vmatprep.subr.mxu0 %v154
  %181 = vmatpush1.msra.mxu0 %v153
  %182 = vmatprep.subr.mxu0 0.0
  %183 = vmatpush1.msra.mxu0 0.0
  %184 = vmatprep.subr.mxu0 0.0
  %185 = vmatpush1.msra.mxu0 0.0
  %186 = vmatprep.subr.mxu0 0.0
  %187 = vmatpush1.msra.mxu0 0.0
  %188 = vmatprep.subr.mxu0 0.0
  %189 = vmatpush1.msra.mxu0 0.0
  %190 = vmatprep.subr.mxu0 0.0
  %191 = vmatpush1.msra.mxu0 0.0
  %192 = vmatprep.subr.mxu0 0.0
  %193 = vmatpush1.msra.mxu0 0.0
  %194 = vmatprep.subr.mxu0 0.0
  %195 = vmatpush1.msra.mxu0 0.0
  %196 = vmatprep.subr.mxu0 0.0
  %197 = vmatpush1.msra.mxu0 0.0
  %198 = vmatprep.subr.mxu0 0.0
  %199 = vmatpush1.msra.mxu0 0.0
  %200 = vmatprep.subr.mxu0 0.0
  %201 = vmatpush1.msra.mxu0 0.0
  %202 = vmatprep.subr.mxu0 0.0
  %203 = vmatpush1.msra.mxu0 0.0
  %204 = vmatprep.subr.mxu0 0.0
  %205 = vmatpush1.msra.mxu0 0.0
  %206 = vmatprep.subr.mxu0 0.0
  %207 = vmatpush1.msra.mxu0 0.0
  %208 = vmatprep.subr.mxu0 0.0
  %209 = vmatpush1.msra.mxu0 0.0
  %210 = vmatprep.subr.mxu0 0.0
  %211 = vmatpush1.msra.mxu0 0.0
  %212 = vmatprep.subr.mxu0 0.0
  %213 = vmatpush1.msra.mxu0 0.0
  %214 = vmatprep.subr.mxu0 0.0
  %215 = vmatpush1.msra.mxu0 0.0
  %216 = vmatprep.subr.mxu0 0.0
  %217 = vmatpush1.msra.mxu0 0.0
  %218 = vmatprep.subr.mxu0 0.0
  %219 = vmatpush1.msra.mxu0 0.0
  %220 = vmatprep.subr.mxu0 0.0
  %221 = vmatpush1.msra.mxu0 0.0
  %222 = vmatprep.subr.mxu0 0.0
  %223 = vmatpush1.msra.mxu0 0.0
  %224 = vmatprep.subr.mxu0 0.0
  %225 = vmatpush1.msra.mxu0 0.0
  %226 = vmatprep.subr.mxu0 0.0
  %227 = vmatpush1.msra.mxu0 0.0
  %228 = vmatprep.subr.mxu0 0.0
  %229 = vmatpush1.msra.mxu0 0.0
  %230 = vmatprep.subr.mxu0 0.0
  %231 = vmatpush1.msra.mxu0 0.0
  %232 = vmatprep.subr.mxu0 0.0
  %233 = vmatpush1.msra.mxu0 0.0
  %234 = vmatprep.subr.mxu0 0.0
  %235 = vmatpush1.msra.mxu0 0.0
  %236 = vmatprep.subr.mxu0 0.0
  %237 = vmatpush1.msra.mxu0 0.0
  %238 = vmatprep.mubr.f32.mxu0 0.0
  %239 = vmatmul.mubr.f32.gmra.mrb[0].mxu0 %v169
  %v240 = vpop.f32.mrb[0].mxu0
  %v241 = vadd.f32 %v160, %v240
  %v242 = vpop.f32.mrb[0].mxu0
  %v243 = vadd.f32 %v164, %v242
  %244 = vmatprep.mubr.f32.mxu0 0.0
  %245 = vmatmul.mubr.f32.gmra.mrb[0].mxu0 %v172
  %v246 = vpop.f32.mrb[0].mxu0
  %v247 = vadd.f32 %v160, %v246
  %v248 = vpop.f32.mrb[0].mxu0
  %v249 = vadd.f32 %v164, %v248
  %250 = vdwg.mxu0
  %251 = vst [vmem:[#allocation2] sm:$0xff] %v241
  %252 = vst [vmem:[#allocation2 + $0x8] sm:$0xff] %v243
  %253 = vst [vmem:[#allocation2 + $0x10] sm:$0xff] %v247
  %254 = vst [vmem:[#allocation2 + $0x18] sm:$0xff] %v249
  %v255 = vld [vmem:[#allocation2] sm:$0x3]
  %v256 = vld [vmem:[%s5] sm:$0xff]
  %v257 = vld [vmem:[%s5 + $0x8] sm:$0xff]
  %v258 = vld [vmem:[%s5 + $0x10] sm:$0xff]
  %v259 = vld [vmem:[%s5 + $0x18] sm:$0xff]
  %v261 = vsel %vm167, 0.0, 0
  %263 = vmatprep.subr.mxu0 0.0
  %264 = vmatpush1.msra.mxu0 %v256
  %265 = vmatprep.subr.mxu0 0.0
  %266 = vmatpush1.msra.mxu0 %v257
  %267 = vmatprep.subr.mxu0 0.0
  %268 = vmatpush1.msra.mxu0 %v258
  %269 = vmatprep.subr.mxu0 0.0
  %270 = vmatpush1.msra.mxu0 %v259
  %271 = vmatprep.subr.mxu0 0.0
  %272 = vmatpush1.msra.mxu0 0.0
  %273 = vmatprep.subr.mxu0 0.0
  %274 = vmatpush1.msra.mxu0 0.0
  %275 = vmatprep.subr.mxu0 0.0
  %276 = vmatpush1.msra.mxu0 0.0
  %277 = vmatprep.subr.mxu0 0.0
  %278 = vmatpush1.msra.mxu0 0.0
  %279 = vmatprep.subr.mxu0 0.0
  %280 = vmatpush1.msra.mxu0 0.0
  %281 = vmatprep.subr.mxu0 0.0
  %282 = vmatpush1.msra.mxu0 0.0
  %283 = vmatprep.subr.mxu0 0.0
  %284 = vmatpush1.msra.mxu0 0.0
  %285 = vmatprep.subr.mxu0 0.0
  %286 = vmatpush1.msra.mxu0 0.0
  %287 = vmatprep.subr.mxu0 0.0
  %288 = vmatpush1.msra.mxu0 0.0
  %289 = vmatprep.subr.mxu0 0.0
  %290 = vmatpush1.msra.mxu0 0.0
  %291 = vmatprep.subr.mxu0 0.0
  %292 = vmatpush1.msra.mxu0 0.0
  %293 = vmatprep.subr.mxu0 0.0
  %294 = vmatpush1.msra.mxu0 0.0
  %295 = vmatprep.subr.mxu0 0.0
  %296 = vmatpush1.msra.mxu0 0.0
  %297 = vmatprep.subr.mxu0 0.0
  %298 = vmatpush1.msra.mxu0 0.0
  %299 = vmatprep.subr.mxu0 0.0
  %300 = vmatpush1.msra.mxu0 0.0
  %301 = vmatprep.subr.mxu0 0.0
  %302 = vmatpush1.msra.mxu0 0.0
  %303 = vmatprep.subr.mxu0 0.0
  %304 = vmatpush1.msra.mxu0 0.0
  %305 = vmatprep.subr.mxu0 0.0
  %306 = vmatpush1.msra.mxu0 0.0
  %307 = vmatprep.subr.mxu0 0.0
  %308 = vmatpush1.msra.mxu0 0.0
  %309 = vmatprep.subr.mxu0 0.0
  %310 = vmatpush1.msra.mxu0 0.0
  %311 = vmatprep.subr.mxu0 0.0
  %312 = vmatpush1.msra.mxu0 0.0
  %313 = vmatprep.subr.mxu0 0.0
  %314 = vmatpush1.msra.mxu0 0.0
  %315 = vmatprep.subr.mxu0 0.0
  %316 = vmatpush1.msra.mxu0 0.0
  %317 = vmatprep.subr.mxu0 0.0
  %318 = vmatpush1.msra.mxu0 0.0
  %319 = vmatprep.subr.mxu0 0.0
  %320 = vmatpush1.msra.mxu0 0.0
  %321 = vmatprep.subr.mxu0 0.0
  %322 = vmatpush1.msra.mxu0 0.0
  %323 = vmatprep.subr.mxu0 0.0
  %324 = vmatpush1.msra.mxu0 0.0
  %325 = vmatprep.subr.mxu0 0.0
  %326 = vmatpush1.msra.mxu0 0.0
  %327 = vmatprep.mubr.f32.mxu0 0.0
  %328 = vmatmul.mubr.f32.gmra.mrb[0].mxu0 %v261
  %v329 = vpop.f32.mrb[0].mxu0
  %v330 = vadd.f32 0.0, %v329
  %v331 = vpop.f32.mrb[0].mxu0
  %332 = vdwg.mxu0
  %v333 = vadd.f32 %v255, %v330
  %v334 = vld [vmem:[#allocation2 + $0x18] sm:$0xc0]
  %v335 = vld [vmem:[%s6] sm:$0xff]
  %v336 = vld [vmem:[%s6 + $0x8] sm:$0xff]
  %v337 = vld [vmem:[%s6 + $0x10] sm:$0xff]
  %v338 = vld [vmem:[%s6 + $0x18] sm:$0xff]
  %339 = vmatprep.subr.mxu0 0.0
  %340 = vmatpush1.msra.mxu0 %v335
  %341 = vmatprep.subr.mxu0 0.0
  %342 = vmatpush1.msra.mxu0 %v336
  %343 = vmatprep.subr.mxu0 0.0
  %344 = vmatpush1.msra.mxu0 %v337
  %345 = vmatprep.subr.mxu0 0.0
  %346 = vmatpush1.msra.mxu0 %v338
  %347 = vmatprep.subr.mxu0 0.0
  %348 = vmatpush1.msra.mxu0 0.0
  %349 = vmatprep.subr.mxu0 0.0
  %350 = vmatpush1.msra.mxu0 0.0
  %351 = vmatprep.subr.mxu0 0.0
  %352 = vmatpush1.msra.mxu0 0.0
  %353 = vmatprep.subr.mxu0 0.0
  %354 = vmatpush1.msra.mxu0 0.0
  %355 = vmatprep.subr.mxu0 0.0
  %356 = vmatpush1.msra.mxu0 0.0
  %357 = vmatprep.subr.mxu0 0.0
  %358 = vmatpush1.msra.mxu0 0.0
  %359 = vmatprep.subr.mxu0 0.0
  %360 = vmatpush1.msra.mxu0 0.0
  %361 = vmatprep.subr.mxu0 0.0
  %362 = vmatpush1.msra.mxu0 0.0
  %363 = vmatprep.subr.mxu0 0.0
  %364 = vmatpush1.msra.mxu0 0.0
  %365 = vmatprep.subr.mxu0 0.0
  %366 = vmatpush1.msra.mxu0 0.0
  %367 = vmatprep.subr.mxu0 0.0
  %368 = vmatpush1.msra.mxu0 0.0
  %369 = vmatprep.subr.mxu0 0.0
  %370 = vmatpush1.msra.mxu0 0.0
  %371 = vmatprep.subr.mxu0 0.0
  %372 = vmatpush1.msra.mxu0 0.0
  %373 = vmatprep.subr.mxu0 0.0
  %374 = vmatpush1.msra.mxu0 0.0
  %375 = vmatprep.subr.mxu0 0.0
  %376 = vmatpush1.msra.mxu0 0.0
  %377 = vmatprep.subr.mxu0 0.0
  %378 = vmatpush1.msra.mxu0 0.0
  %379 = vmatprep.subr.mxu0 0.0
  %380 = vmatpush1.msra.mxu0 0.0
  %381 = vmatprep.subr.mxu0 0.0
  %382 = vmatpush1.msra.mxu0 0.0
  %383 = vmatprep.subr.mxu0 0.0
  %384 = vmatpush1.msra.mxu0 0.0
  %385 = vmatprep.subr.mxu0 0.0
  %386 = vmatpush1.msra.mxu0 0.0
  %387 = vmatprep.subr.mxu0 0.0
  %388 = vmatpush1.msra.mxu0 0.0
  %389 = vmatprep.subr.mxu0 0.0
  %390 = vmatpush1.msra.mxu0 0.0
  %391 = vmatprep.subr.mxu0 0.0
  %392 = vmatpush1.msra.mxu0 0.0
  %393 = vmatprep.subr.mxu0 0.0
  %394 = vmatpush1.msra.mxu0 0.0
  %395 = vmatprep.subr.mxu0 0.0
  %396 = vmatpush1.msra.mxu0 0.0
  %397 = vmatprep.subr.mxu0 0.0
  %398 = vmatpush1.msra.mxu0 0.0
  %399 = vmatprep.subr.mxu0 0.0
  %400 = vmatpush1.msra.mxu0 0.0
  %401 = vmatprep.subr.mxu0 0.0
  %402 = vmatpush1.msra.mxu0 0.0
  %403 = vmatprep.mubr.f32.mxu0 0.0
  %404 = vmatmul.mubr.f32.gmra.mrb[0].mxu0 %v261
  %v405 = vpop.f32.mrb[0].mxu0
  %v406 = vadd.f32 0.0, %v405
  %v407 = vpop.f32.mrb[0].mxu0
  %408 = vdwg.mxu0
  %v410 = vrot.slane %v406, 2
  %v412 = vadd.f32 %v334, %v410
  %v413 = vxor.u32 %v333, 2147483648
  %v414 = vmul.f32 %v413, 1.442695
  %v415 = vpow.pop %v414
  %v416 = vadd.f32 %v415, 1.0
  %v417 = vrcp.pop %v416
  %v418 = vmul.f32 1.0, %v417
  %v419 = vtanh.pop %v333
  %v420 = vmul.f32 %v418, 0.0
  %422 = vrot.lane.b32.xlu0 %v419, 32
  %v423 = vpop.permute.xlu0 %422
  %v425 = vmul.f32 %v418, %v423
  %427 = vrot.lane.b32.xlu0 %v425, 32
  %v428 = vpop.permute.xlu0 %427
  %v430 = vadd.f32 %v420, %v428
  %v431 = vtanh.pop %v430
  %433 = vrot.lane.b32.xlu0 %v431, 32
  %v434 = vpop.permute.xlu0 %433
  %v436 = vmul.f32 %v418, %v434
  %v437 = vxor.u32 %v412, 2147483648
  %v438 = vmul.f32 %v437, 1.442695
  %v439 = vpow.pop %v438
  %v440 = vadd.f32 %v439, 1.0
  %v441 = vrcp.pop %v440
  %v442 = vmul.f32 1.0, %v441
  %v443 = vtanh.pop %v412
  %v444 = vmul.f32 %v442, 0.0
  %446 = vrot.lane.b32.xlu0 %v443, 32
  %v447 = vpop.permute.xlu0 %446
  %v449 = vmul.f32 %v442, %v447
  %451 = vrot.lane.b32.xlu0 %v449, 32
  %v452 = vpop.permute.xlu0 %451
  %v454 = vadd.f32 %v444, %v452
  %v455 = vtanh.pop %v454
  %457 = vrot.lane.b32.xlu0 %v455, 32
  %v458 = vpop.permute.xlu0 %457
  %v460 = vmul.f32 %v442, %v458
  %462 = vrot.lane.b32.xlu0 %v436, 64
  %v463 = vpop.permute.xlu0 %462
  %vm465 = vcmask 253952
  %466 = vst.msk [vmem:[#allocation3] sm:$0x1] %vm465, %v463
  %468 = vrot.lane.b32.xlu0 %v460, 96
  %v469 = vpop.permute.xlu0 %468
  %vm471 = vcmask 522502
  %472 = vst.msk [vmem:[#allocation3 + $0x1] sm:$0x40] %vm471, %v469
  %vm473 = vcmask 254977
  %474 = vst.msk [vmem:[#allocation3 + $0x7] sm:$0x2] %vm473, %v463
  %vm475 = vcmask 523527
  %476 = vst.msk [vmem:[#allocation3 + $0x8] sm:$0x80] %vm475, %v469
  %v477 = vld [vmem:[#allocation2] sm:$0xc]
  %v478 = vld [vmem:[%s5] sm:$0xff]
  %v479 = vld [vmem:[%s5 + $0x8] sm:$0xff]
  %v480 = vld [vmem:[%s5 + $0x10] sm:$0xff]
  %v481 = vld [vmem:[%s5 + $0x18] sm:$0xff]
  %v482 = vsel %vm167, %v463, 0
  %484 = vmatprep.subr.mxu0 0.0
  %485 = vmatpush1.msra.mxu0 %v478
  %486 = vmatprep.subr.mxu0 0.0
  %487 = vmatpush1.msra.mxu0 %v479
  %488 = vmatprep.subr.mxu0 0.0
  %489 = vmatpush1.msra.mxu0 %v480
  %490 = vmatprep.subr.mxu0 0.0
  %491 = vmatpush1.msra.mxu0 %v481
  %492 = vmatprep.subr.mxu0 0.0
  %493 = vmatpush1.msra.mxu0 0.0
  %494 = vmatprep.subr.mxu0 0.0
  %495 = vmatpush1.msra.mxu0 0.0
  %496 = vmatprep.subr.mxu0 0.0
  %497 = vmatpush1.msra.mxu0 0.0
  %498 = vmatprep.subr.mxu0 0.0
  %499 = vmatpush1.msra.mxu0 0.0
  %500 = vmatprep.subr.mxu0 0.0
  %501 = vmatpush1.msra.mxu0 0.0
  %502 = vmatprep.subr.mxu0 0.0
  %503 = vmatpush1.msra.mxu0 0.0
  %504 = vmatprep.subr.mxu0 0.0
  %505 = vmatpush1.msra.mxu0 0.0
  %506 = vmatprep.subr.mxu0 0.0
  %507 = vmatpush1.msra.mxu0 0.0
  %508 = vmatprep.subr.mxu0 0.0
  %509 = vmatpush1.msra.mxu0 0.0
  %510 = vmatprep.subr.mxu0 0.0
  %511 = vmatpush1.msra.mxu0 0.0
  %512 = vmatprep.subr.mxu0 0.0
  %513 = vmatpush1.msra.mxu0 0.0
  %514 = vmatprep.subr.mxu0 0.0
  %515 = vmatpush1.msra.mxu0 0.0
  %516 = vmatprep.subr.mxu0 0.0
  %517 = vmatpush1.msra.mxu0 0.0
  %518 = vmatprep.subr.mxu0 0.0
  %519 = vmatpush1.msra.mxu0 0.0
  %520 = vmatprep.subr.mxu0 0.0
  %521 = vmatpush1.msra.mxu0 0.0
  %522 = vmatprep.subr.mxu0 0.0
  %523 = vmatpush1.msra.mxu0 0.0
  %524 = vmatprep.subr.mxu0 0.0
  %525 = vmatpush1.msra.mxu0 0.0
  %526 = vmatprep.subr.mxu0 0.0
  %527 = vmatpush1.msra.mxu0 0.0
  %528 = vmatprep.subr.mxu0 0.0
  %529 = vmatpush1.msra.mxu0 0.0
  %530 = vmatprep.subr.mxu0 0.0
  %531 = vmatpush1.msra.mxu0 0.0
  %532 = vmatprep.subr.mxu0 0.0
  %533 = vmatpush1.msra.mxu0 0.0
  %534 = vmatprep.subr.mxu0 0.0
  %535 = vmatpush1.msra.mxu0 0.0
  %536 = vmatprep.subr.mxu0 0.0
  %537 = vmatpush1.msra.mxu0 0.0
  %538 = vmatprep.subr.mxu0 0.0
  %539 = vmatpush1.msra.mxu0 0.0
  %540 = vmatprep.subr.mxu0 0.0
  %541 = vmatpush1.msra.mxu0 0.0
  %542 = vmatprep.subr.mxu0 0.0
  %543 = vmatpush1.msra.mxu0 0.0
  %544 = vmatprep.subr.mxu0 0.0
  %545 = vmatpush1.msra.mxu0 0.0
  %546 = vmatprep.subr.mxu0 0.0
  %547 = vmatpush1.msra.mxu0 0.0
  %548 = vmatprep.mubr.f32.mxu0 0.0
  %549 = vmatmul.mubr.f32.gmra.mrb[0].mxu0 %v482
  %v550 = vpop.f32.mrb[0].mxu0
  %v551 = vadd.f32 0.0, %v550
  %v552 = vpop.f32.mrb[0].mxu0
  %553 = vdwg.mxu0
  %v555 = vrot.slane %v551, 6
  %v557 = vadd.f32 %v477, %v555
  %v558 = vld [vmem:[#allocation2 + $0x18] sm:$0x30]
  %v559 = vld [vmem:[%s6] sm:$0xff]
  %v560 = vld [vmem:[%s6 + $0x8] sm:$0xff]
  %v561 = vld [vmem:[%s6 + $0x10] sm:$0xff]
  %v562 = vld [vmem:[%s6 + $0x18] sm:$0xff]
  %v563 = vrot.slane %v460, 6
  %564 = vrot.lane.b32.xlu0 %v563, 64
  %v565 = vpop.permute.xlu0 %564
  %v566 = vsel %vm167, %v565, 0
  %568 = vmatprep.subr.mxu0 0.0
  %569 = vmatpush1.msra.mxu0 %v559
  %570 = vmatprep.subr.mxu0 0.0
  %571 = vmatpush1.msra.mxu0 %v560
  %572 = vmatprep.subr.mxu0 0.0
  %573 = vmatpush1.msra.mxu0 %v561
  %574 = vmatprep.subr.mxu0 0.0
  %575 = vmatpush1.msra.mxu0 %v562
  %576 = vmatprep.subr.mxu0 0.0
  %577 = vmatpush1.msra.mxu0 0.0
  %578 = vmatprep.subr.mxu0 0.0
  %579 = vmatpush1.msra.mxu0 0.0
  %580 = vmatprep.subr.mxu0 0.0
  %581 = vmatpush1.msra.mxu0 0.0
  %582 = vmatprep.subr.mxu0 0.0
  %583 = vmatpush1.msra.mxu0 0.0
  %584 = vmatprep.subr.mxu0 0.0
  %585 = vmatpush1.msra.mxu0 0.0
  %586 = vmatprep.subr.mxu0 0.0
  %587 = vmatpush1.msra.mxu0 0.0
  %588 = vmatprep.subr.mxu0 0.0
  %589 = vmatpush1.msra.mxu0 0.0
  %590 = vmatprep.subr.mxu0 0.0
  %591 = vmatpush1.msra.mxu0 0.0
  %592 = vmatprep.subr.mxu0 0.0
  %593 = vmatpush1.msra.mxu0 0.0
  %594 = vmatprep.subr.mxu0 0.0
  %595 = vmatpush1.msra.mxu0 0.0
  %596 = vmatprep.subr.mxu0 0.0
  %597 = vmatpush1.msra.mxu0 0.0
  %598 = vmatprep.subr.mxu0 0.0
  %599 = vmatpush1.msra.mxu0 0.0
  %600 = vmatprep.subr.mxu0 0.0
  %601 = vmatpush1.msra.mxu0 0.0
  %602 = vmatprep.subr.mxu0 0.0
  %603 = vmatpush1.msra.mxu0 0.0
  %604 = vmatprep.subr.mxu0 0.0
  %605 = vmatpush1.msra.mxu0 0.0
  %606 = vmatprep.subr.mxu0 0.0
  %607 = vmatpush1.msra.mxu0 0.0
  %608 = vmatprep.subr.mxu0 0.0
  %609 = vmatpush1.msra.mxu0 0.0
  %610 = vmatprep.subr.mxu0 0.0
  %611 = vmatpush1.msra.mxu0 0.0
  %612 = vmatprep.subr.mxu0 0.0
  %613 = vmatpush1.msra.mxu0 0.0
  %614 = vmatprep.subr.mxu0 0.0
  %615 = vmatpush1.msra.mxu0 0.0
  %616 = vmatprep.subr.mxu0 0.0
  %617 = vmatpush1.msra.mxu0 0.0
  %618 = vmatprep.subr.mxu0 0.0
  %619 = vmatpush1.msra.mxu0 0.0
  %620 = vmatprep.subr.mxu0 0.0
  %621 = vmatpush1.msra.mxu0 0.0
  %622 = vmatprep.subr.mxu0 0.0
  %623 = vmatpush1.msra.mxu0 0.0
  %624 = vmatprep.subr.mxu0 0.0
  %625 = vmatpush1.msra.mxu0 0.0
  %626 = vmatprep.subr.mxu0 0.0
  %627 = vmatpush1.msra.mxu0 0.0
  %628 = vmatprep.subr.mxu0 0.0
  %629 = vmatpush1.msra.mxu0 0.0
  %630 = vmatprep.subr.mxu0 0.0
  %631 = vmatpush1.msra.mxu0 0.0
  %632 = vmatprep.mubr.f32.mxu0 0.0
  %633 = vmatmul.mubr.f32.gmra.mrb[0].mxu0 %v566
  %v634 = vpop.f32.mrb[0].mxu0
  %v635 = vadd.f32 0.0, %v634
  %v636 = vpop.f32.mrb[0].mxu0
  %637 = vdwg.mxu0
  %v639 = vrot.slane %v635, 4
  %v641 = vadd.f32 %v558, %v639
  %v642 = vxor.u32 %v557, 2147483648
  %v643 = vmul.f32 %v642, 1.442695
  %v644 = vpow.pop %v643
  %v645 = vadd.f32 %v644, 1.0
  %v646 = vrcp.pop %v645
  %v647 = vmul.f32 1.0, %v646
  %v648 = vtanh.pop %v557
  %v650 = vrot.slane %v430, 6
  %v652 = vmul.f32 %v647, %v650
  %654 = vrot.lane.b32.xlu0 %v648, 32
  %v655 = vpop.permute.xlu0 %654
  %v657 = vmul.f32 %v647, %v655
  %659 = vrot.lane.b32.xlu0 %v657, 32
  %v660 = vpop.permute.xlu0 %659
  %v662 = vadd.f32 %v652, %v660
  %v663 = vtanh.pop %v662
  %665 = vrot.lane.b32.xlu0 %v663, 32
  %v666 = vpop.permute.xlu0 %665
  %v668 = vmul.f32 %v647, %v666
  %v669 = vxor.u32 %v641, 2147483648
  %v670 = vmul.f32 %v669, 1.442695
  %v671 = vpow.pop %v670
  %v672 = vadd.f32 %v671, 1.0
  %v673 = vrcp.pop %v672
  %v674 = vmul.f32 1.0, %v673
  %v675 = vtanh.pop %v641
  %v677 = vrot.slane %v454, 2
  %v679 = vmul.f32 %v674, %v677
  %681 = vrot.lane.b32.xlu0 %v675, 32
  %v682 = vpop.permute.xlu0 %681
  %v684 = vmul.f32 %v674, %v682
  %686 = vrot.lane.b32.xlu0 %v684, 32
  %v687 = vpop.permute.xlu0 %686
  %v689 = vadd.f32 %v679, %v687
  %v690 = vtanh.pop %v689
  %692 = vrot.lane.b32.xlu0 %v690, 32
  %v693 = vpop.permute.xlu0 %692
  %v695 = vmul.f32 %v674, %v693
  %697 = vrot.lane.b32.xlu0 %v668, 64
  %v698 = vpop.permute.xlu0 %697
  %vm700 = vcmask 256002
  %701 = vst.msk [vmem:[#allocation3 - $0x1] sm:$0x4] %vm700, %v698
  %703 = vrot.lane.b32.xlu0 %v695, 96
  %v704 = vpop.permute.xlu0 %703
  %vm706 = vcmask 520452
  %707 = vst.msk [vmem:[#allocation3 + $0x2] sm:$0x10] %vm706, %v704
  %vm708 = vcmask 257027
  %709 = vst.msk [vmem:[#allocation3 + $0x6] sm:$0x8] %vm708, %v698
  %vm710 = vcmask 521477
  %711 = vst.msk [vmem:[#allocation3 + $0x9] sm:$0x20] %vm710, %v704
  %v712 = vld [vmem:[#allocation2] sm:$0x30]
  %v713 = vld [vmem:[%s5] sm:$0xff]
  %v714 = vld [vmem:[%s5 + $0x8] sm:$0xff]
  %v715 = vld [vmem:[%s5 + $0x10] sm:$0xff]
  %v716 = vld [vmem:[%s5 + $0x18] sm:$0xff]
  %v717 = vrot.slane %v668, 2
  %718 = vrot.lane.b32.xlu0 %v717, 64
  %v719 = vpop.permute.xlu0 %718
  %v720 = vsel %vm167, %v719, 0
  %722 = vmatprep.subr.mxu0 0.0
  %723 = vmatpush1.msra.mxu0 %v713
  %724 = vmatprep.subr.mxu0 0.0
  %725 = vmatpush1.msra.mxu0 %v714
  %726 = vmatprep.subr.mxu0 0.0
  %727 = vmatpush1.msra.mxu0 %v715
  %728 = vmatprep.subr.mxu0 0.0
  %729 = vmatpush1.msra.mxu0 %v716
  %730 = vmatprep.subr.mxu0 0.0
  %731 = vmatpush1.msra.mxu0 0.0
  %732 = vmatprep.subr.mxu0 0.0
  %733 = vmatpush1.msra.mxu0 0.0
  %734 = vmatprep.subr.mxu0 0.0
  %735 = vmatpush1.msra.mxu0 0.0
  %736 = vmatprep.subr.mxu0 0.0
  %737 = vmatpush1.msra.mxu0 0.0
  %738 = vmatprep.subr.mxu0 0.0
  %739 = vmatpush1.msra.mxu0 0.0
  %740 = vmatprep.subr.mxu0 0.0
  %741 = vmatpush1.msra.mxu0 0.0
  %742 = vmatprep.subr.mxu0 0.0
  %743 = vmatpush1.msra.mxu0 0.0
  %744 = vmatprep.subr.mxu0 0.0
  %745 = vmatpush1.msra.mxu0 0.0
  %746 = vmatprep.subr.mxu0 0.0
  %747 = vmatpush1.msra.mxu0 0.0
  %748 = vmatprep.subr.mxu0 0.0
  %749 = vmatpush1.msra.mxu0 0.0
  %750 = vmatprep.subr.mxu0 0.0
  %751 = vmatpush1.msra.mxu0 0.0
  %752 = vmatprep.subr.mxu0 0.0
  %753 = vmatpush1.msra.mxu0 0.0
  %754 = vmatprep.subr.mxu0 0.0
  %755 = vmatpush1.msra.mxu0 0.0
  %756 = vmatprep.subr.mxu0 0.0
  %757 = vmatpush1.msra.mxu0 0.0
  %758 = vmatprep.subr.mxu0 0.0
  %759 = vmatpush1.msra.mxu0 0.0
  %760 = vmatprep.subr.mxu0 0.0
  %761 = vmatpush1.msra.mxu0 0.0
  %762 = vmatprep.subr.mxu0 0.0
  %763 = vmatpush1.msra.mxu0 0.0
  %764 = vmatprep.subr.mxu0 0.0
  %765 = vmatpush1.msra.mxu0 0.0
  %766 = vmatprep.subr.mxu0 0.0
  %767 = vmatpush1.msra.mxu0 0.0
  %768 = vmatprep.subr.mxu0 0.0
  %769 = vmatpush1.msra.mxu0 0.0
  %770 = vmatprep.subr.mxu0 0.0
  %771 = vmatpush1.msra.mxu0 0.0
  %772 = vmatprep.subr.mxu0 0.0
  %773 = vmatpush1.msra.mxu0 0.0
  %774 = vmatprep.subr.mxu0 0.0
  %775 = vmatpush1.msra.mxu0 0.0
  %776 = vmatprep.subr.mxu0 0.0
  %777 = vmatpush1.msra.mxu0 0.0
  %778 = vmatprep.subr.mxu0 0.0
  %779 = vmatpush1.msra.mxu0 0.0
  %780 = vmatprep.subr.mxu0 0.0
  %781 = vmatpush1.msra.mxu0 0.0
  %782 = vmatprep.subr.mxu0 0.0
  %783 = vmatpush1.msra.mxu0 0.0
  %784 = vmatprep.subr.mxu0 0.0
  %785 = vmatpush1.msra.mxu0 0.0
  %786 = vmatprep.mubr.f32.mxu0 0.0
  %787 = vmatmul.mubr.f32.gmra.mrb[0].mxu0 %v720
  %v788 = vpop.f32.mrb[0].mxu0
  %v789 = vadd.f32 0.0, %v788
  %v790 = vpop.f32.mrb[0].mxu0
  %791 = vdwg.mxu0
  %v793 = vrot.slane %v789, 4
  %v795 = vadd.f32 %v712, %v793
  %v796 = vld [vmem:[#allocation2 + $0x18] sm:$0xc]
  %v797 = vld [vmem:[%s6] sm:$0xff]
  %v798 = vld [vmem:[%s6 + $0x8] sm:$0xff]
  %v799 = vld [vmem:[%s6 + $0x10] sm:$0xff]
  %v800 = vld [vmem:[%s6 + $0x18] sm:$0xff]
  %v801 = vrot.slane %v695, 4
  %802 = vrot.lane.b32.xlu0 %v801, 64
  %v803 = vpop.permute.xlu0 %802
  %v804 = vsel %vm167, %v803, 0
  %806 = vmatprep.subr.mxu0 0.0
  %807 = vmatpush1.msra.mxu0 %v797
  %808 = vmatprep.subr.mxu0 0.0
  %809 = vmatpush1.msra.mxu0 %v798
  %810 = vmatprep.subr.mxu0 0.0
  %811 = vmatpush1.msra.mxu0 %v799
  %812 = vmatprep.subr.mxu0 0.0
  %813 = vmatpush1.msra.mxu0 %v800
  %814 = vmatprep.subr.mxu0 0.0
  %815 = vmatpush1.msra.mxu0 0.0
  %816 = vmatprep.subr.mxu0 0.0
  %817 = vmatpush1.msra.mxu0 0.0
  %818 = vmatprep.subr.mxu0 0.0
  %819 = vmatpush1.msra.mxu0 0.0
  %820 = vmatprep.subr.mxu0 0.0
  %821 = vmatpush1.msra.mxu0 0.0
  %822 = vmatprep.subr.mxu0 0.0
  %823 = vmatpush1.msra.mxu0 0.0
  %824 = vmatprep.subr.mxu0 0.0
  %825 = vmatpush1.msra.mxu0 0.0
  %826 = vmatprep.subr.mxu0 0.0
  %827 = vmatpush1.msra.mxu0 0.0
  %828 = vmatprep.subr.mxu0 0.0
  %829 = vmatpush1.msra.mxu0 0.0
  %830 = vmatprep.subr.mxu0 0.0
  %831 = vmatpush1.msra.mxu0 0.0
  %832 = vmatprep.subr.mxu0 0.0
  %833 = vmatpush1.msra.mxu0 0.0
  %834 = vmatprep.subr.mxu0 0.0
  %835 = vmatpush1.msra.mxu0 0.0
  %836 = vmatprep.subr.mxu0 0.0
  %837 = vmatpush1.msra.mxu0 0.0
  %838 = vmatprep.subr.mxu0 0.0
  %839 = vmatpush1.msra.mxu0 0.0
  %840 = vmatprep.subr.mxu0 0.0
  %841 = vmatpush1.msra.mxu0 0.0
  %842 = vmatprep.subr.mxu0 0.0
  %843 = vmatpush1.msra.mxu0 0.0
  %844 = vmatprep.subr.mxu0 0.0
  %845 = vmatpush1.msra.mxu0 0.0
  %846 = vmatprep.subr.mxu0 0.0
  %847 = vmatpush1.msra.mxu0 0.0
  %848 = vmatprep.subr.mxu0 0.0
  %849 = vmatpush1.msra.mxu0 0.0
  %850 = vmatprep.subr.mxu0 0.0
  %851 = vmatpush1.msra.mxu0 0.0
  %852 = vmatprep.subr.mxu0 0.0
  %853 = vmatpush1.msra.mxu0 0.0
  %854 = vmatprep.subr.mxu0 0.0
  %855 = vmatpush1.msra.mxu0 0.0
  %856 = vmatprep.subr.mxu0 0.0
  %857 = vmatpush1.msra.mxu0 0.0
  %858 = vmatprep.subr.mxu0 0.0
  %859 = vmatpush1.msra.mxu0 0.0
  %860 = vmatprep.subr.mxu0 0.0
  %861 = vmatpush1.msra.mxu0 0.0
  %862 = vmatprep.subr.mxu0 0.0
  %863 = vmatpush1.msra.mxu0 0.0
  %864 = vmatprep.subr.mxu0 0.0
  %865 = vmatpush1.msra.mxu0 0.0
  %866 = vmatprep.subr.mxu0 0.0
  %867 = vmatpush1.msra.mxu0 0.0
  %868 = vmatprep.subr.mxu0 0.0
  %869 = vmatpush1.msra.mxu0 0.0
  %870 = vmatprep.mubr.f32.mxu0 0.0
  %871 = vmatmul.mubr.f32.gmra.mrb[0].mxu0 %v804
  %v872 = vpop.f32.mrb[0].mxu0
  %v873 = vadd.f32 0.0, %v872
  %v874 = vpop.f32.mrb[0].mxu0
  %875 = vdwg.mxu0
  %v877 = vrot.slane %v873, 6
  %v879 = vadd.f32 %v796, %v877
  %v880 = vxor.u32 %v795, 2147483648
  %v881 = vmul.f32 %v880, 1.442695
  %v882 = vpow.pop %v881
  %v883 = vadd.f32 %v882, 1.0
  %v884 = vrcp.pop %v883
  %v885 = vmul.f32 1.0, %v884
  %v886 = vtanh.pop %v795
  %v888 = vrot.slane %v662, 6
  %v890 = vmul.f32 %v885, %v888
  %892 = vrot.lane.b32.xlu0 %v886, 32
  %v893 = vpop.permute.xlu0 %892
  %v895 = vmul.f32 %v885, %v893
  %897 = vrot.lane.b32.xlu0 %v895, 32
  %v898 = vpop.permute.xlu0 %897
  %v900 = vadd.f32 %v890, %v898
  %v901 = vtanh.pop %v900
  %903 = vrot.lane.b32.xlu0 %v901, 32
  %v904 = vpop.permute.xlu0 %903
  %v906 = vmul.f32 %v885, %v904
  %v907 = vxor.u32 %v879, 2147483648
  %v908 = vmul.f32 %v907, 1.442695
  %v909 = vpow.pop %v908
  %v910 = vadd.f32 %v909, 1.0
  %v911 = vrcp.pop %v910
  %v912 = vmul.f32 1.0, %v911
  %v913 = vtanh.pop %v879
  %v915 = vrot.slane %v689, 2
  %v917 = vmul.f32 %v912, %v915
  %919 = vrot.lane.b32.xlu0 %v913, 32
  %v920 = vpop.permute.xlu0 %919
  %v922 = vmul.f32 %v912, %v920
  %924 = vrot.lane.b32.xlu0 %v922, 32
  %v925 = vpop.permute.xlu0 %924
  %v927 = vadd.f32 %v917, %v925
  %v928 = vtanh.pop %v927
  %930 = vrot.lane.b32.xlu0 %v928, 32
  %v931 = vpop.permute.xlu0 %930
  %v933 = vmul.f32 %v912, %v931
  %935 = vrot.lane.b32.xlu0 %v906, 64
  %v936 = vpop.permute.xlu0 %935
  %vm938 = vcmask 258052
  %939 = vst.msk [vmem:[#allocation3 - $0x2] sm:$0x10] %vm938, %v936
  %941 = vrot.lane.b32.xlu0 %v933, 96
  %v942 = vpop.permute.xlu0 %941
  %vm944 = vcmask 518402
  %945 = vst.msk [vmem:[#allocation3 + $0x3] sm:$0x4] %vm944, %v942
  %vm946 = vcmask 259077
  %947 = vst.msk [vmem:[#allocation3 + $0x5] sm:$0x20] %vm946, %v936
  %vm948 = vcmask 519427
  %949 = vst.msk [vmem:[#allocation3 + $0xa] sm:$0x8] %vm948, %v942
  %v950 = vld [vmem:[#allocation2] sm:$0xc0]
  %v951 = vld [vmem:[%s5] sm:$0xff]
  %v952 = vld [vmem:[%s5 + $0x8] sm:$0xff]
  %v953 = vld [vmem:[%s5 + $0x10] sm:$0xff]
  %v954 = vld [vmem:[%s5 + $0x18] sm:$0xff]
  %v955 = vrot.slane %v906, 4
  %956 = vrot.lane.b32.xlu0 %v955, 64
  %v957 = vpop.permute.xlu0 %956
  %v958 = vsel %vm167, %v957, 0
  %960 = vmatprep.subr.mxu0 0.0
  %961 = vmatpush1.msra.mxu0 %v951
  %962 = vmatprep.subr.mxu0 0.0
  %963 = vmatpush1.msra.mxu0 %v952
  %964 = vmatprep.subr.mxu0 0.0
  %965 = vmatpush1.msra.mxu0 %v953
  %966 = vmatprep.subr.mxu0 0.0
  %967 = vmatpush1.msra.mxu0 %v954
  %968 = vmatprep.subr.mxu0 0.0
  %969 = vmatpush1.msra.mxu0 0.0
  %970 = vmatprep.subr.mxu0 0.0
  %971 = vmatpush1.msra.mxu0 0.0
  %972 = vmatprep.subr.mxu0 0.0
  %973 = vmatpush1.msra.mxu0 0.0
  %974 = vmatprep.subr.mxu0 0.0
  %975 = vmatpush1.msra.mxu0 0.0
  %976 = vmatprep.subr.mxu0 0.0
  %977 = vmatpush1.msra.mxu0 0.0
  %978 = vmatprep.subr.mxu0 0.0
  %979 = vmatpush1.msra.mxu0 0.0
  %980 = vmatprep.subr.mxu0 0.0
  %981 = vmatpush1.msra.mxu0 0.0
  %982 = vmatprep.subr.mxu0 0.0
  %983 = vmatpush1.msra.mxu0 0.0
  %984 = vmatprep.subr.mxu0 0.0
  %985 = vmatpush1.msra.mxu0 0.0
  %986 = vmatprep.subr.mxu0 0.0
  %987 = vmatpush1.msra.mxu0 0.0
  %988 = vmatprep.subr.mxu0 0.0
  %989 = vmatpush1.msra.mxu0 0.0
  %990 = vmatprep.subr.mxu0 0.0
  %991 = vmatpush1.msra.mxu0 0.0
  %992 = vmatprep.subr.mxu0 0.0
  %993 = vmatpush1.msra.mxu0 0.0
  %994 = vmatprep.subr.mxu0 0.0
  %995 = vmatpush1.msra.mxu0 0.0
  %996 = vmatprep.subr.mxu0 0.0
  %997 = vmatpush1.msra.mxu0 0.0
  %998 = vmatprep.subr.mxu0 0.0
  %999 = vmatpush1.msra.mxu0 0.0
  %1000 = vmatprep.subr.mxu0 0.0
  %1001 = vmatpush1.msra.mxu0 0.0
  %1002 = vmatprep.subr.mxu0 0.0
  %1003 = vmatpush1.msra.mxu0 0.0
  %1004 = vmatprep.subr.mxu0 0.0
  %1005 = vmatpush1.msra.mxu0 0.0
  %1006 = vmatprep.subr.mxu0 0.0
  %1007 = vmatpush1.msra.mxu0 0.0
  %1008 = vmatprep.subr.mxu0 0.0
  %1009 = vmatpush1.msra.mxu0 0.0
  %1010 = vmatprep.subr.mxu0 0.0
  %1011 = vmatpush1.msra.mxu0 0.0
  %1012 = vmatprep.subr.mxu0 0.0
  %1013 = vmatpush1.msra.mxu0 0.0
  %1014 = vmatprep.subr.mxu0 0.0
  %1015 = vmatpush1.msra.mxu0 0.0
  %1016 = vmatprep.subr.mxu0 0.0
  %1017 = vmatpush1.msra.mxu0 0.0
  %1018 = vmatprep.subr.mxu0 0.0
  %1019 = vmatpush1.msra.mxu0 0.0
  %1020 = vmatprep.subr.mxu0 0.0
  %1021 = vmatpush1.msra.mxu0 0.0
  %1022 = vmatprep.subr.mxu0 0.0
  %1023 = vmatpush1.msra.mxu0 0.0
  %1024 = vmatprep.mubr.f32.mxu0 0.0
  %1025 = vmatmul.mubr.f32.gmra.mrb[0].mxu0 %v958
  %v1026 = vpop.f32.mrb[0].mxu0
  %v1027 = vadd.f32 0.0, %v1026
  %v1028 = vpop.f32.mrb[0].mxu0
  %1029 = vdwg.mxu0
  %v1031 = vrot.slane %v1027, 2
  %v1033 = vadd.f32 %v950, %v1031
  %v1034 = vld [vmem:[#allocation2 + $0x18] sm:$0x3]
  %v1035 = vld [vmem:[%s6] sm:$0xff]
  %v1036 = vld [vmem:[%s6 + $0x8] sm:$0xff]
  %v1037 = vld [vmem:[%s6 + $0x10] sm:$0xff]
  %v1038 = vld [vmem:[%s6 + $0x18] sm:$0xff]
  %v1039 = vrot.slane %v933, 2
  %1040 = vrot.lane.b32.xlu0 %v1039, 64
  %v1041 = vpop.permute.xlu0 %1040
  %v1042 = vsel %vm167, %v1041, 0
  %1044 = vmatprep.subr.mxu0 0.0
  %1045 = vmatpush1.msra.mxu0 %v1035
  %1046 = vmatprep.subr.mxu0 0.0
  %1047 = vmatpush1.msra.mxu0 %v1036
  %1048 = vmatprep.subr.mxu0 0.0
  %1049 = vmatpush1.msra.mxu0 %v1037
  %1050 = vmatprep.subr.mxu0 0.0
  %1051 = vmatpush1.msra.mxu0 %v1038
  %1052 = vmatprep.subr.mxu0 0.0
  %1053 = vmatpush1.msra.mxu0 0.0
  %1054 = vmatprep.subr.mxu0 0.0
  %1055 = vmatpush1.msra.mxu0 0.0
  %1056 = vmatprep.subr.mxu0 0.0
  %1057 = vmatpush1.msra.mxu0 0.0
  %1058 = vmatprep.subr.mxu0 0.0
  %1059 = vmatpush1.msra.mxu0 0.0
  %1060 = vmatprep.subr.mxu0 0.0
  %1061 = vmatpush1.msra.mxu0 0.0
  %1062 = vmatprep.subr.mxu0 0.0
  %1063 = vmatpush1.msra.mxu0 0.0
  %1064 = vmatprep.subr.mxu0 0.0
  %1065 = vmatpush1.msra.mxu0 0.0
  %1066 = vmatprep.subr.mxu0 0.0
  %1067 = vmatpush1.msra.mxu0 0.0
  %1068 = vmatprep.subr.mxu0 0.0
  %1069 = vmatpush1.msra.mxu0 0.0
  %1070 = vmatprep.subr.mxu0 0.0
  %1071 = vmatpush1.msra.mxu0 0.0
  %1072 = vmatprep.subr.mxu0 0.0
  %1073 = vmatpush1.msra.mxu0 0.0
  %1074 = vmatprep.subr.mxu0 0.0
  %1075 = vmatpush1.msra.mxu0 0.0
  %1076 = vmatprep.subr.mxu0 0.0
  %1077 = vmatpush1.msra.mxu0 0.0
  %1078 = vmatprep.subr.mxu0 0.0
  %1079 = vmatpush1.msra.mxu0 0.0
  %1080 = vmatprep.subr.mxu0 0.0
  %1081 = vmatpush1.msra.mxu0 0.0
  %1082 = vmatprep.subr.mxu0 0.0
  %1083 = vmatpush1.msra.mxu0 0.0
  %1084 = vmatprep.subr.mxu0 0.0
  %1085 = vmatpush1.msra.mxu0 0.0
  %1086 = vmatprep.subr.mxu0 0.0
  %1087 = vmatpush1.msra.mxu0 0.0
  %1088 = vmatprep.subr.mxu0 0.0
  %1089 = vmatpush1.msra.mxu0 0.0
  %1090 = vmatprep.subr.mxu0 0.0
  %1091 = vmatpush1.msra.mxu0 0.0
  %1092 = vmatprep.subr.mxu0 0.0
  %1093 = vmatpush1.msra.mxu0 0.0
  %1094 = vmatprep.subr.mxu0 0.0
  %1095 = vmatpush1.msra.mxu0 0.0
  %1096 = vmatprep.subr.mxu0 0.0
  %1097 = vmatpush1.msra.mxu0 0.0
  %1098 = vmatprep.subr.mxu0 0.0
  %1099 = vmatpush1.msra.mxu0 0.0
  %1100 = vmatprep.subr.mxu0 0.0
  %1101 = vmatpush1.msra.mxu0 0.0
  %1102 = vmatprep.subr.mxu0 0.0
  %1103 = vmatpush1.msra.mxu0 0.0
  %1104 = vmatprep.subr.mxu0 0.0
  %1105 = vmatpush1.msra.mxu0 0.0
  %1106 = vmatprep.subr.mxu0 0.0
  %1107 = vmatpush1.msra.mxu0 0.0
  %1108 = vmatprep.mubr.f32.mxu0 0.0
  %1109 = vmatmul.mubr.f32.gmra.mrb[0].mxu0 %v1042
  %v1110 = vpop.f32.mrb[0].mxu0
  %v1111 = vadd.f32 0.0, %v1110
  %v1112 = vpop.f32.mrb[0].mxu0
  %1113 = vdwg.mxu0
  %v1114 = vadd.f32 %v1034, %v1111
  %v1115 = vxor.u32 %v1033, 2147483648
  %v1116 = vmul.f32 %v1115, 1.442695
  %v1117 = vpow.pop %v1116
  %v1118 = vadd.f32 %v1117, 1.0
  %v1119 = vrcp.pop %v1118
  %v1120 = vmul.f32 1.0, %v1119
  %v1121 = vtanh.pop %v1033
  %v1123 = vrot.slane %v900, 6
  %v1125 = vmul.f32 %v1120, %v1123
  %1127 = vrot.lane.b32.xlu0 %v1121, 32
  %v1128 = vpop.permute.xlu0 %1127
  %v1130 = vmul.f32 %v1120, %v1128
  %1132 = vrot.lane.b32.xlu0 %v1130, 32
  %v1133 = vpop.permute.xlu0 %1132
  %v1135 = vadd.f32 %v1125, %v1133
  %v1136 = vtanh.pop %v1135
  %1138 = vrot.lane.b32.xlu0 %v1136, 32
  %v1139 = vpop.permute.xlu0 %1138
  %v1141 = vmul.f32 %v1120, %v1139
  %v1142 = vxor.u32 %v1114, 2147483648
  %v1143 = vmul.f32 %v1142, 1.442695
  %v1144 = vpow.pop %v1143
  %v1145 = vadd.f32 %v1144, 1.0
  %v1146 = vrcp.pop %v1145
  %v1147 = vmul.f32 1.0, %v1146
  %v1148 = vtanh.pop %v1114
  %v1150 = vrot.slane %v927, 2
  %v1152 = vmul.f32 %v1147, %v1150
  %1154 = vrot.lane.b32.xlu0 %v1148, 32
  %v1155 = vpop.permute.xlu0 %1154
  %v1157 = vmul.f32 %v1147, %v1155
  %1159 = vrot.lane.b32.xlu0 %v1157, 32
  %v1160 = vpop.permute.xlu0 %1159
  %v1162 = vadd.f32 %v1152, %v1160
  %v1163 = vtanh.pop %v1162
  %1165 = vrot.lane.b32.xlu0 %v1163, 32
  %v1166 = vpop.permute.xlu0 %1165
  %v1168 = vmul.f32 %v1147, %v1166
  %1170 = vrot.lane.b32.xlu0 %v1141, 64
  %v1171 = vpop.permute.xlu0 %1170
  %vm1173 = vcmask 260102
  %1174 = vst.msk [vmem:[#allocation3 - $0x3] sm:$0x40] %vm1173, %v1171
  %1176 = vrot.lane.b32.xlu0 %v1168, 96
  %v1177 = vpop.permute.xlu0 %1176
  %vm1179 = vcmask 516352
  %1180 = vst.msk [vmem:[#allocation3 + $0x4] sm:$0x1] %vm1179, %v1177
  %vm1181 = vcmask 261127
  %1182 = vst.msk [vmem:[#allocation3 + $0x4] sm:$0x80] %vm1181, %v1171
  %vm1183 = vcmask 517377
  %1184 = vst.msk [vmem:[#allocation3 + $0xb] sm:$0x2] %vm1183, %v1177
  %v1185 = vld [vmem:[#allocation2 + $0x10] sm:$0x3]
  %v1186 = vld [vmem:[%s5] sm:$0xff]
  %v1187 = vld [vmem:[%s5 + $0x8] sm:$0xff]
  %v1188 = vld [vmem:[%s5 + $0x10] sm:$0xff]
  %v1189 = vld [vmem:[%s5 + $0x18] sm:$0xff]
  %v1190 = vrot.slane %v1141, 6
  %1191 = vrot.lane.b32.xlu0 %v1190, 64
  %v1192 = vpop.permute.xlu0 %1191
  %v1193 = vsel %vm167, %v1192, 0
  %1195 = vmatprep.subr.mxu0 0.0
  %1196 = vmatpush1.msra.mxu0 %v1186
  %1197 = vmatprep.subr.mxu0 0.0
  %1198 = vmatpush1.msra.mxu0 %v1187
  %1199 = vmatprep.subr.mxu0 0.0
  %1200 = vmatpush1.msra.mxu0 %v1188
  %1201 = vmatprep.subr.mxu0 0.0
  %1202 = vmatpush1.msra.mxu0 %v1189
  %1203 = vmatprep.subr.mxu0 0.0
  %1204 = vmatpush1.msra.mxu0 0.0
  %1205 = vmatprep.subr.mxu0 0.0
  %1206 = vmatpush1.msra.mxu0 0.0
  %1207 = vmatprep.subr.mxu0 0.0
  %1208 = vmatpush1.msra.mxu0 0.0
  %1209 = vmatprep.subr.mxu0 0.0
  %1210 = vmatpush1.msra.mxu0 0.0
  %1211 = vmatprep.subr.mxu0 0.0
  %1212 = vmatpush1.msra.mxu0 0.0
  %1213 = vmatprep.subr.mxu0 0.0
  %1214 = vmatpush1.msra.mxu0 0.0
  %1215 = vmatprep.subr.mxu0 0.0
  %1216 = vmatpush1.msra.mxu0 0.0
  %1217 = vmatprep.subr.mxu0 0.0
  %1218 = vmatpush1.msra.mxu0 0.0
  %1219 = vmatprep.subr.mxu0 0.0
  %1220 = vmatpush1.msra.mxu0 0.0
  %1221 = vmatprep.subr.mxu0 0.0
  %1222 = vmatpush1.msra.mxu0 0.0
  %1223 = vmatprep.subr.mxu0 0.0
  %1224 = vmatpush1.msra.mxu0 0.0
  %1225 = vmatprep.subr.mxu0 0.0
  %1226 = vmatpush1.msra.mxu0 0.0
  %1227 = vmatprep.subr.mxu0 0.0
  %1228 = vmatpush1.msra.mxu0 0.0
  %1229 = vmatprep.subr.mxu0 0.0
  %1230 = vmatpush1.msra.mxu0 0.0
  %1231 = vmatprep.subr.mxu0 0.0
  %1232 = vmatpush1.msra.mxu0 0.0
  %1233 = vmatprep.subr.mxu0 0.0
  %1234 = vmatpush1.msra.mxu0 0.0
  %1235 = vmatprep.subr.mxu0 0.0
  %1236 = vmatpush1.msra.mxu0 0.0
  %1237 = vmatprep.subr.mxu0 0.0
  %1238 = vmatpush1.msra.mxu0 0.0
  %1239 = vmatprep.subr.mxu0 0.0
  %1240 = vmatpush1.msra.mxu0 0.0
  %1241 = vmatprep.subr.mxu0 0.0
  %1242 = vmatpush1.msra.mxu0 0.0
  %1243 = vmatprep.subr.mxu0 0.0
  %1244 = vmatpush1.msra.mxu0 0.0
  %1245 = vmatprep.subr.mxu0 0.0
  %1246 = vmatpush1.msra.mxu0 0.0
  %1247 = vmatprep.subr.mxu0 0.0
  %1248 = vmatpush1.msra.mxu0 0.0
  %1249 = vmatprep.subr.mxu0 0.0
  %1250 = vmatpush1.msra.mxu0 0.0
  %1251 = vmatprep.subr.mxu0 0.0
  %1252 = vmatpush1.msra.mxu0 0.0
  %1253 = vmatprep.subr.mxu0 0.0
  %1254 = vmatpush1.msra.mxu0 0.0
  %1255 = vmatprep.subr.mxu0 0.0
  %1256 = vmatpush1.msra.mxu0 0.0
  %1257 = vmatprep.subr.mxu0 0.0
  %1258 = vmatpush1.msra.mxu0 0.0
  %1259 = vmatprep.mubr.f32.mxu0 0.0
  %1260 = vmatmul.mubr.f32.gmra.mrb[0].mxu0 %v1193
  %v1261 = vpop.f32.mrb[0].mxu0
  %v1262 = vadd.f32 0.0, %v1261
  %v1263 = vpop.f32.mrb[0].mxu0
  %1264 = vdwg.mxu0
  %v1265 = vadd.f32 %v1185, %v1262
  %v1266 = vld [vmem:[#allocation2 + $0x8] sm:$0xc0]
  %v1267 = vld [vmem:[%s6] sm:$0xff]
  %v1268 = vld [vmem:[%s6 + $0x8] sm:$0xff]
  %v1269 = vld [vmem:[%s6 + $0x10] sm:$0xff]
  %v1270 = vld [vmem:[%s6 + $0x18] sm:$0xff]
  %1271 = vrot.lane.b32.xlu0 %v1168, 64
  %v1272 = vpop.permute.xlu0 %1271
  %v1273 = vsel %vm167, %v1272, 0
  %1275 = vmatprep.subr.mxu0 0.0
  %1276 = vmatpush1.msra.mxu0 %v1267
  %1277 = vmatprep.subr.mxu0 0.0
  %1278 = vmatpush1.msra.mxu0 %v1268
  %1279 = vmatprep.subr.mxu0 0.0
  %1280 = vmatpush1.msra.mxu0 %v1269
  %1281 = vmatprep.subr.mxu0 0.0
  %1282 = vmatpush1.msra.mxu0 %v1270
  %1283 = vmatprep.subr.mxu0 0.0
  %1284 = vmatpush1.msra.mxu0 0.0
  %1285 = vmatprep.subr.mxu0 0.0
  %1286 = vmatpush1.msra.mxu0 0.0
  %1287 = vmatprep.subr.mxu0 0.0
  %1288 = vmatpush1.msra.mxu0 0.0
  %1289 = vmatprep.subr.mxu0 0.0
  %1290 = vmatpush1.msra.mxu0 0.0
  %1291 = vmatprep.subr.mxu0 0.0
  %1292 = vmatpush1.msra.mxu0 0.0
  %1293 = vmatprep.subr.mxu0 0.0
  %1294 = vmatpush1.msra.mxu0 0.0
  %1295 = vmatprep.subr.mxu0 0.0
  %1296 = vmatpush1.msra.mxu0 0.0
  %1297 = vmatprep.subr.mxu0 0.0
  %1298 = vmatpush1.msra.mxu0 0.0
  %1299 = vmatprep.subr.mxu0 0.0
  %1300 = vmatpush1.msra.mxu0 0.0
  %1301 = vmatprep.subr.mxu0 0.0
  %1302 = vmatpush1.msra.mxu0 0.0
  %1303 = vmatprep.subr.mxu0 0.0
  %1304 = vmatpush1.msra.mxu0 0.0
  %1305 = vmatprep.subr.mxu0 0.0
  %1306 = vmatpush1.msra.mxu0 0.0
  %1307 = vmatprep.subr.mxu0 0.0
  %1308 = vmatpush1.msra.mxu0 0.0
  %1309 = vmatprep.subr.mxu0 0.0
  %1310 = vmatpush1.msra.mxu0 0.0
  %1311 = vmatprep.subr.mxu0 0.0
  %1312 = vmatpush1.msra.mxu0 0.0
  %1313 = vmatprep.subr.mxu0 0.0
  %1314 = vmatpush1.msra.mxu0 0.0
  %1315 = vmatprep.subr.mxu0 0.0
  %1316 = vmatpush1.msra.mxu0 0.0
  %1317 = vmatprep.subr.mxu0 0.0
  %1318 = vmatpush1.msra.mxu0 0.0
  %1319 = vmatprep.subr.mxu0 0.0
  %1320 = vmatpush1.msra.mxu0 0.0
  %1321 = vmatprep.subr.mxu0 0.0
  %1322 = vmatpush1.msra.mxu0 0.0
  %1323 = vmatprep.subr.mxu0 0.0
  %1324 = vmatpush1.msra.mxu0 0.0
  %1325 = vmatprep.subr.mxu0 0.0
  %1326 = vmatpush1.msra.mxu0 0.0
  %1327 = vmatprep.subr.mxu0 0.0
  %1328 = vmatpush1.msra.mxu0 0.0
  %1329 = vmatprep.subr.mxu0 0.0
  %1330 = vmatpush1.msra.mxu0 0.0
  %1331 = vmatprep.subr.mxu0 0.0
  %1332 = vmatpush1.msra.mxu0 0.0
  %1333 = vmatprep.subr.mxu0 0.0
  %1334 = vmatpush1.msra.mxu0 0.0
  %1335 = vmatprep.subr.mxu0 0.0
  %1336 = vmatpush1.msra.mxu0 0.0
  %1337 = vmatprep.subr.mxu0 0.0
  %1338 = vmatpush1.msra.mxu0 0.0
  %1339 = vmatprep.mubr.f32.mxu0 0.0
  %1340 = vmatmul.mubr.f32.gmra.mrb[0].mxu0 %v1273
  %v1341 = vpop.f32.mrb[0].mxu0
  %v1342 = vadd.f32 0.0, %v1341
  %v1343 = vpop.f32.mrb[0].mxu0
  %1344 = vdwg.mxu0
  %v1346 = vrot.slane %v1342, 2
  %v1348 = vadd.f32 %v1266, %v1346
  %v1349 = vxor.u32 %v1265, 2147483648
  %v1350 = vmul.f32 %v1349, 1.442695
  %v1351 = vpow.pop %v1350
  %v1352 = vadd.f32 %v1351, 1.0
  %v1353 = vrcp.pop %v1352
  %v1354 = vmul.f32 1.0, %v1353
  %v1355 = vtanh.pop %v1265
  %v1357 = vrot.slane %v1135, 6
  %v1359 = vmul.f32 %v1354, %v1357
  %1361 = vrot.lane.b32.xlu0 %v1355, 32
  %v1362 = vpop.permute.xlu0 %1361
  %v1364 = vmul.f32 %v1354, %v1362
  %1366 = vrot.lane.b32.xlu0 %v1364, 32
  %v1367 = vpop.permute.xlu0 %1366
  %v1369 = vadd.f32 %v1359, %v1367
  %v1370 = vtanh.pop %v1369
  %1372 = vrot.lane.b32.xlu0 %v1370, 32
  %v1373 = vpop.permute.xlu0 %1372
  %v1375 = vmul.f32 %v1354, %v1373
  %v1376 = vxor.u32 %v1348, 2147483648
  %v1377 = vmul.f32 %v1376, 1.442695
  %v1378 = vpow.pop %v1377
  %v1379 = vadd.f32 %v1378, 1.0
  %v1380 = vrcp.pop %v1379
  %v1381 = vmul.f32 1.0, %v1380
  %v1382 = vtanh.pop %v1348
  %v1384 = vrot.slane %v1162, 2
  %v1386 = vmul.f32 %v1381, %v1384
  %1388 = vrot.lane.b32.xlu0 %v1382, 32
  %v1389 = vpop.permute.xlu0 %1388
  %v1391 = vmul.f32 %v1381, %v1389
  %1393 = vrot.lane.b32.xlu0 %v1391, 32
  %v1394 = vpop.permute.xlu0 %1393
  %v1396 = vadd.f32 %v1386, %v1394
  %v1397 = vtanh.pop %v1396
  %1399 = vrot.lane.b32.xlu0 %v1397, 32
  %v1400 = vpop.permute.xlu0 %1399
  %v1402 = vmul.f32 %v1381, %v1400
  %1404 = vrot.lane.b32.xlu0 %v1375, 64
  %v1405 = vpop.permute.xlu0 %1404
  %1407 = vst.msk [vmem:[#allocation3 + $0x4] sm:$0x1] %vm465, %v1405
  %1409 = vrot.lane.b32.xlu0 %v1402, 96
  %v1410 = vpop.permute.xlu0 %1409
  %1412 = vst.msk [vmem:[#allocation3 - $0x3] sm:$0x40] %vm471, %v1410
  %1413 = vst.msk [vmem:[#allocation3 + $0xb] sm:$0x2] %vm473, %v1405
  %1414 = vst.msk [vmem:[#allocation3 + $0x4] sm:$0x80] %vm475, %v1410
  %v1415 = vld [vmem:[#allocation2 + $0x10] sm:$0xc]
  %v1416 = vld [vmem:[%s5] sm:$0xff]
  %v1417 = vld [vmem:[%s5 + $0x8] sm:$0xff]
  %v1418 = vld [vmem:[%s5 + $0x10] sm:$0xff]
  %v1419 = vld [vmem:[%s5 + $0x18] sm:$0xff]
  %v1420 = vsel %vm167, %v1405, 0
  %1422 = vmatprep.subr.mxu0 0.0
  %1423 = vmatpush1.msra.mxu0 %v1416
  %1424 = vmatprep.subr.mxu0 0.0
  %1425 = vmatpush1.msra.mxu0 %v1417
  %1426 = vmatprep.subr.mxu0 0.0
  %1427 = vmatpush1.msra.mxu0 %v1418
  %1428 = vmatprep.subr.mxu0 0.0
  %1429 = vmatpush1.msra.mxu0 %v1419
  %1430 = vmatprep.subr.mxu0 0.0
  %1431 = vmatpush1.msra.mxu0 0.0
  %1432 = vmatprep.subr.mxu0 0.0
  %1433 = vmatpush1.msra.mxu0 0.0
  %1434 = vmatprep.subr.mxu0 0.0
  %1435 = vmatpush1.msra.mxu0 0.0
  %1436 = vmatprep.subr.mxu0 0.0
  %1437 = vmatpush1.msra.mxu0 0.0
  %1438 = vmatprep.subr.mxu0 0.0
  %1439 = vmatpush1.msra.mxu0 0.0
  %1440 = vmatprep.subr.mxu0 0.0
  %1441 = vmatpush1.msra.mxu0 0.0
  %1442 = vmatprep.subr.mxu0 0.0
  %1443 = vmatpush1.msra.mxu0 0.0
  %1444 = vmatprep.subr.mxu0 0.0
  %1445 = vmatpush1.msra.mxu0 0.0
  %1446 = vmatprep.subr.mxu0 0.0
  %1447 = vmatpush1.msra.mxu0 0.0
  %1448 = vmatprep.subr.mxu0 0.0
  %1449 = vmatpush1.msra.mxu0 0.0
  %1450 = vmatprep.subr.mxu0 0.0
  %1451 = vmatpush1.msra.mxu0 0.0
  %1452 = vmatprep.subr.mxu0 0.0
  %1453 = vmatpush1.msra.mxu0 0.0
  %1454 = vmatprep.subr.mxu0 0.0
  %1455 = vmatpush1.msra.mxu0 0.0
  %1456 = vmatprep.subr.mxu0 0.0
  %1457 = vmatpush1.msra.mxu0 0.0
  %1458 = vmatprep.subr.mxu0 0.0
  %1459 = vmatpush1.msra.mxu0 0.0
  %1460 = vmatprep.subr.mxu0 0.0
  %1461 = vmatpush1.msra.mxu0 0.0
  %1462 = vmatprep.subr.mxu0 0.0
  %1463 = vmatpush1.msra.mxu0 0.0
  %1464 = vmatprep.subr.mxu0 0.0
  %1465 = vmatpush1.msra.mxu0 0.0
  %1466 = vmatprep.subr.mxu0 0.0
  %1467 = vmatpush1.msra.mxu0 0.0
  %1468 = vmatprep.subr.mxu0 0.0
  %1469 = vmatpush1.msra.mxu0 0.0
  %1470 = vmatprep.subr.mxu0 0.0
  %1471 = vmatpush1.msra.mxu0 0.0
  %1472 = vmatprep.subr.mxu0 0.0
  %1473 = vmatpush1.msra.mxu0 0.0
  %1474 = vmatprep.subr.mxu0 0.0
  %1475 = vmatpush1.msra.mxu0 0.0
  %1476 = vmatprep.subr.mxu0 0.0
  %1477 = vmatpush1.msra.mxu0 0.0
  %1478 = vmatprep.subr.mxu0 0.0
  %1479 = vmatpush1.msra.mxu0 0.0
  %1480 = vmatprep.subr.mxu0 0.0
  %1481 = vmatpush1.msra.mxu0 0.0
  %1482 = vmatprep.subr.mxu0 0.0
  %1483 = vmatpush1.msra.mxu0 0.0
  %1484 = vmatprep.subr.mxu0 0.0
  %1485 = vmatpush1.msra.mxu0 0.0
  %1486 = vmatprep.mubr.f32.mxu0 0.0
  %1487 = vmatmul.mubr.f32.gmra.mrb[0].mxu0 %v1420
  %v1488 = vpop.f32.mrb[0].mxu0
  %v1489 = vadd.f32 0.0, %v1488
  %v1490 = vpop.f32.mrb[0].mxu0
  %1491 = vdwg.mxu0
  %v1493 = vrot.slane %v1489, 6
  %v1495 = vadd.f32 %v1415, %v1493
  %v1496 = vld [vmem:[#allocation2 + $0x8] sm:$0x30]
  %v1497 = vld [vmem:[%s6] sm:$0xff]
  %v1498 = vld [vmem:[%s6 + $0x8] sm:$0xff]
  %v1499 = vld [vmem:[%s6 + $0x10] sm:$0xff]
  %v1500 = vld [vmem:[%s6 + $0x18] sm:$0xff]
  %v1501 = vrot.slane %v1402, 6
  %1502 = vrot.lane.b32.xlu0 %v1501, 64
  %v1503 = vpop.permute.xlu0 %1502
  %v1504 = vsel %vm167, %v1503, 0
  %1506 = vmatprep.subr.mxu0 0.0
  %1507 = vmatpush1.msra.mxu0 %v1497
  %1508 = vmatprep.subr.mxu0 0.0
  %1509 = vmatpush1.msra.mxu0 %v1498
  %1510 = vmatprep.subr.mxu0 0.0
  %1511 = vmatpush1.msra.mxu0 %v1499
  %1512 = vmatprep.subr.mxu0 0.0
  %1513 = vmatpush1.msra.mxu0 %v1500
  %1514 = vmatprep.subr.mxu0 0.0
  %1515 = vmatpush1.msra.mxu0 0.0
  %1516 = vmatprep.subr.mxu0 0.0
  %1517 = vmatpush1.msra.mxu0 0.0
  %1518 = vmatprep.subr.mxu0 0.0
  %1519 = vmatpush1.msra.mxu0 0.0
  %1520 = vmatprep.subr.mxu0 0.0
  %1521 = vmatpush1.msra.mxu0 0.0
  %1522 = vmatprep.subr.mxu0 0.0
  %1523 = vmatpush1.msra.mxu0 0.0
  %1524 = vmatprep.subr.mxu0 0.0
  %1525 = vmatpush1.msra.mxu0 0.0
  %1526 = vmatprep.subr.mxu0 0.0
  %1527 = vmatpush1.msra.mxu0 0.0
  %1528 = vmatprep.subr.mxu0 0.0
  %1529 = vmatpush1.msra.mxu0 0.0
  %1530 = vmatprep.subr.mxu0 0.0
  %1531 = vmatpush1.msra.mxu0 0.0
  %1532 = vmatprep.subr.mxu0 0.0
  %1533 = vmatpush1.msra.mxu0 0.0
  %1534 = vmatprep.subr.mxu0 0.0
  %1535 = vmatpush1.msra.mxu0 0.0
  %1536 = vmatprep.subr.mxu0 0.0
  %1537 = vmatpush1.msra.mxu0 0.0
  %1538 = vmatprep.subr.mxu0 0.0
  %1539 = vmatpush1.msra.mxu0 0.0
  %1540 = vmatprep.subr.mxu0 0.0
  %1541 = vmatpush1.msra.mxu0 0.0
  %1542 = vmatprep.subr.mxu0 0.0
  %1543 = vmatpush1.msra.mxu0 0.0
  %1544 = vmatprep.subr.mxu0 0.0
  %1545 = vmatpush1.msra.mxu0 0.0
  %1546 = vmatprep.subr.mxu0 0.0
  %1547 = vmatpush1.msra.mxu0 0.0
  %1548 = vmatprep.subr.mxu0 0.0
  %1549 = vmatpush1.msra.mxu0 0.0
  %1550 = vmatprep.subr.mxu0 0.0
  %1551 = vmatpush1.msra.mxu0 0.0
  %1552 = vmatprep.subr.mxu0 0.0
  %1553 = vmatpush1.msra.mxu0 0.0
  %1554 = vmatprep.subr.mxu0 0.0
  %1555 = vmatpush1.msra.mxu0 0.0
  %1556 = vmatprep.subr.mxu0 0.0
  %1557 = vmatpush1.msra.mxu0 0.0
  %1558 = vmatprep.subr.mxu0 0.0
  %1559 = vmatpush1.msra.mxu0 0.0
  %1560 = vmatprep.subr.mxu0 0.0
  %1561 = vmatpush1.msra.mxu0 0.0
  %1562 = vmatprep.subr.mxu0 0.0
  %1563 = vmatpush1.msra.mxu0 0.0
  %1564 = vmatprep.subr.mxu0 0.0
  %1565 = vmatpush1.msra.mxu0 0.0
  %1566 = vmatprep.subr.mxu0 0.0
  %1567 = vmatpush1.msra.mxu0 0.0
  %1568 = vmatprep.subr.mxu0 0.0
  %1569 = vmatpush1.msra.mxu0 0.0
  %1570 = vmatprep.mubr.f32.mxu0 0.0
  %1571 = vmatmul.mubr.f32.gmra.mrb[0].mxu0 %v1504
  %v1572 = vpop.f32.mrb[0].mxu0
  %v1573 = vadd.f32 0.0, %v1572
  %v1574 = vpop.f32.mrb[0].mxu0
  %1575 = vdwg.mxu0
  %v1577 = vrot.slane %v1573, 4
  %v1579 = vadd.f32 %v1496, %v1577
  %v1580 = vxor.u32 %v1495, 2147483648
  %v1581 = vmul.f32 %v1580, 1.442695
  %v1582 = vpow.pop %v1581
  %v1583 = vadd.f32 %v1582, 1.0
  %v1584 = vrcp.pop %v1583
  %v1585 = vmul.f32 1.0, %v1584
  %v1586 = vtanh.pop %v1495
  %v1588 = vrot.slane %v1369, 6
  %v1590 = vmul.f32 %v1585, %v1588
  %1592 = vrot.lane.b32.xlu0 %v1586, 32
  %v1593 = vpop.permute.xlu0 %1592
  %v1595 = vmul.f32 %v1585, %v1593
  %1597 = vrot.lane.b32.xlu0 %v1595, 32
  %v1598 = vpop.permute.xlu0 %1597
  %v1600 = vadd.f32 %v1590, %v1598
  %v1601 = vtanh.pop %v1600
  %1603 = vrot.lane.b32.xlu0 %v1601, 32
  %v1604 = vpop.permute.xlu0 %1603
  %v1606 = vmul.f32 %v1585, %v1604
  %v1607 = vxor.u32 %v1579, 2147483648
  %v1608 = vmul.f32 %v1607, 1.442695
  %v1609 = vpow.pop %v1608
  %v1610 = vadd.f32 %v1609, 1.0
  %v1611 = vrcp.pop %v1610
  %v1612 = vmul.f32 1.0, %v1611
  %v1613 = vtanh.pop %v1579
  %v1615 = vrot.slane %v1396, 2
  %v1617 = vmul.f32 %v1612, %v1615
  %1619 = vrot.lane.b32.xlu0 %v1613, 32
  %v1620 = vpop.permute.xlu0 %1619
  %v1622 = vmul.f32 %v1612, %v1620
  %1624 = vrot.lane.b32.xlu0 %v1622, 32
  %v1625 = vpop.permute.xlu0 %1624
  %v1627 = vadd.f32 %v1617, %v1625
  %v1628 = vtanh.pop %v1627
  %1630 = vrot.lane.b32.xlu0 %v1628, 32
  %v1631 = vpop.permute.xlu0 %1630
  %v1633 = vmul.f32 %v1612, %v1631
  %1635 = vrot.lane.b32.xlu0 %v1606, 64
  %v1636 = vpop.permute.xlu0 %1635
  %1638 = vst.msk [vmem:[#allocation3 + $0x3] sm:$0x4] %vm700, %v1636
  %1640 = vrot.lane.b32.xlu0 %v1633, 96
  %v1641 = vpop.permute.xlu0 %1640
  %1643 = vst.msk [vmem:[#allocation3 - $0x2] sm:$0x10] %vm706, %v1641
  %1644 = vst.msk [vmem:[#allocation3 + $0xa] sm:$0x8] %vm708, %v1636
  %1645 = vst.msk [vmem:[#allocation3 + $0x5] sm:$0x20] %vm710, %v1641
  %v1646 = vld [vmem:[#allocation2 + $0x10] sm:$0x30]
  %v1647 = vld [vmem:[%s5] sm:$0xff]
  %v1648 = vld [vmem:[%s5 + $0x8] sm:$0xff]
  %v1649 = vld [vmem:[%s5 + $0x10] sm:$0xff]
  %v1650 = vld [vmem:[%s5 + $0x18] sm:$0xff]
  %v1651 = vrot.slane %v1606, 2
  %1652 = vrot.lane.b32.xlu0 %v1651, 64
  %v1653 = vpop.permute.xlu0 %1652
  %v1654 = vsel %vm167, %v1653, 0
  %1656 = vmatprep.subr.mxu0 0.0
  %1657 = vmatpush1.msra.mxu0 %v1647
  %1658 = vmatprep.subr.mxu0 0.0
  %1659 = vmatpush1.msra.mxu0 %v1648
  %1660 = vmatprep.subr.mxu0 0.0
  %1661 = vmatpush1.msra.mxu0 %v1649
  %1662 = vmatprep.subr.mxu0 0.0
  %1663 = vmatpush1.msra.mxu0 %v1650
  %1664 = vmatprep.subr.mxu0 0.0
  %1665 = vmatpush1.msra.mxu0 0.0
  %1666 = vmatprep.subr.mxu0 0.0
  %1667 = vmatpush1.msra.mxu0 0.0
  %1668 = vmatprep.subr.mxu0 0.0
  %1669 = vmatpush1.msra.mxu0 0.0
  %1670 = vmatprep.subr.mxu0 0.0
  %1671 = vmatpush1.msra.mxu0 0.0
  %1672 = vmatprep.subr.mxu0 0.0
  %1673 = vmatpush1.msra.mxu0 0.0
  %1674 = vmatprep.subr.mxu0 0.0
  %1675 = vmatpush1.msra.mxu0 0.0
  %1676 = vmatprep.subr.mxu0 0.0
  %1677 = vmatpush1.msra.mxu0 0.0
  %1678 = vmatprep.subr.mxu0 0.0
  %1679 = vmatpush1.msra.mxu0 0.0
  %1680 = vmatprep.subr.mxu0 0.0
  %1681 = vmatpush1.msra.mxu0 0.0
  %1682 = vmatprep.subr.mxu0 0.0
  %1683 = vmatpush1.msra.mxu0 0.0
  %1684 = vmatprep.subr.mxu0 0.0
  %1685 = vmatpush1.msra.mxu0 0.0
  %1686 = vmatprep.subr.mxu0 0.0
  %1687 = vmatpush1.msra.mxu0 0.0
  %1688 = vmatprep.subr.mxu0 0.0
  %1689 = vmatpush1.msra.mxu0 0.0
  %1690 = vmatprep.subr.mxu0 0.0
  %1691 = vmatpush1.msra.mxu0 0.0
  %1692 = vmatprep.subr.mxu0 0.0
  %1693 = vmatpush1.msra.mxu0 0.0
  %1694 = vmatprep.subr.mxu0 0.0
  %1695 = vmatpush1.msra.mxu0 0.0
  %1696 = vmatprep.subr.mxu0 0.0
  %1697 = vmatpush1.msra.mxu0 0.0
  %1698 = vmatprep.subr.mxu0 0.0
  %1699 = vmatpush1.msra.mxu0 0.0
  %1700 = vmatprep.subr.mxu0 0.0
  %1701 = vmatpush1.msra.mxu0 0.0
  %1702 = vmatprep.subr.mxu0 0.0
  %1703 = vmatpush1.msra.mxu0 0.0
  %1704 = vmatprep.subr.mxu0 0.0
  %1705 = vmatpush1.msra.mxu0 0.0
  %1706 = vmatprep.subr.mxu0 0.0
  %1707 = vmatpush1.msra.mxu0 0.0
  %1708 = vmatprep.subr.mxu0 0.0
  %1709 = vmatpush1.msra.mxu0 0.0
  %1710 = vmatprep.subr.mxu0 0.0
  %1711 = vmatpush1.msra.mxu0 0.0
  %1712 = vmatprep.subr.mxu0 0.0
  %1713 = vmatpush1.msra.mxu0 0.0
  %1714 = vmatprep.subr.mxu0 0.0
  %1715 = vmatpush1.msra.mxu0 0.0
  %1716 = vmatprep.subr.mxu0 0.0
  %1717 = vmatpush1.msra.mxu0 0.0
  %1718 = vmatprep.subr.mxu0 0.0
  %1719 = vmatpush1.msra.mxu0 0.0
  %1720 = vmatprep.mubr.f32.mxu0 0.0
  %1721 = vmatmul.mubr.f32.gmra.mrb[0].mxu0 %v1654
  %v1722 = vpop.f32.mrb[0].mxu0
  %v1723 = vadd.f32 0.0, %v1722
  %v1724 = vpop.f32.mrb[0].mxu0
  %1725 = vdwg.mxu0
  %v1727 = vrot.slane %v1723, 4
  %v1729 = vadd.f32 %v1646, %v1727
  %v1730 = vld [vmem:[#allocation2 + $0x8] sm:$0xc]
  %v1731 = vld [vmem:[%s6] sm:$0xff]
  %v1732 = vld [vmem:[%s6 + $0x8] sm:$0xff]
  %v1733 = vld [vmem:[%s6 + $0x10] sm:$0xff]
  %v1734 = vld [vmem:[%s6 + $0x18] sm:$0xff]
  %v1735 = vrot.slane %v1633, 4
  %1736 = vrot.lane.b32.xlu0 %v1735, 64
  %v1737 = vpop.permute.xlu0 %1736
  %v1738 = vsel %vm167, %v1737, 0
  %1740 = vmatprep.subr.mxu0 0.0
  %1741 = vmatpush1.msra.mxu0 %v1731
  %1742 = vmatprep.subr.mxu0 0.0
  %1743 = vmatpush1.msra.mxu0 %v1732
  %1744 = vmatprep.subr.mxu0 0.0
  %1745 = vmatpush1.msra.mxu0 %v1733
  %1746 = vmatprep.subr.mxu0 0.0
  %1747 = vmatpush1.msra.mxu0 %v1734
  %1748 = vmatprep.subr.mxu0 0.0
  %1749 = vmatpush1.msra.mxu0 0.0
  %1750 = vmatprep.subr.mxu0 0.0
  %1751 = vmatpush1.msra.mxu0 0.0
  %1752 = vmatprep.subr.mxu0 0.0
  %1753 = vmatpush1.msra.mxu0 0.0
  %1754 = vmatprep.subr.mxu0 0.0
  %1755 = vmatpush1.msra.mxu0 0.0
  %1756 = vmatprep.subr.mxu0 0.0
  %1757 = vmatpush1.msra.mxu0 0.0
  %1758 = vmatprep.subr.mxu0 0.0
  %1759 = vmatpush1.msra.mxu0 0.0
  %1760 = vmatprep.subr.mxu0 0.0
  %1761 = vmatpush1.msra.mxu0 0.0
  %1762 = vmatprep.subr.mxu0 0.0
  %1763 = vmatpush1.msra.mxu0 0.0
  %1764 = vmatprep.subr.mxu0 0.0
  %1765 = vmatpush1.msra.mxu0 0.0
  %1766 = vmatprep.subr.mxu0 0.0
  %1767 = vmatpush1.msra.mxu0 0.0
  %1768 = vmatprep.subr.mxu0 0.0
  %1769 = vmatpush1.msra.mxu0 0.0
  %1770 = vmatprep.subr.mxu0 0.0
  %1771 = vmatpush1.msra.mxu0 0.0
  %1772 = vmatprep.subr.mxu0 0.0
  %1773 = vmatpush1.msra.mxu0 0.0
  %1774 = vmatprep.subr.mxu0 0.0
  %1775 = vmatpush1.msra.mxu0 0.0
  %1776 = vmatprep.subr.mxu0 0.0
  %1777 = vmatpush1.msra.mxu0 0.0
  %1778 = vmatprep.subr.mxu0 0.0
  %1779 = vmatpush1.msra.mxu0 0.0
  %1780 = vmatprep.subr.mxu0 0.0
  %1781 = vmatpush1.msra.mxu0 0.0
  %1782 = vmatprep.subr.mxu0 0.0
  %1783 = vmatpush1.msra.mxu0 0.0
  %1784 = vmatprep.subr.mxu0 0.0
  %1785 = vmatpush1.msra.mxu0 0.0
  %1786 = vmatprep.subr.mxu0 0.0
  %1787 = vmatpush1.msra.mxu0 0.0
  %1788 = vmatprep.subr.mxu0 0.0
  %1789 = vmatpush1.msra.mxu0 0.0
  %1790 = vmatprep.subr.mxu0 0.0
  %1791 = vmatpush1.msra.mxu0 0.0
  %1792 = vmatprep.subr.mxu0 0.0
  %1793 = vmatpush1.msra.mxu0 0.0
  %1794 = vmatprep.subr.mxu0 0.0
  %1795 = vmatpush1.msra.mxu0 0.0
  %1796 = vmatprep.subr.mxu0 0.0
  %1797 = vmatpush1.msra.mxu0 0.0
  %1798 = vmatprep.subr.mxu0 0.0
  %1799 = vmatpush1.msra.mxu0 0.0
  %1800 = vmatprep.subr.mxu0 0.0
  %1801 = vmatpush1.msra.mxu0 0.0
  %1802 = vmatprep.subr.mxu0 0.0
  %1803 = vmatpush1.msra.mxu0 0.0
  %1804 = vmatprep.mubr.f32.mxu0 0.0
  %1805 = vmatmul.mubr.f32.gmra.mrb[0].mxu0 %v1738
  %v1806 = vpop.f32.mrb[0].mxu0
  %v1807 = vadd.f32 0.0, %v1806
  %v1808 = vpop.f32.mrb[0].mxu0
  %1809 = vdwg.mxu0
  %v1811 = vrot.slane %v1807, 6
  %v1813 = vadd.f32 %v1730, %v1811
  %v1814 = vxor.u32 %v1729, 2147483648
  %v1815 = vmul.f32 %v1814, 1.442695
  %v1816 = vpow.pop %v1815
  %v1817 = vadd.f32 %v1816, 1.0
  %v1818 = vrcp.pop %v1817
  %v1819 = vmul.f32 1.0, %v1818
  %v1820 = vtanh.pop %v1729
  %v1822 = vrot.slane %v1600, 6
  %v1824 = vmul.f32 %v1819, %v1822
  %1826 = vrot.lane.b32.xlu0 %v1820, 32
  %v1827 = vpop.permute.xlu0 %1826
  %v1829 = vmul.f32 %v1819, %v1827
  %1831 = vrot.lane.b32.xlu0 %v1829, 32
  %v1832 = vpop.permute.xlu0 %1831
  %v1834 = vadd.f32 %v1824, %v1832
  %v1835 = vtanh.pop %v1834
  %1837 = vrot.lane.b32.xlu0 %v1835, 32
  %v1838 = vpop.permute.xlu0 %1837
  %v1840 = vmul.f32 %v1819, %v1838
  %v1841 = vxor.u32 %v1813, 2147483648
  %v1842 = vmul.f32 %v1841, 1.442695
  %v1843 = vpow.pop %v1842
  %v1844 = vadd.f32 %v1843, 1.0
  %v1845 = vrcp.pop %v1844
  %v1846 = vmul.f32 1.0, %v1845
  %v1847 = vtanh.pop %v1813
  %v1849 = vrot.slane %v1627, 2
  %v1851 = vmul.f32 %v1846, %v1849
  %1853 = vrot.lane.b32.xlu0 %v1847, 32
  %v1854 = vpop.permute.xlu0 %1853
  %v1856 = vmul.f32 %v1846, %v1854
  %1858 = vrot.lane.b32.xlu0 %v1856, 32
  %v1859 = vpop.permute.xlu0 %1858
  %v1861 = vadd.f32 %v1851, %v1859
  %v1862 = vtanh.pop %v1861
  %1864 = vrot.lane.b32.xlu0 %v1862, 32
  %v1865 = vpop.permute.xlu0 %1864
  %v1867 = vmul.f32 %v1846, %v1865
  %1869 = vrot.lane.b32.xlu0 %v1840, 64
  %v1870 = vpop.permute.xlu0 %1869
  %1872 = vst.msk [vmem:[#allocation3 + $0x2] sm:$0x10] %vm938, %v1870
  %1874 = vrot.lane.b32.xlu0 %v1867, 96
  %v1875 = vpop.permute.xlu0 %1874
  %1877 = vst.msk [vmem:[#allocation3 - $0x1] sm:$0x4] %vm944, %v1875
  %1878 = vst.msk [vmem:[#allocation3 + $0x9] sm:$0x20] %vm946, %v1870
  %1879 = vst.msk [vmem:[#allocation3 + $0x6] sm:$0x8] %vm948, %v1875
  %v1880 = vld [vmem:[#allocation2 + $0x10] sm:$0xc0]
  %v1881 = vld [vmem:[%s5] sm:$0xff]
  %v1882 = vld [vmem:[%s5 + $0x8] sm:$0xff]
  %v1883 = vld [vmem:[%s5 + $0x10] sm:$0xff]
  %v1884 = vld [vmem:[%s5 + $0x18] sm:$0xff]
  %v1885 = vrot.slane %v1840, 4
  %1886 = vrot.lane.b32.xlu0 %v1885, 64
  %v1887 = vpop.permute.xlu0 %1886
  %v1888 = vsel %vm167, %v1887, 0
  %1890 = vmatprep.subr.mxu0 0.0
  %1891 = vmatpush1.msra.mxu0 %v1881
  %1892 = vmatprep.subr.mxu0 0.0
  %1893 = vmatpush1.msra.mxu0 %v1882
  %1894 = vmatprep.subr.mxu0 0.0
  %1895 = vmatpush1.msra.mxu0 %v1883
  %1896 = vmatprep.subr.mxu0 0.0
  %1897 = vmatpush1.msra.mxu0 %v1884
  %1898 = vmatprep.subr.mxu0 0.0
  %1899 = vmatpush1.msra.mxu0 0.0
  %1900 = vmatprep.subr.mxu0 0.0
  %1901 = vmatpush1.msra.mxu0 0.0
  %1902 = vmatprep.subr.mxu0 0.0
  %1903 = vmatpush1.msra.mxu0 0.0
  %1904 = vmatprep.subr.mxu0 0.0
  %1905 = vmatpush1.msra.mxu0 0.0
  %1906 = vmatprep.subr.mxu0 0.0
  %1907 = vmatpush1.msra.mxu0 0.0
  %1908 = vmatprep.subr.mxu0 0.0
  %1909 = vmatpush1.msra.mxu0 0.0
  %1910 = vmatprep.subr.mxu0 0.0
  %1911 = vmatpush1.msra.mxu0 0.0
  %1912 = vmatprep.subr.mxu0 0.0
  %1913 = vmatpush1.msra.mxu0 0.0
  %1914 = vmatprep.subr.mxu0 0.0
  %1915 = vmatpush1.msra.mxu0 0.0
  %1916 = vmatprep.subr.mxu0 0.0
  %1917 = vmatpush1.msra.mxu0 0.0
  %1918 = vmatprep.subr.mxu0 0.0
  %1919 = vmatpush1.msra.mxu0 0.0
  %1920 = vmatprep.subr.mxu0 0.0
  %1921 = vmatpush1.msra.mxu0 0.0
  %1922 = vmatprep.subr.mxu0 0.0
  %1923 = vmatpush1.msra.mxu0 0.0
  %1924 = vmatprep.subr.mxu0 0.0
  %1925 = vmatpush1.msra.mxu0 0.0
  %1926 = vmatprep.subr.mxu0 0.0
  %1927 = vmatpush1.msra.mxu0 0.0
  %1928 = vmatprep.subr.mxu0 0.0
  %1929 = vmatpush1.msra.mxu0 0.0
  %1930 = vmatprep.subr.mxu0 0.0
  %1931 = vmatpush1.msra.mxu0 0.0
  %1932 = vmatprep.subr.mxu0 0.0
  %1933 = vmatpush1.msra.mxu0 0.0
  %1934 = vmatprep.subr.mxu0 0.0
  %1935 = vmatpush1.msra.mxu0 0.0
  %1936 = vmatprep.subr.mxu0 0.0
  %1937 = vmatpush1.msra.mxu0 0.0
  %1938 = vmatprep.subr.mxu0 0.0
  %1939 = vmatpush1.msra.mxu0 0.0
  %1940 = vmatprep.subr.mxu0 0.0
  %1941 = vmatpush1.msra.mxu0 0.0
  %1942 = vmatprep.subr.mxu0 0.0
  %1943 = vmatpush1.msra.mxu0 0.0
  %1944 = vmatprep.subr.mxu0 0.0
  %1945 = vmatpush1.msra.mxu0 0.0
  %1946 = vmatprep.subr.mxu0 0.0
  %1947 = vmatpush1.msra.mxu0 0.0
  %1948 = vmatprep.subr.mxu0 0.0
  %1949 = vmatpush1.msra.mxu0 0.0
  %1950 = vmatprep.subr.mxu0 0.0
  %1951 = vmatpush1.msra.mxu0 0.0
  %1952 = vmatprep.subr.mxu0 0.0
  %1953 = vmatpush1.msra.mxu0 0.0
  %1954 = vmatprep.mubr.f32.mxu0 0.0
  %1955 = vmatmul.mubr.f32.gmra.mrb[0].mxu0 %v1888
  %v1956 = vpop.f32.mrb[0].mxu0
  %v1957 = vadd.f32 0.0, %v1956
  %v1958 = vpop.f32.mrb[0].mxu0
  %1959 = vdwg.mxu0
  %v1961 = vrot.slane %v1957, 2
  %v1963 = vadd.f32 %v1880, %v1961
  %v1964 = vld [vmem:[#allocation2 + $0x8] sm:$0x3]
  %v1965 = vld [vmem:[%s6] sm:$0xff]
  %v1966 = vld [vmem:[%s6 + $0x8] sm:$0xff]
  %v1967 = vld [vmem:[%s6 + $0x10] sm:$0xff]
  %v1968 = vld [vmem:[%s6 + $0x18] sm:$0xff]
  %v1969 = vrot.slane %v1867, 2
  %1970 = vrot.lane.b32.xlu0 %v1969, 64
  %v1971 = vpop.permute.xlu0 %1970
  %v1972 = vsel %vm167, %v1971, 0
  %1974 = vmatprep.subr.mxu0 0.0
  %1975 = vmatpush1.msra.mxu0 %v1965
  %1976 = vmatprep.subr.mxu0 0.0
  %1977 = vmatpush1.msra.mxu0 %v1966
  %1978 = vmatprep.subr.mxu0 0.0
  %1979 = vmatpush1.msra.mxu0 %v1967
  %1980 = vmatprep.subr.mxu0 0.0
  %1981 = vmatpush1.msra.mxu0 %v1968
  %1982 = vmatprep.subr.mxu0 0.0
  %1983 = vmatpush1.msra.mxu0 0.0
  %1984 = vmatprep.subr.mxu0 0.0
  %1985 = vmatpush1.msra.mxu0 0.0
  %1986 = vmatprep.subr.mxu0 0.0
  %1987 = vmatpush1.msra.mxu0 0.0
  %1988 = vmatprep.subr.mxu0 0.0
  %1989 = vmatpush1.msra.mxu0 0.0
  %1990 = vmatprep.subr.mxu0 0.0
  %1991 = vmatpush1.msra.mxu0 0.0
  %1992 = vmatprep.subr.mxu0 0.0
  %1993 = vmatpush1.msra.mxu0 0.0
  %1994 = vmatprep.subr.mxu0 0.0
  %1995 = vmatpush1.msra.mxu0 0.0
  %1996 = vmatprep.subr.mxu0 0.0
  %1997 = vmatpush1.msra.mxu0 0.0
  %1998 = vmatprep.subr.mxu0 0.0
  %1999 = vmatpush1.msra.mxu0 0.0
  %2000 = vmatprep.subr.mxu0 0.0
  %2001 = vmatpush1.msra.mxu0 0.0
  %2002 = vmatprep.subr.mxu0 0.0
  %2003 = vmatpush1.msra.mxu0 0.0
  %2004 = vmatprep.subr.mxu0 0.0
  %2005 = vmatpush1.msra.mxu0 0.0
  %2006 = vmatprep.subr.mxu0 0.0
  %2007 = vmatpush1.msra.mxu0 0.0
  %2008 = vmatprep.subr.mxu0 0.0
  %2009 = vmatpush1.msra.mxu0 0.0
  %2010 = vmatprep.subr.mxu0 0.0
  %2011 = vmatpush1.msra.mxu0 0.0
  %2012 = vmatprep.subr.mxu0 0.0
  %2013 = vmatpush1.msra.mxu0 0.0
  %2014 = vmatprep.subr.mxu0 0.0
  %2015 = vmatpush1.msra.mxu0 0.0
  %2016 = vmatprep.subr.mxu0 0.0
  %2017 = vmatpush1.msra.mxu0 0.0
  %2018 = vmatprep.subr.mxu0 0.0
  %2019 = vmatpush1.msra.mxu0 0.0
  %2020 = vmatprep.subr.mxu0 0.0
  %2021 = vmatpush1.msra.mxu0 0.0
  %2022 = vmatprep.subr.mxu0 0.0
  %2023 = vmatpush1.msra.mxu0 0.0
  %2024 = vmatprep.subr.mxu0 0.0
  %2025 = vmatpush1.msra.mxu0 0.0
  %2026 = vmatprep.subr.mxu0 0.0
  %2027 = vmatpush1.msra.mxu0 0.0
  %2028 = vmatprep.subr.mxu0 0.0
  %2029 = vmatpush1.msra.mxu0 0.0
  %2030 = vmatprep.subr.mxu0 0.0
  %2031 = vmatpush1.msra.mxu0 0.0
  %2032 = vmatprep.subr.mxu0 0.0
  %2033 = vmatpush1.msra.mxu0 0.0
  %2034 = vmatprep.subr.mxu0 0.0
  %2035 = vmatpush1.msra.mxu0 0.0
  %2036 = vmatprep.subr.mxu0 0.0
  %2037 = vmatpush1.msra.mxu0 0.0
  %2038 = vmatprep.mubr.f32.mxu0 0.0
  %2039 = vmatmul.mubr.f32.gmra.mrb[0].mxu0 %v1972
  %v2040 = vpop.f32.mrb[0].mxu0
  %v2041 = vadd.f32 0.0, %v2040
  %v2042 = vpop.f32.mrb[0].mxu0
  %2043 = vdwg.mxu0
  %v2044 = vadd.f32 %v1964, %v2041
  %v2045 = vxor.u32 %v1963, 2147483648
  %v2046 = vmul.f32 %v2045, 1.442695
  %v2047 = vpow.pop %v2046
  %v2048 = vadd.f32 %v2047, 1.0
  %v2049 = vrcp.pop %v2048
  %v2050 = vmul.f32 1.0, %v2049
  %v2051 = vtanh.pop %v1963
  %v2053 = vrot.slane %v1834, 6
  %v2055 = vmul.f32 %v2050, %v2053
  %2057 = vrot.lane.b32.xlu0 %v2051, 32
  %v2058 = vpop.permute.xlu0 %2057
  %v2060 = vmul.f32 %v2050, %v2058
  %2062 = vrot.lane.b32.xlu0 %v2060, 32
  %v2063 = vpop.permute.xlu0 %2062
  %v2065 = vadd.f32 %v2055, %v2063
  %v2066 = vtanh.pop %v2065
  %2068 = vrot.lane.b32.xlu0 %v2066, 32
  %v2069 = vpop.permute.xlu0 %2068
  %v2071 = vmul.f32 %v2050, %v2069
  %v2072 = vxor.u32 %v2044, 2147483648
  %v2073 = vmul.f32 %v2072, 1.442695
  %v2074 = vpow.pop %v2073
  %v2075 = vadd.f32 %v2074, 1.0
  %v2076 = vrcp.pop %v2075
  %v2077 = vmul.f32 1.0, %v2076
  %v2078 = vtanh.pop %v2044
  %v2080 = vrot.slane %v1861, 2
  %v2082 = vmul.f32 %v2077, %v2080
  %2084 = vrot.lane.b32.xlu0 %v2078, 32
  %v2085 = vpop.permute.xlu0 %2084
  %v2087 = vmul.f32 %v2077, %v2085
  %2089 = vrot.lane.b32.xlu0 %v2087, 32
  %v2090 = vpop.permute.xlu0 %2089
  %v2092 = vadd.f32 %v2082, %v2090
  %v2093 = vtanh.pop %v2092
  %2095 = vrot.lane.b32.xlu0 %v2093, 32
  %v2096 = vpop.permute.xlu0 %2095
  %v2098 = vmul.f32 %v2077, %v2096
  %2100 = vrot.lane.b32.xlu0 %v2071, 64
  %v2101 = vpop.permute.xlu0 %2100
  %2103 = vst.msk [vmem:[#allocation3 + $0x1] sm:$0x40] %vm1173, %v2101
  %2105 = vrot.lane.b32.xlu0 %v2098, 96
  %v2106 = vpop.permute.xlu0 %2105
  %2108 = vst.msk [vmem:[#allocation3] sm:$0x1] %vm1179, %v2106
  %2109 = vst.msk [vmem:[#allocation3 + $0x8] sm:$0x80] %vm1181, %v2101
  %2110 = vst.msk [vmem:[#allocation3 + $0x7] sm:$0x2] %vm1183, %v2106
  %v2111 = vld [vmem:[#allocation3] sm:$0xff]
  %v2112 = vld [vmem:[#allocation3 + $0x8] sm:$0xff]
  %v2113 = vld [vmem:[%s7] sm:$0xff]
  %v2114 = vld [vmem:[%s7 + $0x8] sm:$0xff]
  %v2115 = vld [vmem:[%s7 + $0x10] sm:$0xff]
  %v2116 = vld [vmem:[%s7 + $0x18] sm:$0xff]
  %v2117 = vld [vmem:[%s7 + $0x20] sm:$0xff]
  %v2118 = vld [vmem:[%s7 + $0x28] sm:$0xff]
  %v2119 = vld [vmem:[%s7 + $0x30] sm:$0xff]
  %v2120 = vld [vmem:[%s7 + $0x38] sm:$0xff]
  %v2121 = vld [vmem:[%s7 + $0x40] sm:$0xff]
  %v2122 = vld [vmem:[%s7 + $0x48] sm:$0xff]
  %v2123 = vld [vmem:[%s7 + $0x50] sm:$0xff]
  %v2124 = vld [vmem:[%s7 + $0x58] sm:$0xff]
  %v2125 = vld [vmem:[%s7 + $0x60] sm:$0xff]
  %v2126 = vld [vmem:[%s7 + $0x68] sm:$0xff]
  %v2127 = vld [vmem:[%s7 + $0x70] sm:$0xff]
  %v2128 = vld [vmem:[%s7 + $0x78] sm:$0xff]
  %v2129 = vld [vmem:[%s8] sm:$0x3]
  %v2131 = vlaneseq
  %v2132 = vshrl.u32 %v2131, 7
  %v2133 = vsub.s32 0, %v2132
  %v2134 = vrot.slane %v2129, %v2133
  %v2135 = vlaneseq
  %v2136 = vshrl.u32 %v2135, 7
  %v2137 = vsub.s32 1, %v2136
  %v2138 = vrot.slane %v2129, %v2137
  %vm2141 = vcmask 523264
  %v2143 = vsel %vm2141, %v2111, 0
  %v2146 = vsel %vm2141, %v2112, 0
  %2148 = vmatprep.subr.mxu0 %v2114
  %2149 = vmatpush1.msra.mxu0 %v2113
  %2150 = vmatprep.subr.mxu0 %v2116
  %2151 = vmatpush1.msra.mxu0 %v2115
  %2152 = vmatprep.subr.mxu0 %v2118
  %2153 = vmatpush1.msra.mxu0 %v2117
  %2154 = vmatprep.subr.mxu0 %v2120
  %2155 = vmatpush1.msra.mxu0 %v2119
  %2156 = vmatprep.subr.mxu0 %v2122
  %2157 = vmatpush1.msra.mxu0 %v2121
  %2158 = vmatprep.subr.mxu0 %v2124
  %2159 = vmatpush1.msra.mxu0 %v2123
  %2160 = vmatprep.subr.mxu0 %v2126
  %2161 = vmatpush1.msra.mxu0 %v2125
  %2162 = vmatprep.subr.mxu0 %v2128
  %2163 = vmatpush1.msra.mxu0 %v2127
  %2164 = vmatprep.subr.mxu0 0.0
  %2165 = vmatpush1.msra.mxu0 0.0
  %2166 = vmatprep.subr.mxu0 0.0
  %2167 = vmatpush1.msra.mxu0 0.0
  %2168 = vmatprep.subr.mxu0 0.0
  %2169 = vmatpush1.msra.mxu0 0.0
  %2170 = vmatprep.subr.mxu0 0.0
  %2171 = vmatpush1.msra.mxu0 0.0
  %2172 = vmatprep.subr.mxu0 0.0
  %2173 = vmatpush1.msra.mxu0 0.0
  %2174 = vmatprep.subr.mxu0 0.0
  %2175 = vmatpush1.msra.mxu0 0.0
  %2176 = vmatprep.subr.mxu0 0.0
  %2177 = vmatpush1.msra.mxu0 0.0
  %2178 = vmatprep.subr.mxu0 0.0
  %2179 = vmatpush1.msra.mxu0 0.0
  %2180 = vmatprep.subr.mxu0 0.0
  %2181 = vmatpush1.msra.mxu0 0.0
  %2182 = vmatprep.subr.mxu0 0.0
  %2183 = vmatpush1.msra.mxu0 0.0
  %2184 = vmatprep.subr.mxu0 0.0
  %2185 = vmatpush1.msra.mxu0 0.0
  %2186 = vmatprep.subr.mxu0 0.0
  %2187 = vmatpush1.msra.mxu0 0.0
  %2188 = vmatprep.subr.mxu0 0.0
  %2189 = vmatpush1.msra.mxu0 0.0
  %2190 = vmatprep.subr.mxu0 0.0
  %2191 = vmatpush1.msra.mxu0 0.0
  %2192 = vmatprep.subr.mxu0 0.0
  %2193 = vmatpush1.msra.mxu0 0.0
  %2194 = vmatprep.subr.mxu0 0.0
  %2195 = vmatpush1.msra.mxu0 0.0
  %2196 = vmatprep.subr.mxu0 0.0
  %2197 = vmatpush1.msra.mxu0 0.0
  %2198 = vmatprep.subr.mxu0 0.0
  %2199 = vmatpush1.msra.mxu0 0.0
  %2200 = vmatprep.subr.mxu0 0.0
  %2201 = vmatpush1.msra.mxu0 0.0
  %2202 = vmatprep.subr.mxu0 0.0
  %2203 = vmatpush1.msra.mxu0 0.0
  %2204 = vmatprep.subr.mxu0 0.0
  %2205 = vmatpush1.msra.mxu0 0.0
  %2206 = vmatprep.subr.mxu0 0.0
  %2207 = vmatpush1.msra.mxu0 0.0
  %2208 = vmatprep.subr.mxu0 0.0
  %2209 = vmatpush1.msra.mxu0 0.0
  %2210 = vmatprep.subr.mxu0 0.0
  %2211 = vmatpush1.msra.mxu0 0.0
  %2212 = vmatprep.mubr.f32.mxu0 0.0
  %2213 = vmatmul.mubr.f32.gmra.mrb[0].mxu0 %v2143
  %v2214 = vpop.f32.mrb[0].mxu0
  %v2215 = vadd.f32 %v2134, %v2214
  %v2216 = vpop.f32.mrb[0].mxu0
  %v2217 = vadd.f32 %v2138, %v2216
  %2218 = vmatprep.mubr.f32.mxu0 0.0
  %2219 = vmatmul.mubr.f32.gmra.mrb[0].mxu0 %v2146
  %v2220 = vpop.f32.mrb[0].mxu0
  %v2221 = vadd.f32 %v2134, %v2220
  %v2222 = vpop.f32.mrb[0].mxu0
  %v2223 = vadd.f32 %v2138, %v2222
  %2224 = vdwg.mxu0
  %v2225 = vld [vmem:[%s1] sm:$0x1]
  %v2226 = vlaneseq
  %v2227 = vshrl.u32 %v2226, 7
  %v2228 = vsub.s32 0, %v2227
  %v2229 = vrot.slane %v2225, %v2228
  %2231 = vrot.lane.b32.xlu0 %v2215, 64
  %v2232 = vpop.permute.xlu0 %2231
  %v2233 = vsel %vm2141, %v2215, 0
  %v2235 = vsel %vm2141, %v2232, 0
  %2237 = vmatprep.subr.mxu0 0.0
  %2238 = vmatpush1.xpose.msra.mxu0 %v2235
  %2239 = vmatprep.subr.mxu0 0.0
  %2240 = vmatpush1.xpose.msra.mxu0 0.0
  %2241 = vmatprep.subr.mxu0 0.0
  %2242 = vmatpush1.xpose.msra.mxu0 0.0
  %2243 = vmatprep.subr.mxu0 0.0
  %2244 = vmatpush1.xpose.msra.mxu0 0.0
  %2245 = vmatprep.subr.mxu0 0.0
  %2246 = vmatpush1.xpose.msra.mxu0 0.0
  %2247 = vmatprep.subr.mxu0 0.0
  %2248 = vmatpush1.xpose.msra.mxu0 0.0
  %2249 = vmatprep.subr.mxu0 0.0
  %2250 = vmatpush1.xpose.msra.mxu0 0.0
  %2251 = vmatprep.subr.mxu0 0.0
  %2252 = vmatpush1.xpose.msra.mxu0 0.0
  %2253 = vmatprep.subr.mxu0 0.0
  %2254 = vmatpush1.xpose.msra.mxu0 0.0
  %2255 = vmatprep.subr.mxu0 0.0
  %2256 = vmatpush1.xpose.msra.mxu0 0.0
  %2257 = vmatprep.subr.mxu0 0.0
  %2258 = vmatpush1.xpose.msra.mxu0 0.0
  %2259 = vmatprep.subr.mxu0 0.0
  %2260 = vmatpush1.xpose.msra.mxu0 0.0
  %2261 = vmatprep.subr.mxu0 0.0
  %2262 = vmatpush1.xpose.msra.mxu0 0.0
  %2263 = vmatprep.subr.mxu0 0.0
  %2264 = vmatpush1.xpose.msra.mxu0 0.0
  %2265 = vmatprep.subr.mxu0 0.0
  %2266 = vmatpush1.xpose.msra.mxu0 0.0
  %2267 = vmatprep.subr.mxu0 0.0
  %2268 = vmatpush1.xpose.msra.mxu0 0.0
  %2269 = vmatprep.subr.mxu0 0.0
  %2270 = vmatpush1.xpose.msra.mxu0 0.0
  %2271 = vmatprep.subr.mxu0 0.0
  %2272 = vmatpush1.xpose.msra.mxu0 0.0
  %2273 = vmatprep.subr.mxu0 0.0
  %2274 = vmatpush1.xpose.msra.mxu0 0.0
  %2275 = vmatprep.subr.mxu0 0.0
  %2276 = vmatpush1.xpose.msra.mxu0 0.0
  %2277 = vmatprep.subr.mxu0 0.0
  %2278 = vmatpush1.xpose.msra.mxu0 0.0
  %2279 = vmatprep.subr.mxu0 0.0
  %2280 = vmatpush1.xpose.msra.mxu0 0.0
  %2281 = vmatprep.subr.mxu0 0.0
  %2282 = vmatpush1.xpose.msra.mxu0 0.0
  %2283 = vmatprep.subr.mxu0 0.0
  %2284 = vmatpush1.xpose.msra.mxu0 0.0
  %2285 = vmatprep.subr.mxu0 0.0
  %2286 = vmatpush1.xpose.msra.mxu0 0.0
  %2287 = vmatprep.subr.mxu0 0.0
  %2288 = vmatpush1.xpose.msra.mxu0 0.0
  %2289 = vmatprep.subr.mxu0 0.0
  %2290 = vmatpush1.xpose.msra.mxu0 0.0
  %2291 = vmatprep.subr.mxu0 0.0
  %2292 = vmatpush1.xpose.msra.mxu0 0.0
  %2293 = vmatprep.subr.mxu0 0.0
  %2294 = vmatpush1.xpose.msra.mxu0 0.0
  %2295 = vmatprep.subr.mxu0 0.0
  %2296 = vmatpush1.xpose.msra.mxu0 0.0
  %2297 = vmatprep.subr.mxu0 0.0
  %2298 = vmatpush1.xpose.msra.mxu0 0.0
  %2299 = vmatprep.subr.mxu0 0.0
  %2300 = vmatpush1.xpose.msra.mxu0 0.0
  %2301 = vmatprep.mubr.f32.mxu0 0.0
  %2302 = vmatmul.mubr.f32.gmra.mrb[0].mxu0 %v2233
  %v2303 = vpop.f32.mrb[0].mxu0
  %v2304 = vadd.f32 %v2229, %v2303
  %v2305 = vpop.f32.mrb[0].mxu0
  %2306 = vdwg.mxu0
  %vm2307 = vcmask 64512
  %v2308 = vsel %vm2307, %v2304, -inf
  %2309 = vmax.xlane.f32.xlu0 %v2308
  %v2310 = vpop.xlane.xlu0 %2309
  %v2311 = vsub.f32 %v2304, %v2310
  %v2312 = vmul.f32 %v2311, 1.442695
  %v2313 = vpow.pop %v2312
  %v2314 = vsel %vm2307, %v2313, 0.0
  %2315 = vadd.xlane.f32.xlu0 %v2314
  %v2316 = vpop.xlane.xlu0 %2315
  %v2317 = vrcp.pop %v2316
  %v2318 = vmul.f32 %v2313, %v2317
  %v2319 = vsel %vm2307, %v2318, 0.0
  %v2320 = vrot.slane %v2319, 4
  %v2321 = vadd.f32 %v2319, %v2320
  %v2322 = vrot.slane %v2321, 2
  %v2323 = vadd.f32 %v2321, %v2322
  %v2324 = vrot.slane %v2323, 1
  %v2325 = vadd.f32 %v2323, %v2324
  %v2326 = vmul.f32 %v2325, 0.125
  %v2328 = vsel %vm2307, %v2326, 0
  %2330 = vmatprep.subr.mxu0 0.0
  %2331 = vmatpush1.msra.mxu0 %v2217
  %2332 = vmatprep.subr.mxu0 0.0
  %2333 = vmatpush1.msra.mxu0 0.0
  %2334 = vmatprep.subr.mxu0 0.0
  %2335 = vmatpush1.msra.mxu0 0.0
  %2336 = vmatprep.subr.mxu0 0.0
  %2337 = vmatpush1.msra.mxu0 0.0
  %2338 = vmatprep.subr.mxu0 0.0
  %2339 = vmatpush1.msra.mxu0 0.0
  %2340 = vmatprep.subr.mxu0 0.0
  %2341 = vmatpush1.msra.mxu0 0.0
  %2342 = vmatprep.subr.mxu0 0.0
  %2343 = vmatpush1.msra.mxu0 0.0
  %2344 = vmatprep.subr.mxu0 0.0
  %2345 = vmatpush1.msra.mxu0 0.0
  %2346 = vmatprep.subr.mxu0 0.0
  %2347 = vmatpush1.msra.mxu0 0.0
  %2348 = vmatprep.subr.mxu0 0.0
  %2349 = vmatpush1.msra.mxu0 0.0
  %2350 = vmatprep.subr.mxu0 0.0
  %2351 = vmatpush1.msra.mxu0 0.0
  %2352 = vmatprep.subr.mxu0 0.0
  %2353 = vmatpush1.msra.mxu0 0.0
  %2354 = vmatprep.subr.mxu0 0.0
  %2355 = vmatpush1.msra.mxu0 0.0
  %2356 = vmatprep.subr.mxu0 0.0
  %2357 = vmatpush1.msra.mxu0 0.0
  %2358 = vmatprep.subr.mxu0 0.0
  %2359 = vmatpush1.msra.mxu0 0.0
  %2360 = vmatprep.subr.mxu0 0.0
  %2361 = vmatpush1.msra.mxu0 0.0
  %2362 = vmatprep.subr.mxu0 0.0
  %2363 = vmatpush1.msra.mxu0 0.0
  %2364 = vmatprep.subr.mxu0 0.0
  %2365 = vmatpush1.msra.mxu0 0.0
  %2366 = vmatprep.subr.mxu0 0.0
  %2367 = vmatpush1.msra.mxu0 0.0
  %2368 = vmatprep.subr.mxu0 0.0
  %2369 = vmatpush1.msra.mxu0 0.0
  %2370 = vmatprep.subr.mxu0 0.0
  %2371 = vmatpush1.msra.mxu0 0.0
  %2372 = vmatprep.subr.mxu0 0.0
  %2373 = vmatpush1.msra.mxu0 0.0
  %2374 = vmatprep.subr.mxu0 0.0
  %2375 = vmatpush1.msra.mxu0 0.0
  %2376 = vmatprep.subr.mxu0 0.0
  %2377 = vmatpush1.msra.mxu0 0.0
  %2378 = vmatprep.subr.mxu0 0.0
  %2379 = vmatpush1.msra.mxu0 0.0
  %2380 = vmatprep.subr.mxu0 0.0
  %2381 = vmatpush1.msra.mxu0 0.0
  %2382 = vmatprep.subr.mxu0 0.0
  %2383 = vmatpush1.msra.mxu0 0.0
  %2384 = vmatprep.subr.mxu0 0.0
  %2385 = vmatpush1.msra.mxu0 0.0
  %2386 = vmatprep.subr.mxu0 0.0
  %2387 = vmatpush1.msra.mxu0 0.0
  %2388 = vmatprep.subr.mxu0 0.0
  %2389 = vmatpush1.msra.mxu0 0.0
  %2390 = vmatprep.subr.mxu0 0.0
  %2391 = vmatpush1.msra.mxu0 0.0
  %2392 = vmatprep.subr.mxu0 0.0
  %2393 = vmatpush1.msra.mxu0 0.0
  %2394 = vmatprep.mubr.f32.mxu0 0.0
  %2395 = vmatmul.mubr.f32.gmra.mrb[0].mxu0 %v2328
  %v2396 = vpop.f32.mrb[0].mxu0
  %v2397 = vadd.f32 0.0, %v2396
  %v2398 = vpop.f32.mrb[0].mxu0
  %2399 = vdwg.mxu0
  %vm2400 = vcmask 516096
  %2401 = vst.msk [vmem:[#allocation4] sm:$0x1] %vm2400, %v2397
  %v2402 = vld [vmem:[%s1 + $0x1] sm:$0x1]
  %v2403 = vlaneseq
  %v2404 = vshrl.u32 %v2403, 7
  %v2405 = vsub.s32 0, %v2404
  %v2406 = vrot.slane %v2402, %v2405
  %2408 = vrot.lane.b32.xlu0 %v2221, 64
  %v2409 = vpop.permute.xlu0 %2408
  %v2410 = vsel %vm2141, %v2221, 0
  %v2412 = vsel %vm2141, %v2409, 0
  %2414 = vmatprep.subr.mxu0 0.0
  %2415 = vmatpush1.xpose.msra.mxu0 %v2412
  %2416 = vmatprep.subr.mxu0 0.0
  %2417 = vmatpush1.xpose.msra.mxu0 0.0
  %2418 = vmatprep.subr.mxu0 0.0
  %2419 = vmatpush1.xpose.msra.mxu0 0.0
  %2420 = vmatprep.subr.mxu0 0.0
  %2421 = vmatpush1.xpose.msra.mxu0 0.0
  %2422 = vmatprep.subr.mxu0 0.0
  %2423 = vmatpush1.xpose.msra.mxu0 0.0
  %2424 = vmatprep.subr.mxu0 0.0
  %2425 = vmatpush1.xpose.msra.mxu0 0.0
  %2426 = vmatprep.subr.mxu0 0.0
  %2427 = vmatpush1.xpose.msra.mxu0 0.0
  %2428 = vmatprep.subr.mxu0 0.0
  %2429 = vmatpush1.xpose.msra.mxu0 0.0
  %2430 = vmatprep.subr.mxu0 0.0
  %2431 = vmatpush1.xpose.msra.mxu0 0.0
  %2432 = vmatprep.subr.mxu0 0.0
  %2433 = vmatpush1.xpose.msra.mxu0 0.0
  %2434 = vmatprep.subr.mxu0 0.0
  %2435 = vmatpush1.xpose.msra.mxu0 0.0
  %2436 = vmatprep.subr.mxu0 0.0
  %2437 = vmatpush1.xpose.msra.mxu0 0.0
  %2438 = vmatprep.subr.mxu0 0.0
  %2439 = vmatpush1.xpose.msra.mxu0 0.0
  %2440 = vmatprep.subr.mxu0 0.0
  %2441 = vmatpush1.xpose.msra.mxu0 0.0
  %2442 = vmatprep.subr.mxu0 0.0
  %2443 = vmatpush1.xpose.msra.mxu0 0.0
  %2444 = vmatprep.subr.mxu0 0.0
  %2445 = vmatpush1.xpose.msra.mxu0 0.0
  %2446 = vmatprep.subr.mxu0 0.0
  %2447 = vmatpush1.xpose.msra.mxu0 0.0
  %2448 = vmatprep.subr.mxu0 0.0
  %2449 = vmatpush1.xpose.msra.mxu0 0.0
  %2450 = vmatprep.subr.mxu0 0.0
  %2451 = vmatpush1.xpose.msra.mxu0 0.0
  %2452 = vmatprep.subr.mxu0 0.0
  %2453 = vmatpush1.xpose.msra.mxu0 0.0
  %2454 = vmatprep.subr.mxu0 0.0
  %2455 = vmatpush1.xpose.msra.mxu0 0.0
  %2456 = vmatprep.subr.mxu0 0.0
  %2457 = vmatpush1.xpose.msra.mxu0 0.0
  %2458 = vmatprep.subr.mxu0 0.0
  %2459 = vmatpush1.xpose.msra.mxu0 0.0
  %2460 = vmatprep.subr.mxu0 0.0
  %2461 = vmatpush1.xpose.msra.mxu0 0.0
  %2462 = vmatprep.subr.mxu0 0.0
  %2463 = vmatpush1.xpose.msra.mxu0 0.0
  %2464 = vmatprep.subr.mxu0 0.0
  %2465 = vmatpush1.xpose.msra.mxu0 0.0
  %2466 = vmatprep.subr.mxu0 0.0
  %2467 = vmatpush1.xpose.msra.mxu0 0.0
  %2468 = vmatprep.subr.mxu0 0.0
  %2469 = vmatpush1.xpose.msra.mxu0 0.0
  %2470 = vmatprep.subr.mxu0 0.0
  %2471 = vmatpush1.xpose.msra.mxu0 0.0
  %2472 = vmatprep.subr.mxu0 0.0
  %2473 = vmatpush1.xpose.msra.mxu0 0.0
  %2474 = vmatprep.subr.mxu0 0.0
  %2475 = vmatpush1.xpose.msra.mxu0 0.0
  %2476 = vmatprep.subr.mxu0 0.0
  %2477 = vmatpush1.xpose.msra.mxu0 0.0
  %2478 = vmatprep.mubr.f32.mxu0 0.0
  %2479 = vmatmul.mubr.f32.gmra.mrb[0].mxu0 %v2410
  %v2480 = vpop.f32.mrb[0].mxu0
  %v2481 = vadd.f32 %v2406, %v2480
  %v2482 = vpop.f32.mrb[0].mxu0
  %2483 = vdwg.mxu0
  %v2484 = vsel %vm2307, %v2481, -inf
  %2485 = vmax.xlane.f32.xlu0 %v2484
  %v2486 = vpop.xlane.xlu0 %2485
  %v2487 = vsub.f32 %v2481, %v2486
  %v2488 = vmul.f32 %v2487, 1.442695
  %v2489 = vpow.pop %v2488
  %v2490 = vsel %vm2307, %v2489, 0.0
  %2491 = vadd.xlane.f32.xlu0 %v2490
  %v2492 = vpop.xlane.xlu0 %2491
  %v2493 = vrcp.pop %v2492
  %v2494 = vmul.f32 %v2489, %v2493
  %v2495 = vsel %vm2307, %v2494, 0.0
  %v2496 = vrot.slane %v2495, 4
  %v2497 = vadd.f32 %v2495, %v2496
  %v2498 = vrot.slane %v2497, 2
  %v2499 = vadd.f32 %v2497, %v2498
  %v2500 = vrot.slane %v2499, 1
  %v2501 = vadd.f32 %v2499, %v2500
  %v2502 = vmul.f32 %v2501, 0.125
  %v2504 = vsel %vm2307, %v2502, 0
  %2506 = vmatprep.subr.mxu0 0.0
  %2507 = vmatpush1.msra.mxu0 %v2223
  %2508 = vmatprep.subr.mxu0 0.0
  %2509 = vmatpush1.msra.mxu0 0.0
  %2510 = vmatprep.subr.mxu0 0.0
  %2511 = vmatpush1.msra.mxu0 0.0
  %2512 = vmatprep.subr.mxu0 0.0
  %2513 = vmatpush1.msra.mxu0 0.0
  %2514 = vmatprep.subr.mxu0 0.0
  %2515 = vmatpush1.msra.mxu0 0.0
  %2516 = vmatprep.subr.mxu0 0.0
  %2517 = vmatpush1.msra.mxu0 0.0
  %2518 = vmatprep.subr.mxu0 0.0
  %2519 = vmatpush1.msra.mxu0 0.0
  %2520 = vmatprep.subr.mxu0 0.0
  %2521 = vmatpush1.msra.mxu0 0.0
  %2522 = vmatprep.subr.mxu0 0.0
  %2523 = vmatpush1.msra.mxu0 0.0
  %2524 = vmatprep.subr.mxu0 0.0
  %2525 = vmatpush1.msra.mxu0 0.0
  %2526 = vmatprep.subr.mxu0 0.0
  %2527 = vmatpush1.msra.mxu0 0.0
  %2528 = vmatprep.subr.mxu0 0.0
  %2529 = vmatpush1.msra.mxu0 0.0
  %2530 = vmatprep.subr.mxu0 0.0
  %2531 = vmatpush1.msra.mxu0 0.0
  %2532 = vmatprep.subr.mxu0 0.0
  %2533 = vmatpush1.msra.mxu0 0.0
  %2534 = vmatprep.subr.mxu0 0.0
  %2535 = vmatpush1.msra.mxu0 0.0
  %2536 = vmatprep.subr.mxu0 0.0
  %2537 = vmatpush1.msra.mxu0 0.0
  %2538 = vmatprep.subr.mxu0 0.0
  %2539 = vmatpush1.msra.mxu0 0.0
  %2540 = vmatprep.subr.mxu0 0.0
  %2541 = vmatpush1.msra.mxu0 0.0
  %2542 = vmatprep.subr.mxu0 0.0
  %2543 = vmatpush1.msra.mxu0 0.0
  %2544 = vmatprep.subr.mxu0 0.0
  %2545 = vmatpush1.msra.mxu0 0.0
  %2546 = vmatprep.subr.mxu0 0.0
  %2547 = vmatpush1.msra.mxu0 0.0
  %2548 = vmatprep.subr.mxu0 0.0
  %2549 = vmatpush1.msra.mxu0 0.0
  %2550 = vmatprep.subr.mxu0 0.0
  %2551 = vmatpush1.msra.mxu0 0.0
  %2552 = vmatprep.subr.mxu0 0.0
  %2553 = vmatpush1.msra.mxu0 0.0
  %2554 = vmatprep.subr.mxu0 0.0
  %2555 = vmatpush1.msra.mxu0 0.0
  %2556 = vmatprep.subr.mxu0 0.0
  %2557 = vmatpush1.msra.mxu0 0.0
  %2558 = vmatprep.subr.mxu0 0.0
  %2559 = vmatpush1.msra.mxu0 0.0
  %2560 = vmatprep.subr.mxu0 0.0
  %2561 = vmatpush1.msra.mxu0 0.0
  %2562 = vmatprep.subr.mxu0 0.0
  %2563 = vmatpush1.msra.mxu0 0.0
  %2564 = vmatprep.subr.mxu0 0.0
  %2565 = vmatpush1.msra.mxu0 0.0
  %2566 = vmatprep.subr.mxu0 0.0
  %2567 = vmatpush1.msra.mxu0 0.0
  %2568 = vmatprep.subr.mxu0 0.0
  %2569 = vmatpush1.msra.mxu0 0.0
  %2570 = vmatprep.mubr.f32.mxu0 0.0
  %2571 = vmatmul.mubr.f32.gmra.mrb[0].mxu0 %v2504
  %v2572 = vpop.f32.mrb[0].mxu0
  %v2573 = vadd.f32 0.0, %v2572
  %v2574 = vpop.f32.mrb[0].mxu0
  %2575 = vdwg.mxu0
  %2576 = vst.msk [vmem:[#allocation4 + $0x1] sm:$0x1] %vm2400, %v2573
  %v2577 = vld [vmem:[#allocation4] sm:$0x3]
  %v2578 = vld [vmem:[%s9] sm:$0xff]
  %v2579 = vld [vmem:[%s9 + $0x8] sm:$0xff]
  %v2580 = vld [vmem:[%s9 + $0x10] sm:$0xff]
  %v2581 = vld [vmem:[%s9 + $0x18] sm:$0xff]
  %v2582 = vld [vmem:[%s9 + $0x20] sm:$0xff]
  %v2583 = vld [vmem:[%s9 + $0x28] sm:$0xff]
  %v2584 = vld [vmem:[%s9 + $0x30] sm:$0xff]
  %v2585 = vld [vmem:[%s9 + $0x38] sm:$0xff]
  %v2586 = vld [vmem:[%s10] sm:$0x1]
  %v2588 = vlaneseq
  %v2589 = vshrl.u32 %v2588, 7
  %v2590 = vsub.s32 0, %v2589
  %v2591 = vrot.slane %v2586, %v2590
  %v2594 = vsel %vm2141, %v2577, 0
  %2596 = vmatprep.subr.mxu0 0.0
  %2597 = vmatpush1.msra.mxu0 %v2578
  %2598 = vmatprep.subr.mxu0 0.0
  %2599 = vmatpush1.msra.mxu0 %v2579
  %2600 = vmatprep.subr.mxu0 0.0
  %2601 = vmatpush1.msra.mxu0 %v2580
  %2602 = vmatprep.subr.mxu0 0.0
  %2603 = vmatpush1.msra.mxu0 %v2581
  %2604 = vmatprep.subr.mxu0 0.0
  %2605 = vmatpush1.msra.mxu0 %v2582
  %2606 = vmatprep.subr.mxu0 0.0
  %2607 = vmatpush1.msra.mxu0 %v2583
  %2608 = vmatprep.subr.mxu0 0.0
  %2609 = vmatpush1.msra.mxu0 %v2584
  %2610 = vmatprep.subr.mxu0 0.0
  %2611 = vmatpush1.msra.mxu0 %v2585
  %2612 = vmatprep.subr.mxu0 0.0
  %2613 = vmatpush1.msra.mxu0 0.0
  %2614 = vmatprep.subr.mxu0 0.0
  %2615 = vmatpush1.msra.mxu0 0.0
  %2616 = vmatprep.subr.mxu0 0.0
  %2617 = vmatpush1.msra.mxu0 0.0
  %2618 = vmatprep.subr.mxu0 0.0
  %2619 = vmatpush1.msra.mxu0 0.0
  %2620 = vmatprep.subr.mxu0 0.0
  %2621 = vmatpush1.msra.mxu0 0.0
  %2622 = vmatprep.subr.mxu0 0.0
  %2623 = vmatpush1.msra.mxu0 0.0
  %2624 = vmatprep.subr.mxu0 0.0
  %2625 = vmatpush1.msra.mxu0 0.0
  %2626 = vmatprep.subr.mxu0 0.0
  %2627 = vmatpush1.msra.mxu0 0.0
  %2628 = vmatprep.subr.mxu0 0.0
  %2629 = vmatpush1.msra.mxu0 0.0
  %2630 = vmatprep.subr.mxu0 0.0
  %2631 = vmatpush1.msra.mxu0 0.0
  %2632 = vmatprep.subr.mxu0 0.0
  %2633 = vmatpush1.msra.mxu0 0.0
  %2634 = vmatprep.subr.mxu0 0.0
  %2635 = vmatpush1.msra.mxu0 0.0
  %2636 = vmatprep.subr.mxu0 0.0
  %2637 = vmatpush1.msra.mxu0 0.0
  %2638 = vmatprep.subr.mxu0 0.0
  %2639 = vmatpush1.msra.mxu0 0.0
  %2640 = vmatprep.subr.mxu0 0.0
  %2641 = vmatpush1.msra.mxu0 0.0
  %2642 = vmatprep.subr.mxu0 0.0
  %2643 = vmatpush1.msra.mxu0 0.0
  %2644 = vmatprep.subr.mxu0 0.0
  %2645 = vmatpush1.msra.mxu0 0.0
  %2646 = vmatprep.subr.mxu0 0.0
  %2647 = vmatpush1.msra.mxu0 0.0
  %2648 = vmatprep.subr.mxu0 0.0
  %2649 = vmatpush1.msra.mxu0 0.0
  %2650 = vmatprep.subr.mxu0 0.0
  %2651 = vmatpush1.msra.mxu0 0.0
  %2652 = vmatprep.subr.mxu0 0.0
  %2653 = vmatpush1.msra.mxu0 0.0
  %2654 = vmatprep.subr.mxu0 0.0
  %2655 = vmatpush1.msra.mxu0 0.0
  %2656 = vmatprep.subr.mxu0 0.0
  %2657 = vmatpush1.msra.mxu0 0.0
  %2658 = vmatprep.subr.mxu0 0.0
  %2659 = vmatpush1.msra.mxu0 0.0
  %2660 = vmatprep.mubr.f32.mxu0 0.0
  %2661 = vmatmul.mubr.f32.gmra.mrb[0].mxu0 %v2594
  %v2662 = vpop.f32.mrb[0].mxu0
  %v2663 = vadd.f32 %v2591, %v2662
  %v2664 = vpop.f32.mrb[0].mxu0
  %2665 = vdwg.mxu0
  %2666 = vst [vmem:[%s11] sm:$0x3] %v2663
  // Predicated region
  $region46: #{model_forward.1} parent=0 // pred_check
    _
  $region47: #{model_forward.1} parent=0 // pred_check_branch
    %2668 = sbr.rel (0) target = $region49
  $region48: #{model_forward.1} parent=0 // pred_region
    _
  $region49: #{model_forward.1} parent=0 // pred_fallthru
    _
  // Predicated region
  $region50: #{model_forward.1} parent=0 // pred_check
    _
  $region51: #{model_forward.1} parent=0 // pred_check_branch
    %2670 = sbr.rel (0) target = $region53
  $region52: #{model_forward.1} parent=0 // pred_region
    _
  $region53: #{model_forward.1} parent=0 // pred_fallthru
    _

</llo_original>
